<compile_context>
chip_gen: v7x
topology: tpu7x:2x2x1
jax: 0.10.0
libtpu: 0.0.40
codegen_flags: <defaults>
</compile_context>

<pallas_src>
import math
import jax
import jax.numpy as jnp
from jax.experimental import pallas as pl
from jax.experimental.pallas import tpu as pltpu

# ---- model hyper-parameters (small, consistent with the module) ----
SEQ_LEN = 8      # seq_len in the reference code
NHEAD   = 4
NLAYERS = 4
D_MODEL = 32
NHID    = 64     # dim_feedforward
VOCAB   = 50     # synthetic vocab size
V_PAD   = 128    # vocab padded to a lane-dense output width
BATCH   = 2
LN_EPS  = 1e-5
DH      = D_MODEL // NHEAD
SB      = SEQ_LEN * BATCH
ATT_SCALE = DH ** -0.5
NEG_INF = -1e9

_VMEM = pl.BlockSpec(memory_space=pltpu.MemorySpace.VMEM)


def _layernorm(x, gamma, beta):
    # x: (SB, D) f32; gamma/beta: (1, D) f32
    mu  = jnp.mean(x, axis=-1, keepdims=True)
    var = jnp.mean((x - mu) ** 2, axis=-1, keepdims=True)
    return (x - mu) * jax.lax.rsqrt(var + LN_EPS) * gamma + beta


# ---------------------------------------------------------------------------
# Single fused kernel: embedding + NLAYERS pre-norm encoder layers + decoder.
# ---------------------------------------------------------------------------
def fused_forward_kernel(ids_ref, mask_ref, tok_ref, pos_ref,
                         wqkv_ref, wo_ref, w1_ref, w2_ref,
                         vec_ref, decw_ref, decb_ref,
                         out_ref):
    # ----- embedding lookup: gather-free one-hot @ bf16 (pre-scaled) table ---
    # TODO(synk): could move ids to SMEM via scalar prefetch + dynamic row
    # reads; kept as the (proven-to-lower) one-hot matmul since it is tiny.
    ids = ids_ref[...]                                              # (SB, 1) i32
    vocab_iota = jax.lax.broadcasted_iota(jnp.int32, (SB, VOCAB), 1)
    onehot = jnp.where(vocab_iota == ids, 1.0, 0.0).astype(jnp.bfloat16)
    x = jnp.dot(onehot, tok_ref[...],
                preferred_element_type=jnp.float32) + pos_ref[...]  # (SB, D) f32

    # Combined causal + cross-batch additive mask over flattened rows/cols.
    mask = mask_ref[...]                                            # (SB, SB) f32

    # ----- unrolled encoder layers; x stays resident on-chip in f32 -----
    for l in range(NLAYERS):
        vecs = vec_ref[l]                         # (8, 128) f32 per-layer slab
        bqkv = vecs[0:1, 0:3 * D_MODEL]           # (1, 3D)  (Q part pre-scaled)
        bo   = vecs[1:2, 0:D_MODEL]
        b1   = vecs[2:3, 0:NHID]
        b2   = vecs[3:4, 0:D_MODEL]
        ln1g = vecs[4:5, 0:D_MODEL]
        ln1b = vecs[5:6, 0:D_MODEL]
        ln2g = vecs[6:7, 0:D_MODEL]
        ln2b = vecs[7:8, 0:D_MODEL]

        # --- pre-norm 1 + fused-QKV multi-head self-attention ---
        xn  = _layernorm(x, ln1g, ln1b)
        qkv = jnp.dot(xn.astype(jnp.bfloat16), wqkv_ref[l],
                      preferred_element_type=jnp.float32) + bqkv    # (SB, 3D) f32

        q  = qkv[:, :D_MODEL]                     # 1/sqrt(dh) folded into W_q
        kT = qkv[:, D_MODEL:2 * D_MODEL].T        # (D, SB) one transpose/layer
        v  = qkv[:, 2 * D_MODEL:]

        ctx_parts = []
        for h in range(NHEAD):                    # per-head 2-D MXU dots
            lo, hi = h * DH, (h + 1) * DH
            s_h = jnp.dot(q[:, lo:hi], kT[lo:hi, :],
                          preferred_element_type=jnp.float32) + mask  # (SB, SB)
            s_h = s_h - jnp.max(s_h, axis=-1, keepdims=True)
            p_h = jnp.exp(s_h)
            p_h = p_h * pl.reciprocal(jnp.sum(p_h, axis=-1, keepdims=True),
                                      approx=True)
            ctx_parts.append(jnp.dot(p_h, v[:, lo:hi],
                                     preferred_element_type=jnp.float32))
        ctx = jnp.concatenate(ctx_parts, axis=-1)                   # (SB, D)

        attn = jnp.dot(ctx.astype(jnp.bfloat16), wo_ref[l],
                       preferred_element_type=jnp.float32) + bo
        x = x + attn                                                # dropout1 = id

        # --- pre-norm 2 + feed-forward ---
        xn2 = _layernorm(x, ln2g, ln2b)
        h1 = jnp.dot(xn2.astype(jnp.bfloat16), w1_ref[l],
                     preferred_element_type=jnp.float32) + b1
        h1 = jnp.maximum(h1, 0.0)                                   # ReLU
        ff = jnp.dot(h1.astype(jnp.bfloat16), w2_ref[l],
                     preferred_element_type=jnp.float32) + b2
        x = x + ff                                                  # dropout2 = id

    # ----- decoder: lane-dense (V padded to 128) unmasked output store -----
    out_ref[...] = jnp.dot(x.astype(jnp.bfloat16), decw_ref[...],
                           preferred_element_type=jnp.float32) + decb_ref[...]


# ---------------------------------------------------------------------------
# Full TransformerModel.forward — one grid-less pallas_call.
# ---------------------------------------------------------------------------
@jax.jit
def transformer_forward(params, src, src_mask):
    # src: (S, B) int32 token ids ; src_mask: (S, S) additive float mask
    S, B = src.shape
    ids = src.reshape(S * B, 1).astype(jnp.int32)     # row = s*B + b (seq-major)

    # Combined (SB, SB) additive mask: causal mask repeated block-wise plus a
    # -1e9 cross-batch mask so the per-head 2-D dots never attend across batch.
    causal_rep = jnp.repeat(jnp.repeat(src_mask.astype(jnp.float32), B, axis=0),
                            B, axis=1)                             # (SB, SB)
    bidx = jnp.tile(jnp.arange(B), S)
    same_batch = bidx[:, None] == bidx[None, :]
    mask_comb = jnp.where(same_batch, causal_rep, jnp.float32(NEG_INF))

    out_pad = pl.pallas_call(
        fused_forward_kernel,
        out_shape=jax.ShapeDtypeStruct((S * B, V_PAD), jnp.float32),
        in_specs=[_VMEM] * 11,
        out_specs=_VMEM,
        cost_estimate=pl.CostEstimate(flops=2_000_000, transcendentals=5_000,
                                      bytes_accessed=110_000),
    )(ids, mask_comb,
      params['tok_emb_scaled'], params['pos_emb_rep'],
      params['wqkv'], params['wo'], params['w1'], params['w2'],
      params['vec_slab'], params['dec_w_pad'], params['dec_b_pad'])
    return out_pad[:, :VOCAB].reshape(S, B, VOCAB)


# ---------------------------------------------------------------------------
# Deterministic parameter construction (weights pre-stacked / fused / packed).
# ---------------------------------------------------------------------------
def init_params(key):
    def nrm(k, shape, scale=0.02):
        return scale * jax.random.normal(k, shape, dtype=jnp.float32)

    keys = jax.random.split(key, 4 + NLAYERS)
    tok_emb = nrm(keys[0], (VOCAB, D_MODEL), 1.0)
    pos_emb = nrm(keys[1], (SEQ_LEN, D_MODEL), 1.0)
    dec_w   = nrm(keys[2], (D_MODEL, VOCAB))
    dec_b   = jnp.zeros((VOCAB,), jnp.float32)

    wqkv, wo, w1, w2, slabs = [], [], [], [], []
    for l in range(NLAYERS):
        ks = jax.random.split(keys[4 + l], 6)
        wq = nrm(ks[0], (D_MODEL, D_MODEL))
        wk = nrm(ks[1], (D_MODEL, D_MODEL))
        wv = nrm(ks[2], (D_MODEL, D_MODEL))
        # fold the 1/sqrt(head_dim) query scale into the Q projection
        wqkv.append(jnp.concatenate([wq * ATT_SCALE, wk, wv], axis=1))  # (D, 3D)
        wo.append(nrm(ks[3], (D_MODEL, D_MODEL)))
        w1.append(nrm(ks[4], (D_MODEL, NHID)))
        w2.append(nrm(ks[5], (NHID, D_MODEL)))

        bq = jnp.zeros((D_MODEL,), jnp.float32) * ATT_SCALE   # scale folded here too
        bk = jnp.zeros((D_MODEL,), jnp.float32)
        bv = jnp.zeros((D_MODEL,), jnp.float32)

        # one (8, 128) slab per layer: biases + LayerNorm params (f32)
        slab = jnp.zeros((8, 128), jnp.float32)
        slab = slab.at[0, :3 * D_MODEL].set(jnp.concatenate([bq, bk, bv]))
        slab = slab.at[1, :D_MODEL].set(jnp.zeros((D_MODEL,)))       # bo
        slab = slab.at[2, :NHID].set(jnp.zeros((NHID,)))             # b1
        slab = slab.at[3, :D_MODEL].set(jnp.zeros((D_MODEL,)))       # b2
        slab = slab.at[4, :D_MODEL].set(jnp.ones((D_MODEL,)))        # ln1 gamma
        slab = slab.at[5, :D_MODEL].set(jnp.zeros((D_MODEL,)))       # ln1 beta
        slab = slab.at[6, :D_MODEL].set(jnp.ones((D_MODEL,)))        # ln2 gamma
        slab = slab.at[7, :D_MODEL].set(jnp.zeros((D_MODEL,)))       # ln2 beta
        slabs.append(slab)

    return {
        # sqrt(d_model) token-embedding scaling folded into the (bf16) table.
        'tok_emb_scaled': (tok_emb * math.sqrt(D_MODEL)).astype(jnp.bfloat16),
        # positional embedding pre-expanded to (S*B, D), row = s*B + b (f32).
        'pos_emb_rep': jnp.repeat(pos_emb, BATCH, axis=0),
        # bf16 weight stacks (activations cast to bf16 at the dot, f32 accum).
        'wqkv': jnp.stack(wqkv).astype(jnp.bfloat16),
        'wo':   jnp.stack(wo).astype(jnp.bfloat16),
        'w1':   jnp.stack(w1).astype(jnp.bfloat16),
        'w2':   jnp.stack(w2).astype(jnp.bfloat16),
        # packed per-layer small vectors (biases + LN params), f32.
        'vec_slab': jnp.stack(slabs),
        # decoder padded to a 128-wide lane-dense output.
        'dec_w_pad': jnp.pad(dec_w, ((0, 0), (0, V_PAD - VOCAB))).astype(jnp.bfloat16),
        'dec_b_pad': jnp.pad(dec_b, (0, V_PAD - VOCAB)).reshape(1, V_PAD),
    }


if __name__ == "__main__":
    key = jax.random.PRNGKey(0)
    kp, ks = jax.random.split(key)
    params = init_params(kp)

    # token ids (S, B) and causal additive mask (S, S)
    src = jax.random.randint(ks, (SEQ_LEN, BATCH), 0, VOCAB, dtype=jnp.int32)
    i = jnp.arange(SEQ_LEN)[:, None]
    j = jnp.arange(SEQ_LEN)[None, :]
    src_mask = jnp.where(j > i, NEG_INF, 0.0).astype(jnp.float32)

    logits = transformer_forward(params, src, src_mask)
    logits = jax.block_until_ready(logits)
    assert logits.shape == (SEQ_LEN, BATCH, VOCAB), logits.shape
    assert bool(jnp.all(jnp.isfinite(logits)))
    print("KERNEL_OK")
</pallas_src>

<mosaic_0001>
module attributes {stable_mosaic.version = 11 : i64} {
  func.func @fused_forward_kernel(%arg0: memref<16x1xi32, #tpu.memory_space<vmem>>, %arg1: memref<16x16xf32, #tpu.memory_space<vmem>>, %arg2: memref<50x32xbf16, #tpu.memory_space<vmem>>, %arg3: memref<16x32xf32, #tpu.memory_space<vmem>>, %arg4: memref<4x32x96xbf16, #tpu.memory_space<vmem>>, %arg5: memref<4x32x32xbf16, #tpu.memory_space<vmem>>, %arg6: memref<4x32x64xbf16, #tpu.memory_space<vmem>>, %arg7: memref<4x64x32xbf16, #tpu.memory_space<vmem>>, %arg8: memref<4x8x128xf32, #tpu.memory_space<vmem>>, %arg9: memref<32x128xbf16, #tpu.memory_space<vmem>>, %arg10: memref<1x128xf32, #tpu.memory_space<vmem>>, %arg11: memref<16x128xf32, #tpu.memory_space<vmem>>) attributes {dimension_semantics = [], scalar_prefetch = 0 : i64, scratch_operands = 0 : i64, tpu.core_type = #tpu.core_type<tc>} {
    %c0 = arith.constant 0 : index
    %c0_0 = arith.constant 0 : index
    %0 = vector.load %arg0[%c0, %c0_0] : memref<16x1xi32, #tpu.memory_space<vmem>>, vector<16x1xi32>
    %1 = tpu.iota {dimensions = array<i32: 1>} : vector<16x50xi32>
    %2 = vector.broadcast %0 : vector<16x1xi32> to vector<16x50xi32>
    %3 = arith.cmpi eq, %1, %2 : vector<16x50xi32>
    %cst = arith.constant 1.000000e+00 : f32
    %cst_1 = arith.constant 0.000000e+00 : f32
    %4 = vector.broadcast %cst : f32 to vector<16x50xf32>
    %5 = vector.broadcast %cst_1 : f32 to vector<16x50xf32>
    %6 = arith.select %3, %4, %5 : vector<16x50xi1>, vector<16x50xf32>
    %7 = arith.truncf %6 : vector<16x50xf32> to vector<16x50xbf16>
    %c0_2 = arith.constant 0 : index
    %c0_3 = arith.constant 0 : index
    %8 = vector.load %arg2[%c0_2, %c0_3] : memref<50x32xbf16, #tpu.memory_space<vmem>>, vector<50x32xbf16>
    %cst_4 = arith.constant dense<0.000000e+00> : vector<16x32xf32>
    %9 = tpu.matmul %7, %8, %cst_4 {dimension_numbers = #tpu.dot_dimension_numbers<[1], [0], [0], [1], [0, 0, 1, 1], [], []>} : vector<16x50xbf16>, vector<50x32xbf16>, vector<16x32xf32> -> vector<16x32xf32>
    %c0_5 = arith.constant 0 : index
    %c0_6 = arith.constant 0 : index
    %10 = vector.load %arg3[%c0_5, %c0_6] : memref<16x32xf32, #tpu.memory_space<vmem>>, vector<16x32xf32>
    %11 = arith.addf %9, %10 : vector<16x32xf32>
    %c0_7 = arith.constant 0 : index
    %c0_8 = arith.constant 0 : index
    %12 = vector.load %arg1[%c0_7, %c0_8] : memref<16x16xf32, #tpu.memory_space<vmem>>, vector<16x16xf32>
    %c0_9 = arith.constant 0 : index
    %c0_10 = arith.constant 0 : index
    %c0_11 = arith.constant 0 : index
    %13 = vector.load %arg8[%c0_9, %c0_10, %c0_11] : memref<4x8x128xf32, #tpu.memory_space<vmem>>, vector<1x8x128xf32>
    %14 = vector.shape_cast %13 : vector<1x8x128xf32> to vector<8x128xf32>
    %15 = vector.extract_strided_slice %14 {offsets = [0, 0], sizes = [1, 96], strides = [1, 1]} : vector<8x128xf32> to vector<1x96xf32>
    %16 = vector.extract_strided_slice %14 {offsets = [1, 0], sizes = [1, 32], strides = [1, 1]} : vector<8x128xf32> to vector<1x32xf32>
    %17 = vector.extract_strided_slice %14 {offsets = [2, 0], sizes = [1, 64], strides = [1, 1]} : vector<8x128xf32> to vector<1x64xf32>
    %18 = vector.extract_strided_slice %14 {offsets = [3, 0], sizes = [1, 32], strides = [1, 1]} : vector<8x128xf32> to vector<1x32xf32>
    %19 = vector.extract_strided_slice %14 {offsets = [4, 0], sizes = [1, 32], strides = [1, 1]} : vector<8x128xf32> to vector<1x32xf32>
    %20 = vector.extract_strided_slice %14 {offsets = [5, 0], sizes = [1, 32], strides = [1, 1]} : vector<8x128xf32> to vector<1x32xf32>
    %21 = vector.extract_strided_slice %14 {offsets = [6, 0], sizes = [1, 32], strides = [1, 1]} : vector<8x128xf32> to vector<1x32xf32>
    %22 = vector.extract_strided_slice %14 {offsets = [7, 0], sizes = [1, 32], strides = [1, 1]} : vector<8x128xf32> to vector<1x32xf32>
    %cst_12 = arith.constant dense<0.000000e+00> : vector<16xf32>
    %23 = vector.multi_reduction <add>, %11, %cst_12 [1] : vector<16x32xf32> to vector<16xf32>
    %24 = vector.shape_cast %23 : vector<16xf32> to vector<16x1xf32>
    %cst_13 = arith.constant 3.200000e+01 : f32
    %25 = vector.broadcast %cst_13 : f32 to vector<16x1xf32>
    %26 = arith.divf %24, %25 : vector<16x1xf32>
    %27 = vector.broadcast %26 : vector<16x1xf32> to vector<16x32xf32>
    %28 = arith.subf %11, %27 : vector<16x32xf32>
    %29 = arith.mulf %28, %28 : vector<16x32xf32>
    %cst_14 = arith.constant dense<0.000000e+00> : vector<16xf32>
    %30 = vector.multi_reduction <add>, %29, %cst_14 [1] : vector<16x32xf32> to vector<16xf32>
    %31 = vector.shape_cast %30 : vector<16xf32> to vector<16x1xf32>
    %cst_15 = arith.constant 3.200000e+01 : f32
    %32 = vector.broadcast %cst_15 : f32 to vector<16x1xf32>
    %33 = arith.divf %31, %32 : vector<16x1xf32>
    %34 = vector.broadcast %26 : vector<16x1xf32> to vector<16x32xf32>
    %35 = arith.subf %11, %34 : vector<16x32xf32>
    %cst_16 = arith.constant 9.99999974E-6 : f32
    %36 = vector.broadcast %cst_16 : f32 to vector<16x1xf32>
    %37 = arith.addf %33, %36 : vector<16x1xf32>
    %38 = math.rsqrt %37 : vector<16x1xf32>
    %39 = vector.broadcast %38 : vector<16x1xf32> to vector<16x32xf32>
    %40 = arith.mulf %35, %39 : vector<16x32xf32>
    %41 = vector.broadcast %19 : vector<1x32xf32> to vector<16x32xf32>
    %42 = arith.mulf %40, %41 : vector<16x32xf32>
    %43 = vector.broadcast %20 : vector<1x32xf32> to vector<16x32xf32>
    %44 = arith.addf %42, %43 : vector<16x32xf32>
    %45 = arith.truncf %44 : vector<16x32xf32> to vector<16x32xbf16>
    %c0_17 = arith.constant 0 : index
    %c0_18 = arith.constant 0 : index
    %c0_19 = arith.constant 0 : index
    %46 = vector.load %arg4[%c0_17, %c0_18, %c0_19] : memref<4x32x96xbf16, #tpu.memory_space<vmem>>, vector<1x32x96xbf16>
    %47 = vector.shape_cast %46 : vector<1x32x96xbf16> to vector<32x96xbf16>
    %cst_20 = arith.constant dense<0.000000e+00> : vector<16x96xf32>
    %48 = tpu.matmul %45, %47, %cst_20 {dimension_numbers = #tpu.dot_dimension_numbers<[1], [0], [0], [1], [0, 0, 1, 1], [], []>} : vector<16x32xbf16>, vector<32x96xbf16>, vector<16x96xf32> -> vector<16x96xf32>
    %49 = vector.broadcast %15 : vector<1x96xf32> to vector<16x96xf32>
    %50 = arith.addf %48, %49 : vector<16x96xf32>
    %51 = vector.extract_strided_slice %50 {offsets = [0, 0], sizes = [16, 32], strides = [1, 1]} : vector<16x96xf32> to vector<16x32xf32>
    %52 = vector.extract_strided_slice %50 {offsets = [0, 32], sizes = [16, 32], strides = [1, 1]} : vector<16x96xf32> to vector<16x32xf32>
    %53 = tpu.transpose %52, [1, 0] : vector<16x32xf32> -> vector<32x16xf32>
    %54 = vector.extract_strided_slice %50 {offsets = [0, 64], sizes = [16, 32], strides = [1, 1]} : vector<16x96xf32> to vector<16x32xf32>
    %55 = vector.extract_strided_slice %51 {offsets = [0, 0], sizes = [16, 8], strides = [1, 1]} : vector<16x32xf32> to vector<16x8xf32>
    %56 = vector.extract_strided_slice %53 {offsets = [0, 0], sizes = [8, 16], strides = [1, 1]} : vector<32x16xf32> to vector<8x16xf32>
    %cst_21 = arith.constant dense<0.000000e+00> : vector<16x16xf32>
    %57 = tpu.matmul %55, %56, %cst_21 {dimension_numbers = #tpu.dot_dimension_numbers<[1], [0], [0], [1], [0, 0, 1, 1], [], []>} : vector<16x8xf32>, vector<8x16xf32>, vector<16x16xf32> -> vector<16x16xf32>
    %58 = arith.addf %57, %12 : vector<16x16xf32>
    %cst_22 = arith.constant dense<0xFF800000> : vector<16xf32>
    %59 = vector.multi_reduction <maximumf>, %58, %cst_22 [1] : vector<16x16xf32> to vector<16xf32>
    %60 = vector.shape_cast %59 : vector<16xf32> to vector<16x1xf32>
    %61 = vector.broadcast %60 : vector<16x1xf32> to vector<16x16xf32>
    %62 = arith.subf %58, %61 : vector<16x16xf32>
    %63 = math.exp %62 : vector<16x16xf32>
    %cst_23 = arith.constant dense<0.000000e+00> : vector<16xf32>
    %64 = vector.multi_reduction <add>, %63, %cst_23 [1] : vector<16x16xf32> to vector<16xf32>
    %65 = vector.shape_cast %64 : vector<16xf32> to vector<16x1xf32>
    %66 = tpu.reciprocal %65 {approx = true} : vector<16x1xf32> -> vector<16x1xf32>
    %67 = vector.broadcast %66 : vector<16x1xf32> to vector<16x16xf32>
    %68 = arith.mulf %63, %67 : vector<16x16xf32>
    %69 = vector.extract_strided_slice %54 {offsets = [0, 0], sizes = [16, 8], strides = [1, 1]} : vector<16x32xf32> to vector<16x8xf32>
    %cst_24 = arith.constant dense<0.000000e+00> : vector<16x8xf32>
    %70 = tpu.matmul %68, %69, %cst_24 {dimension_numbers = #tpu.dot_dimension_numbers<[1], [0], [0], [1], [0, 0, 1, 1], [], []>} : vector<16x16xf32>, vector<16x8xf32>, vector<16x8xf32> -> vector<16x8xf32>
    %71 = vector.extract_strided_slice %51 {offsets = [0, 8], sizes = [16, 8], strides = [1, 1]} : vector<16x32xf32> to vector<16x8xf32>
    %72 = vector.extract_strided_slice %53 {offsets = [8, 0], sizes = [8, 16], strides = [1, 1]} : vector<32x16xf32> to vector<8x16xf32>
    %cst_25 = arith.constant dense<0.000000e+00> : vector<16x16xf32>
    %73 = tpu.matmul %71, %72, %cst_25 {dimension_numbers = #tpu.dot_dimension_numbers<[1], [0], [0], [1], [0, 0, 1, 1], [], []>} : vector<16x8xf32>, vector<8x16xf32>, vector<16x16xf32> -> vector<16x16xf32>
    %74 = arith.addf %73, %12 : vector<16x16xf32>
    %cst_26 = arith.constant dense<0xFF800000> : vector<16xf32>
    %75 = vector.multi_reduction <maximumf>, %74, %cst_26 [1] : vector<16x16xf32> to vector<16xf32>
    %76 = vector.shape_cast %75 : vector<16xf32> to vector<16x1xf32>
    %77 = vector.broadcast %76 : vector<16x1xf32> to vector<16x16xf32>
    %78 = arith.subf %74, %77 : vector<16x16xf32>
    %79 = math.exp %78 : vector<16x16xf32>
    %cst_27 = arith.constant dense<0.000000e+00> : vector<16xf32>
    %80 = vector.multi_reduction <add>, %79, %cst_27 [1] : vector<16x16xf32> to vector<16xf32>
    %81 = vector.shape_cast %80 : vector<16xf32> to vector<16x1xf32>
    %82 = tpu.reciprocal %81 {approx = true} : vector<16x1xf32> -> vector<16x1xf32>
    %83 = vector.broadcast %82 : vector<16x1xf32> to vector<16x16xf32>
    %84 = arith.mulf %79, %83 : vector<16x16xf32>
    %85 = vector.extract_strided_slice %54 {offsets = [0, 8], sizes = [16, 8], strides = [1, 1]} : vector<16x32xf32> to vector<16x8xf32>
    %cst_28 = arith.constant dense<0.000000e+00> : vector<16x8xf32>
    %86 = tpu.matmul %84, %85, %cst_28 {dimension_numbers = #tpu.dot_dimension_numbers<[1], [0], [0], [1], [0, 0, 1, 1], [], []>} : vector<16x16xf32>, vector<16x8xf32>, vector<16x8xf32> -> vector<16x8xf32>
    %87 = vector.extract_strided_slice %51 {offsets = [0, 16], sizes = [16, 8], strides = [1, 1]} : vector<16x32xf32> to vector<16x8xf32>
    %88 = vector.extract_strided_slice %53 {offsets = [16, 0], sizes = [8, 16], strides = [1, 1]} : vector<32x16xf32> to vector<8x16xf32>
    %cst_29 = arith.constant dense<0.000000e+00> : vector<16x16xf32>
    %89 = tpu.matmul %87, %88, %cst_29 {dimension_numbers = #tpu.dot_dimension_numbers<[1], [0], [0], [1], [0, 0, 1, 1], [], []>} : vector<16x8xf32>, vector<8x16xf32>, vector<16x16xf32> -> vector<16x16xf32>
    %90 = arith.addf %89, %12 : vector<16x16xf32>
    %cst_30 = arith.constant dense<0xFF800000> : vector<16xf32>
    %91 = vector.multi_reduction <maximumf>, %90, %cst_30 [1] : vector<16x16xf32> to vector<16xf32>
    %92 = vector.shape_cast %91 : vector<16xf32> to vector<16x1xf32>
    %93 = vector.broadcast %92 : vector<16x1xf32> to vector<16x16xf32>
    %94 = arith.subf %90, %93 : vector<16x16xf32>
    %95 = math.exp %94 : vector<16x16xf32>
    %cst_31 = arith.constant dense<0.000000e+00> : vector<16xf32>
    %96 = vector.multi_reduction <add>, %95, %cst_31 [1] : vector<16x16xf32> to vector<16xf32>
    %97 = vector.shape_cast %96 : vector<16xf32> to vector<16x1xf32>
    %98 = tpu.reciprocal %97 {approx = true} : vector<16x1xf32> -> vector<16x1xf32>
    %99 = vector.broadcast %98 : vector<16x1xf32> to vector<16x16xf32>
    %100 = arith.mulf %95, %99 : vector<16x16xf32>
    %101 = vector.extract_strided_slice %54 {offsets = [0, 16], sizes = [16, 8], strides = [1, 1]} : vector<16x32xf32> to vector<16x8xf32>
    %cst_32 = arith.constant dense<0.000000e+00> : vector<16x8xf32>
    %102 = tpu.matmul %100, %101, %cst_32 {dimension_numbers = #tpu.dot_dimension_numbers<[1], [0], [0], [1], [0, 0, 1, 1], [], []>} : vector<16x16xf32>, vector<16x8xf32>, vector<16x8xf32> -> vector<16x8xf32>
    %103 = vector.extract_strided_slice %51 {offsets = [0, 24], sizes = [16, 8], strides = [1, 1]} : vector<16x32xf32> to vector<16x8xf32>
    %104 = vector.extract_strided_slice %53 {offsets = [24, 0], sizes = [8, 16], strides = [1, 1]} : vector<32x16xf32> to vector<8x16xf32>
    %cst_33 = arith.constant dense<0.000000e+00> : vector<16x16xf32>
    %105 = tpu.matmul %103, %104, %cst_33 {dimension_numbers = #tpu.dot_dimension_numbers<[1], [0], [0], [1], [0, 0, 1, 1], [], []>} : vector<16x8xf32>, vector<8x16xf32>, vector<16x16xf32> -> vector<16x16xf32>
    %106 = arith.addf %105, %12 : vector<16x16xf32>
    %cst_34 = arith.constant dense<0xFF800000> : vector<16xf32>
    %107 = vector.multi_reduction <maximumf>, %106, %cst_34 [1] : vector<16x16xf32> to vector<16xf32>
    %108 = vector.shape_cast %107 : vector<16xf32> to vector<16x1xf32>
    %109 = vector.broadcast %108 : vector<16x1xf32> to vector<16x16xf32>
    %110 = arith.subf %106, %109 : vector<16x16xf32>
    %111 = math.exp %110 : vector<16x16xf32>
    %cst_35 = arith.constant dense<0.000000e+00> : vector<16xf32>
    %112 = vector.multi_reduction <add>, %111, %cst_35 [1] : vector<16x16xf32> to vector<16xf32>
    %113 = vector.shape_cast %112 : vector<16xf32> to vector<16x1xf32>
    %114 = tpu.reciprocal %113 {approx = true} : vector<16x1xf32> -> vector<16x1xf32>
    %115 = vector.broadcast %114 : vector<16x1xf32> to vector<16x16xf32>
    %116 = arith.mulf %111, %115 : vector<16x16xf32>
    %117 = vector.extract_strided_slice %54 {offsets = [0, 24], sizes = [16, 8], strides = [1, 1]} : vector<16x32xf32> to vector<16x8xf32>
    %cst_36 = arith.constant dense<0.000000e+00> : vector<16x8xf32>
    %118 = tpu.matmul %116, %117, %cst_36 {dimension_numbers = #tpu.dot_dimension_numbers<[1], [0], [0], [1], [0, 0, 1, 1], [], []>} : vector<16x16xf32>, vector<16x8xf32>, vector<16x8xf32> -> vector<16x8xf32>
    %119 = tpu.concatenate %70, %86, %102, %118 in 1 : vector<16x8xf32>, vector<16x8xf32>, vector<16x8xf32>, vector<16x8xf32> -> vector<16x32xf32>
    %120 = arith.truncf %119 : vector<16x32xf32> to vector<16x32xbf16>
    %c0_37 = arith.constant 0 : index
    %c0_38 = arith.constant 0 : index
    %c0_39 = arith.constant 0 : index
    %121 = vector.load %arg5[%c0_37, %c0_38, %c0_39] : memref<4x32x32xbf16, #tpu.memory_space<vmem>>, vector<1x32x32xbf16>
    %122 = vector.shape_cast %121 : vector<1x32x32xbf16> to vector<32x32xbf16>
    %cst_40 = arith.constant dense<0.000000e+00> : vector<16x32xf32>
    %123 = tpu.matmul %120, %122, %cst_40 {dimension_numbers = #tpu.dot_dimension_numbers<[1], [0], [0], [1], [0, 0, 1, 1], [], []>} : vector<16x32xbf16>, vector<32x32xbf16>, vector<16x32xf32> -> vector<16x32xf32>
    %124 = vector.broadcast %16 : vector<1x32xf32> to vector<16x32xf32>
    %125 = arith.addf %123, %124 : vector<16x32xf32>
    %126 = arith.addf %11, %125 : vector<16x32xf32>
    %cst_41 = arith.constant dense<0.000000e+00> : vector<16xf32>
    %127 = vector.multi_reduction <add>, %126, %cst_41 [1] : vector<16x32xf32> to vector<16xf32>
    %128 = vector.shape_cast %127 : vector<16xf32> to vector<16x1xf32>
    %cst_42 = arith.constant 3.200000e+01 : f32
    %129 = vector.broadcast %cst_42 : f32 to vector<16x1xf32>
    %130 = arith.divf %128, %129 : vector<16x1xf32>
    %131 = vector.broadcast %130 : vector<16x1xf32> to vector<16x32xf32>
    %132 = arith.subf %126, %131 : vector<16x32xf32>
    %133 = arith.mulf %132, %132 : vector<16x32xf32>
    %cst_43 = arith.constant dense<0.000000e+00> : vector<16xf32>
    %134 = vector.multi_reduction <add>, %133, %cst_43 [1] : vector<16x32xf32> to vector<16xf32>
    %135 = vector.shape_cast %134 : vector<16xf32> to vector<16x1xf32>
    %cst_44 = arith.constant 3.200000e+01 : f32
    %136 = vector.broadcast %cst_44 : f32 to vector<16x1xf32>
    %137 = arith.divf %135, %136 : vector<16x1xf32>
    %138 = vector.broadcast %130 : vector<16x1xf32> to vector<16x32xf32>
    %139 = arith.subf %126, %138 : vector<16x32xf32>
    %cst_45 = arith.constant 9.99999974E-6 : f32
    %140 = vector.broadcast %cst_45 : f32 to vector<16x1xf32>
    %141 = arith.addf %137, %140 : vector<16x1xf32>
    %142 = math.rsqrt %141 : vector<16x1xf32>
    %143 = vector.broadcast %142 : vector<16x1xf32> to vector<16x32xf32>
    %144 = arith.mulf %139, %143 : vector<16x32xf32>
    %145 = vector.broadcast %21 : vector<1x32xf32> to vector<16x32xf32>
    %146 = arith.mulf %144, %145 : vector<16x32xf32>
    %147 = vector.broadcast %22 : vector<1x32xf32> to vector<16x32xf32>
    %148 = arith.addf %146, %147 : vector<16x32xf32>
    %149 = arith.truncf %148 : vector<16x32xf32> to vector<16x32xbf16>
    %c0_46 = arith.constant 0 : index
    %c0_47 = arith.constant 0 : index
    %c0_48 = arith.constant 0 : index
    %150 = vector.load %arg6[%c0_46, %c0_47, %c0_48] : memref<4x32x64xbf16, #tpu.memory_space<vmem>>, vector<1x32x64xbf16>
    %151 = vector.shape_cast %150 : vector<1x32x64xbf16> to vector<32x64xbf16>
    %cst_49 = arith.constant dense<0.000000e+00> : vector<16x64xf32>
    %152 = tpu.matmul %149, %151, %cst_49 {dimension_numbers = #tpu.dot_dimension_numbers<[1], [0], [0], [1], [0, 0, 1, 1], [], []>} : vector<16x32xbf16>, vector<32x64xbf16>, vector<16x64xf32> -> vector<16x64xf32>
    %153 = vector.broadcast %17 : vector<1x64xf32> to vector<16x64xf32>
    %154 = arith.addf %152, %153 : vector<16x64xf32>
    %cst_50 = arith.constant 0.000000e+00 : f32
    %155 = vector.broadcast %cst_50 : f32 to vector<16x64xf32>
    %156 = arith.maximumf %154, %155 : vector<16x64xf32>
    %157 = arith.truncf %156 : vector<16x64xf32> to vector<16x64xbf16>
    %c0_51 = arith.constant 0 : index
    %c0_52 = arith.constant 0 : index
    %c0_53 = arith.constant 0 : index
    %158 = vector.load %arg7[%c0_51, %c0_52, %c0_53] : memref<4x64x32xbf16, #tpu.memory_space<vmem>>, vector<1x64x32xbf16>
    %159 = vector.shape_cast %158 : vector<1x64x32xbf16> to vector<64x32xbf16>
    %cst_54 = arith.constant dense<0.000000e+00> : vector<16x32xf32>
    %160 = tpu.matmul %157, %159, %cst_54 {dimension_numbers = #tpu.dot_dimension_numbers<[1], [0], [0], [1], [0, 0, 1, 1], [], []>} : vector<16x64xbf16>, vector<64x32xbf16>, vector<16x32xf32> -> vector<16x32xf32>
    %161 = vector.broadcast %18 : vector<1x32xf32> to vector<16x32xf32>
    %162 = arith.addf %160, %161 : vector<16x32xf32>
    %163 = arith.addf %126, %162 : vector<16x32xf32>
    %c1 = arith.constant 1 : index
    %c0_55 = arith.constant 0 : index
    %c0_56 = arith.constant 0 : index
    %164 = vector.load %arg8[%c1, %c0_55, %c0_56] : memref<4x8x128xf32, #tpu.memory_space<vmem>>, vector<1x8x128xf32>
    %165 = vector.shape_cast %164 : vector<1x8x128xf32> to vector<8x128xf32>
    %166 = vector.extract_strided_slice %165 {offsets = [0, 0], sizes = [1, 96], strides = [1, 1]} : vector<8x128xf32> to vector<1x96xf32>
    %167 = vector.extract_strided_slice %165 {offsets = [1, 0], sizes = [1, 32], strides = [1, 1]} : vector<8x128xf32> to vector<1x32xf32>
    %168 = vector.extract_strided_slice %165 {offsets = [2, 0], sizes = [1, 64], strides = [1, 1]} : vector<8x128xf32> to vector<1x64xf32>
    %169 = vector.extract_strided_slice %165 {offsets = [3, 0], sizes = [1, 32], strides = [1, 1]} : vector<8x128xf32> to vector<1x32xf32>
    %170 = vector.extract_strided_slice %165 {offsets = [4, 0], sizes = [1, 32], strides = [1, 1]} : vector<8x128xf32> to vector<1x32xf32>
    %171 = vector.extract_strided_slice %165 {offsets = [5, 0], sizes = [1, 32], strides = [1, 1]} : vector<8x128xf32> to vector<1x32xf32>
    %172 = vector.extract_strided_slice %165 {offsets = [6, 0], sizes = [1, 32], strides = [1, 1]} : vector<8x128xf32> to vector<1x32xf32>
    %173 = vector.extract_strided_slice %165 {offsets = [7, 0], sizes = [1, 32], strides = [1, 1]} : vector<8x128xf32> to vector<1x32xf32>
    %cst_57 = arith.constant dense<0.000000e+00> : vector<16xf32>
    %174 = vector.multi_reduction <add>, %163, %cst_57 [1] : vector<16x32xf32> to vector<16xf32>
    %175 = vector.shape_cast %174 : vector<16xf32> to vector<16x1xf32>
    %cst_58 = arith.constant 3.200000e+01 : f32
    %176 = vector.broadcast %cst_58 : f32 to vector<16x1xf32>
    %177 = arith.divf %175, %176 : vector<16x1xf32>
    %178 = vector.broadcast %177 : vector<16x1xf32> to vector<16x32xf32>
    %179 = arith.subf %163, %178 : vector<16x32xf32>
    %180 = arith.mulf %179, %179 : vector<16x32xf32>
    %cst_59 = arith.constant dense<0.000000e+00> : vector<16xf32>
    %181 = vector.multi_reduction <add>, %180, %cst_59 [1] : vector<16x32xf32> to vector<16xf32>
    %182 = vector.shape_cast %181 : vector<16xf32> to vector<16x1xf32>
    %cst_60 = arith.constant 3.200000e+01 : f32
    %183 = vector.broadcast %cst_60 : f32 to vector<16x1xf32>
    %184 = arith.divf %182, %183 : vector<16x1xf32>
    %185 = vector.broadcast %177 : vector<16x1xf32> to vector<16x32xf32>
    %186 = arith.subf %163, %185 : vector<16x32xf32>
    %cst_61 = arith.constant 9.99999974E-6 : f32
    %187 = vector.broadcast %cst_61 : f32 to vector<16x1xf32>
    %188 = arith.addf %184, %187 : vector<16x1xf32>
    %189 = math.rsqrt %188 : vector<16x1xf32>
    %190 = vector.broadcast %189 : vector<16x1xf32> to vector<16x32xf32>
    %191 = arith.mulf %186, %190 : vector<16x32xf32>
    %192 = vector.broadcast %170 : vector<1x32xf32> to vector<16x32xf32>
    %193 = arith.mulf %191, %192 : vector<16x32xf32>
    %194 = vector.broadcast %171 : vector<1x32xf32> to vector<16x32xf32>
    %195 = arith.addf %193, %194 : vector<16x32xf32>
    %196 = arith.truncf %195 : vector<16x32xf32> to vector<16x32xbf16>
    %c1_62 = arith.constant 1 : index
    %c0_63 = arith.constant 0 : index
    %c0_64 = arith.constant 0 : index
    %197 = vector.load %arg4[%c1_62, %c0_63, %c0_64] : memref<4x32x96xbf16, #tpu.memory_space<vmem>>, vector<1x32x96xbf16>
    %198 = vector.shape_cast %197 : vector<1x32x96xbf16> to vector<32x96xbf16>
    %cst_65 = arith.constant dense<0.000000e+00> : vector<16x96xf32>
    %199 = tpu.matmul %196, %198, %cst_65 {dimension_numbers = #tpu.dot_dimension_numbers<[1], [0], [0], [1], [0, 0, 1, 1], [], []>} : vector<16x32xbf16>, vector<32x96xbf16>, vector<16x96xf32> -> vector<16x96xf32>
    %200 = vector.broadcast %166 : vector<1x96xf32> to vector<16x96xf32>
    %201 = arith.addf %199, %200 : vector<16x96xf32>
    %202 = vector.extract_strided_slice %201 {offsets = [0, 0], sizes = [16, 32], strides = [1, 1]} : vector<16x96xf32> to vector<16x32xf32>
    %203 = vector.extract_strided_slice %201 {offsets = [0, 32], sizes = [16, 32], strides = [1, 1]} : vector<16x96xf32> to vector<16x32xf32>
    %204 = tpu.transpose %203, [1, 0] : vector<16x32xf32> -> vector<32x16xf32>
    %205 = vector.extract_strided_slice %201 {offsets = [0, 64], sizes = [16, 32], strides = [1, 1]} : vector<16x96xf32> to vector<16x32xf32>
    %206 = vector.extract_strided_slice %202 {offsets = [0, 0], sizes = [16, 8], strides = [1, 1]} : vector<16x32xf32> to vector<16x8xf32>
    %207 = vector.extract_strided_slice %204 {offsets = [0, 0], sizes = [8, 16], strides = [1, 1]} : vector<32x16xf32> to vector<8x16xf32>
    %cst_66 = arith.constant dense<0.000000e+00> : vector<16x16xf32>
    %208 = tpu.matmul %206, %207, %cst_66 {dimension_numbers = #tpu.dot_dimension_numbers<[1], [0], [0], [1], [0, 0, 1, 1], [], []>} : vector<16x8xf32>, vector<8x16xf32>, vector<16x16xf32> -> vector<16x16xf32>
    %209 = arith.addf %208, %12 : vector<16x16xf32>
    %cst_67 = arith.constant dense<0xFF800000> : vector<16xf32>
    %210 = vector.multi_reduction <maximumf>, %209, %cst_67 [1] : vector<16x16xf32> to vector<16xf32>
    %211 = vector.shape_cast %210 : vector<16xf32> to vector<16x1xf32>
    %212 = vector.broadcast %211 : vector<16x1xf32> to vector<16x16xf32>
    %213 = arith.subf %209, %212 : vector<16x16xf32>
    %214 = math.exp %213 : vector<16x16xf32>
    %cst_68 = arith.constant dense<0.000000e+00> : vector<16xf32>
    %215 = vector.multi_reduction <add>, %214, %cst_68 [1] : vector<16x16xf32> to vector<16xf32>
    %216 = vector.shape_cast %215 : vector<16xf32> to vector<16x1xf32>
    %217 = tpu.reciprocal %216 {approx = true} : vector<16x1xf32> -> vector<16x1xf32>
    %218 = vector.broadcast %217 : vector<16x1xf32> to vector<16x16xf32>
    %219 = arith.mulf %214, %218 : vector<16x16xf32>
    %220 = vector.extract_strided_slice %205 {offsets = [0, 0], sizes = [16, 8], strides = [1, 1]} : vector<16x32xf32> to vector<16x8xf32>
    %cst_69 = arith.constant dense<0.000000e+00> : vector<16x8xf32>
    %221 = tpu.matmul %219, %220, %cst_69 {dimension_numbers = #tpu.dot_dimension_numbers<[1], [0], [0], [1], [0, 0, 1, 1], [], []>} : vector<16x16xf32>, vector<16x8xf32>, vector<16x8xf32> -> vector<16x8xf32>
    %222 = vector.extract_strided_slice %202 {offsets = [0, 8], sizes = [16, 8], strides = [1, 1]} : vector<16x32xf32> to vector<16x8xf32>
    %223 = vector.extract_strided_slice %204 {offsets = [8, 0], sizes = [8, 16], strides = [1, 1]} : vector<32x16xf32> to vector<8x16xf32>
    %cst_70 = arith.constant dense<0.000000e+00> : vector<16x16xf32>
    %224 = tpu.matmul %222, %223, %cst_70 {dimension_numbers = #tpu.dot_dimension_numbers<[1], [0], [0], [1], [0, 0, 1, 1], [], []>} : vector<16x8xf32>, vector<8x16xf32>, vector<16x16xf32> -> vector<16x16xf32>
    %225 = arith.addf %224, %12 : vector<16x16xf32>
    %cst_71 = arith.constant dense<0xFF800000> : vector<16xf32>
    %226 = vector.multi_reduction <maximumf>, %225, %cst_71 [1] : vector<16x16xf32> to vector<16xf32>
    %227 = vector.shape_cast %226 : vector<16xf32> to vector<16x1xf32>
    %228 = vector.broadcast %227 : vector<16x1xf32> to vector<16x16xf32>
    %229 = arith.subf %225, %228 : vector<16x16xf32>
    %230 = math.exp %229 : vector<16x16xf32>
    %cst_72 = arith.constant dense<0.000000e+00> : vector<16xf32>
    %231 = vector.multi_reduction <add>, %230, %cst_72 [1] : vector<16x16xf32> to vector<16xf32>
    %232 = vector.shape_cast %231 : vector<16xf32> to vector<16x1xf32>
    %233 = tpu.reciprocal %232 {approx = true} : vector<16x1xf32> -> vector<16x1xf32>
    %234 = vector.broadcast %233 : vector<16x1xf32> to vector<16x16xf32>
    %235 = arith.mulf %230, %234 : vector<16x16xf32>
    %236 = vector.extract_strided_slice %205 {offsets = [0, 8], sizes = [16, 8], strides = [1, 1]} : vector<16x32xf32> to vector<16x8xf32>
    %cst_73 = arith.constant dense<0.000000e+00> : vector<16x8xf32>
    %237 = tpu.matmul %235, %236, %cst_73 {dimension_numbers = #tpu.dot_dimension_numbers<[1], [0], [0], [1], [0, 0, 1, 1], [], []>} : vector<16x16xf32>, vector<16x8xf32>, vector<16x8xf32> -> vector<16x8xf32>
    %238 = vector.extract_strided_slice %202 {offsets = [0, 16], sizes = [16, 8], strides = [1, 1]} : vector<16x32xf32> to vector<16x8xf32>
    %239 = vector.extract_strided_slice %204 {offsets = [16, 0], sizes = [8, 16], strides = [1, 1]} : vector<32x16xf32> to vector<8x16xf32>
    %cst_74 = arith.constant dense<0.000000e+00> : vector<16x16xf32>
    %240 = tpu.matmul %238, %239, %cst_74 {dimension_numbers = #tpu.dot_dimension_numbers<[1], [0], [0], [1], [0, 0, 1, 1], [], []>} : vector<16x8xf32>, vector<8x16xf32>, vector<16x16xf32> -> vector<16x16xf32>
    %241 = arith.addf %240, %12 : vector<16x16xf32>
    %cst_75 = arith.constant dense<0xFF800000> : vector<16xf32>
    %242 = vector.multi_reduction <maximumf>, %241, %cst_75 [1] : vector<16x16xf32> to vector<16xf32>
    %243 = vector.shape_cast %242 : vector<16xf32> to vector<16x1xf32>
    %244 = vector.broadcast %243 : vector<16x1xf32> to vector<16x16xf32>
    %245 = arith.subf %241, %244 : vector<16x16xf32>
    %246 = math.exp %245 : vector<16x16xf32>
    %cst_76 = arith.constant dense<0.000000e+00> : vector<16xf32>
    %247 = vector.multi_reduction <add>, %246, %cst_76 [1] : vector<16x16xf32> to vector<16xf32>
    %248 = vector.shape_cast %247 : vector<16xf32> to vector<16x1xf32>
    %249 = tpu.reciprocal %248 {approx = true} : vector<16x1xf32> -> vector<16x1xf32>
    %250 = vector.broadcast %249 : vector<16x1xf32> to vector<16x16xf32>
    %251 = arith.mulf %246, %250 : vector<16x16xf32>
    %252 = vector.extract_strided_slice %205 {offsets = [0, 16], sizes = [16, 8], strides = [1, 1]} : vector<16x32xf32> to vector<16x8xf32>
    %cst_77 = arith.constant dense<0.000000e+00> : vector<16x8xf32>
    %253 = tpu.matmul %251, %252, %cst_77 {dimension_numbers = #tpu.dot_dimension_numbers<[1], [0], [0], [1], [0, 0, 1, 1], [], []>} : vector<16x16xf32>, vector<16x8xf32>, vector<16x8xf32> -> vector<16x8xf32>
    %254 = vector.extract_strided_slice %202 {offsets = [0, 24], sizes = [16, 8], strides = [1, 1]} : vector<16x32xf32> to vector<16x8xf32>
    %255 = vector.extract_strided_slice %204 {offsets = [24, 0], sizes = [8, 16], strides = [1, 1]} : vector<32x16xf32> to vector<8x16xf32>
    %cst_78 = arith.constant dense<0.000000e+00> : vector<16x16xf32>
    %256 = tpu.matmul %254, %255, %cst_78 {dimension_numbers = #tpu.dot_dimension_numbers<[1], [0], [0], [1], [0, 0, 1, 1], [], []>} : vector<16x8xf32>, vector<8x16xf32>, vector<16x16xf32> -> vector<16x16xf32>
    %257 = arith.addf %256, %12 : vector<16x16xf32>
    %cst_79 = arith.constant dense<0xFF800000> : vector<16xf32>
    %258 = vector.multi_reduction <maximumf>, %257, %cst_79 [1] : vector<16x16xf32> to vector<16xf32>
    %259 = vector.shape_cast %258 : vector<16xf32> to vector<16x1xf32>
    %260 = vector.broadcast %259 : vector<16x1xf32> to vector<16x16xf32>
    %261 = arith.subf %257, %260 : vector<16x16xf32>
    %262 = math.exp %261 : vector<16x16xf32>
    %cst_80 = arith.constant dense<0.000000e+00> : vector<16xf32>
    %263 = vector.multi_reduction <add>, %262, %cst_80 [1] : vector<16x16xf32> to vector<16xf32>
    %264 = vector.shape_cast %263 : vector<16xf32> to vector<16x1xf32>
    %265 = tpu.reciprocal %264 {approx = true} : vector<16x1xf32> -> vector<16x1xf32>
    %266 = vector.broadcast %265 : vector<16x1xf32> to vector<16x16xf32>
    %267 = arith.mulf %262, %266 : vector<16x16xf32>
    %268 = vector.extract_strided_slice %205 {offsets = [0, 24], sizes = [16, 8], strides = [1, 1]} : vector<16x32xf32> to vector<16x8xf32>
    %cst_81 = arith.constant dense<0.000000e+00> : vector<16x8xf32>
    %269 = tpu.matmul %267, %268, %cst_81 {dimension_numbers = #tpu.dot_dimension_numbers<[1], [0], [0], [1], [0, 0, 1, 1], [], []>} : vector<16x16xf32>, vector<16x8xf32>, vector<16x8xf32> -> vector<16x8xf32>
    %270 = tpu.concatenate %221, %237, %253, %269 in 1 : vector<16x8xf32>, vector<16x8xf32>, vector<16x8xf32>, vector<16x8xf32> -> vector<16x32xf32>
    %271 = arith.truncf %270 : vector<16x32xf32> to vector<16x32xbf16>
    %c1_82 = arith.constant 1 : index
    %c0_83 = arith.constant 0 : index
    %c0_84 = arith.constant 0 : index
    %272 = vector.load %arg5[%c1_82, %c0_83, %c0_84] : memref<4x32x32xbf16, #tpu.memory_space<vmem>>, vector<1x32x32xbf16>
    %273 = vector.shape_cast %272 : vector<1x32x32xbf16> to vector<32x32xbf16>
    %cst_85 = arith.constant dense<0.000000e+00> : vector<16x32xf32>
    %274 = tpu.matmul %271, %273, %cst_85 {dimension_numbers = #tpu.dot_dimension_numbers<[1], [0], [0], [1], [0, 0, 1, 1], [], []>} : vector<16x32xbf16>, vector<32x32xbf16>, vector<16x32xf32> -> vector<16x32xf32>
    %275 = vector.broadcast %167 : vector<1x32xf32> to vector<16x32xf32>
    %276 = arith.addf %274, %275 : vector<16x32xf32>
    %277 = arith.addf %163, %276 : vector<16x32xf32>
    %cst_86 = arith.constant dense<0.000000e+00> : vector<16xf32>
    %278 = vector.multi_reduction <add>, %277, %cst_86 [1] : vector<16x32xf32> to vector<16xf32>
    %279 = vector.shape_cast %278 : vector<16xf32> to vector<16x1xf32>
    %cst_87 = arith.constant 3.200000e+01 : f32
    %280 = vector.broadcast %cst_87 : f32 to vector<16x1xf32>
    %281 = arith.divf %279, %280 : vector<16x1xf32>
    %282 = vector.broadcast %281 : vector<16x1xf32> to vector<16x32xf32>
    %283 = arith.subf %277, %282 : vector<16x32xf32>
    %284 = arith.mulf %283, %283 : vector<16x32xf32>
    %cst_88 = arith.constant dense<0.000000e+00> : vector<16xf32>
    %285 = vector.multi_reduction <add>, %284, %cst_88 [1] : vector<16x32xf32> to vector<16xf32>
    %286 = vector.shape_cast %285 : vector<16xf32> to vector<16x1xf32>
    %cst_89 = arith.constant 3.200000e+01 : f32
    %287 = vector.broadcast %cst_89 : f32 to vector<16x1xf32>
    %288 = arith.divf %286, %287 : vector<16x1xf32>
    %289 = vector.broadcast %281 : vector<16x1xf32> to vector<16x32xf32>
    %290 = arith.subf %277, %289 : vector<16x32xf32>
    %cst_90 = arith.constant 9.99999974E-6 : f32
    %291 = vector.broadcast %cst_90 : f32 to vector<16x1xf32>
    %292 = arith.addf %288, %291 : vector<16x1xf32>
    %293 = math.rsqrt %292 : vector<16x1xf32>
    %294 = vector.broadcast %293 : vector<16x1xf32> to vector<16x32xf32>
    %295 = arith.mulf %290, %294 : vector<16x32xf32>
    %296 = vector.broadcast %172 : vector<1x32xf32> to vector<16x32xf32>
    %297 = arith.mulf %295, %296 : vector<16x32xf32>
    %298 = vector.broadcast %173 : vector<1x32xf32> to vector<16x32xf32>
    %299 = arith.addf %297, %298 : vector<16x32xf32>
    %300 = arith.truncf %299 : vector<16x32xf32> to vector<16x32xbf16>
    %c1_91 = arith.constant 1 : index
    %c0_92 = arith.constant 0 : index
    %c0_93 = arith.constant 0 : index
    %301 = vector.load %arg6[%c1_91, %c0_92, %c0_93] : memref<4x32x64xbf16, #tpu.memory_space<vmem>>, vector<1x32x64xbf16>
    %302 = vector.shape_cast %301 : vector<1x32x64xbf16> to vector<32x64xbf16>
    %cst_94 = arith.constant dense<0.000000e+00> : vector<16x64xf32>
    %303 = tpu.matmul %300, %302, %cst_94 {dimension_numbers = #tpu.dot_dimension_numbers<[1], [0], [0], [1], [0, 0, 1, 1], [], []>} : vector<16x32xbf16>, vector<32x64xbf16>, vector<16x64xf32> -> vector<16x64xf32>
    %304 = vector.broadcast %168 : vector<1x64xf32> to vector<16x64xf32>
    %305 = arith.addf %303, %304 : vector<16x64xf32>
    %cst_95 = arith.constant 0.000000e+00 : f32
    %306 = vector.broadcast %cst_95 : f32 to vector<16x64xf32>
    %307 = arith.maximumf %305, %306 : vector<16x64xf32>
    %308 = arith.truncf %307 : vector<16x64xf32> to vector<16x64xbf16>
    %c1_96 = arith.constant 1 : index
    %c0_97 = arith.constant 0 : index
    %c0_98 = arith.constant 0 : index
    %309 = vector.load %arg7[%c1_96, %c0_97, %c0_98] : memref<4x64x32xbf16, #tpu.memory_space<vmem>>, vector<1x64x32xbf16>
    %310 = vector.shape_cast %309 : vector<1x64x32xbf16> to vector<64x32xbf16>
    %cst_99 = arith.constant dense<0.000000e+00> : vector<16x32xf32>
    %311 = tpu.matmul %308, %310, %cst_99 {dimension_numbers = #tpu.dot_dimension_numbers<[1], [0], [0], [1], [0, 0, 1, 1], [], []>} : vector<16x64xbf16>, vector<64x32xbf16>, vector<16x32xf32> -> vector<16x32xf32>
    %312 = vector.broadcast %169 : vector<1x32xf32> to vector<16x32xf32>
    %313 = arith.addf %311, %312 : vector<16x32xf32>
    %314 = arith.addf %277, %313 : vector<16x32xf32>
    %c2 = arith.constant 2 : index
    %c0_100 = arith.constant 0 : index
    %c0_101 = arith.constant 0 : index
    %315 = vector.load %arg8[%c2, %c0_100, %c0_101] : memref<4x8x128xf32, #tpu.memory_space<vmem>>, vector<1x8x128xf32>
    %316 = vector.shape_cast %315 : vector<1x8x128xf32> to vector<8x128xf32>
    %317 = vector.extract_strided_slice %316 {offsets = [0, 0], sizes = [1, 96], strides = [1, 1]} : vector<8x128xf32> to vector<1x96xf32>
    %318 = vector.extract_strided_slice %316 {offsets = [1, 0], sizes = [1, 32], strides = [1, 1]} : vector<8x128xf32> to vector<1x32xf32>
    %319 = vector.extract_strided_slice %316 {offsets = [2, 0], sizes = [1, 64], strides = [1, 1]} : vector<8x128xf32> to vector<1x64xf32>
    %320 = vector.extract_strided_slice %316 {offsets = [3, 0], sizes = [1, 32], strides = [1, 1]} : vector<8x128xf32> to vector<1x32xf32>
    %321 = vector.extract_strided_slice %316 {offsets = [4, 0], sizes = [1, 32], strides = [1, 1]} : vector<8x128xf32> to vector<1x32xf32>
    %322 = vector.extract_strided_slice %316 {offsets = [5, 0], sizes = [1, 32], strides = [1, 1]} : vector<8x128xf32> to vector<1x32xf32>
    %323 = vector.extract_strided_slice %316 {offsets = [6, 0], sizes = [1, 32], strides = [1, 1]} : vector<8x128xf32> to vector<1x32xf32>
    %324 = vector.extract_strided_slice %316 {offsets = [7, 0], sizes = [1, 32], strides = [1, 1]} : vector<8x128xf32> to vector<1x32xf32>
    %cst_102 = arith.constant dense<0.000000e+00> : vector<16xf32>
    %325 = vector.multi_reduction <add>, %314, %cst_102 [1] : vector<16x32xf32> to vector<16xf32>
    %326 = vector.shape_cast %325 : vector<16xf32> to vector<16x1xf32>
    %cst_103 = arith.constant 3.200000e+01 : f32
    %327 = vector.broadcast %cst_103 : f32 to vector<16x1xf32>
    %328 = arith.divf %326, %327 : vector<16x1xf32>
    %329 = vector.broadcast %328 : vector<16x1xf32> to vector<16x32xf32>
    %330 = arith.subf %314, %329 : vector<16x32xf32>
    %331 = arith.mulf %330, %330 : vector<16x32xf32>
    %cst_104 = arith.constant dense<0.000000e+00> : vector<16xf32>
    %332 = vector.multi_reduction <add>, %331, %cst_104 [1] : vector<16x32xf32> to vector<16xf32>
    %333 = vector.shape_cast %332 : vector<16xf32> to vector<16x1xf32>
    %cst_105 = arith.constant 3.200000e+01 : f32
    %334 = vector.broadcast %cst_105 : f32 to vector<16x1xf32>
    %335 = arith.divf %333, %334 : vector<16x1xf32>
    %336 = vector.broadcast %328 : vector<16x1xf32> to vector<16x32xf32>
    %337 = arith.subf %314, %336 : vector<16x32xf32>
    %cst_106 = arith.constant 9.99999974E-6 : f32
    %338 = vector.broadcast %cst_106 : f32 to vector<16x1xf32>
    %339 = arith.addf %335, %338 : vector<16x1xf32>
    %340 = math.rsqrt %339 : vector<16x1xf32>
    %341 = vector.broadcast %340 : vector<16x1xf32> to vector<16x32xf32>
    %342 = arith.mulf %337, %341 : vector<16x32xf32>
    %343 = vector.broadcast %321 : vector<1x32xf32> to vector<16x32xf32>
    %344 = arith.mulf %342, %343 : vector<16x32xf32>
    %345 = vector.broadcast %322 : vector<1x32xf32> to vector<16x32xf32>
    %346 = arith.addf %344, %345 : vector<16x32xf32>
    %347 = arith.truncf %346 : vector<16x32xf32> to vector<16x32xbf16>
    %c2_107 = arith.constant 2 : index
    %c0_108 = arith.constant 0 : index
    %c0_109 = arith.constant 0 : index
    %348 = vector.load %arg4[%c2_107, %c0_108, %c0_109] : memref<4x32x96xbf16, #tpu.memory_space<vmem>>, vector<1x32x96xbf16>
    %349 = vector.shape_cast %348 : vector<1x32x96xbf16> to vector<32x96xbf16>
    %cst_110 = arith.constant dense<0.000000e+00> : vector<16x96xf32>
    %350 = tpu.matmul %347, %349, %cst_110 {dimension_numbers = #tpu.dot_dimension_numbers<[1], [0], [0], [1], [0, 0, 1, 1], [], []>} : vector<16x32xbf16>, vector<32x96xbf16>, vector<16x96xf32> -> vector<16x96xf32>
    %351 = vector.broadcast %317 : vector<1x96xf32> to vector<16x96xf32>
    %352 = arith.addf %350, %351 : vector<16x96xf32>
    %353 = vector.extract_strided_slice %352 {offsets = [0, 0], sizes = [16, 32], strides = [1, 1]} : vector<16x96xf32> to vector<16x32xf32>
    %354 = vector.extract_strided_slice %352 {offsets = [0, 32], sizes = [16, 32], strides = [1, 1]} : vector<16x96xf32> to vector<16x32xf32>
    %355 = tpu.transpose %354, [1, 0] : vector<16x32xf32> -> vector<32x16xf32>
    %356 = vector.extract_strided_slice %352 {offsets = [0, 64], sizes = [16, 32], strides = [1, 1]} : vector<16x96xf32> to vector<16x32xf32>
    %357 = vector.extract_strided_slice %353 {offsets = [0, 0], sizes = [16, 8], strides = [1, 1]} : vector<16x32xf32> to vector<16x8xf32>
    %358 = vector.extract_strided_slice %355 {offsets = [0, 0], sizes = [8, 16], strides = [1, 1]} : vector<32x16xf32> to vector<8x16xf32>
    %cst_111 = arith.constant dense<0.000000e+00> : vector<16x16xf32>
    %359 = tpu.matmul %357, %358, %cst_111 {dimension_numbers = #tpu.dot_dimension_numbers<[1], [0], [0], [1], [0, 0, 1, 1], [], []>} : vector<16x8xf32>, vector<8x16xf32>, vector<16x16xf32> -> vector<16x16xf32>
    %360 = arith.addf %359, %12 : vector<16x16xf32>
    %cst_112 = arith.constant dense<0xFF800000> : vector<16xf32>
    %361 = vector.multi_reduction <maximumf>, %360, %cst_112 [1] : vector<16x16xf32> to vector<16xf32>
    %362 = vector.shape_cast %361 : vector<16xf32> to vector<16x1xf32>
    %363 = vector.broadcast %362 : vector<16x1xf32> to vector<16x16xf32>
    %364 = arith.subf %360, %363 : vector<16x16xf32>
    %365 = math.exp %364 : vector<16x16xf32>
    %cst_113 = arith.constant dense<0.000000e+00> : vector<16xf32>
    %366 = vector.multi_reduction <add>, %365, %cst_113 [1] : vector<16x16xf32> to vector<16xf32>
    %367 = vector.shape_cast %366 : vector<16xf32> to vector<16x1xf32>
    %368 = tpu.reciprocal %367 {approx = true} : vector<16x1xf32> -> vector<16x1xf32>
    %369 = vector.broadcast %368 : vector<16x1xf32> to vector<16x16xf32>
    %370 = arith.mulf %365, %369 : vector<16x16xf32>
    %371 = vector.extract_strided_slice %356 {offsets = [0, 0], sizes = [16, 8], strides = [1, 1]} : vector<16x32xf32> to vector<16x8xf32>
    %cst_114 = arith.constant dense<0.000000e+00> : vector<16x8xf32>
    %372 = tpu.matmul %370, %371, %cst_114 {dimension_numbers = #tpu.dot_dimension_numbers<[1], [0], [0], [1], [0, 0, 1, 1], [], []>} : vector<16x16xf32>, vector<16x8xf32>, vector<16x8xf32> -> vector<16x8xf32>
    %373 = vector.extract_strided_slice %353 {offsets = [0, 8], sizes = [16, 8], strides = [1, 1]} : vector<16x32xf32> to vector<16x8xf32>
    %374 = vector.extract_strided_slice %355 {offsets = [8, 0], sizes = [8, 16], strides = [1, 1]} : vector<32x16xf32> to vector<8x16xf32>
    %cst_115 = arith.constant dense<0.000000e+00> : vector<16x16xf32>
    %375 = tpu.matmul %373, %374, %cst_115 {dimension_numbers = #tpu.dot_dimension_numbers<[1], [0], [0], [1], [0, 0, 1, 1], [], []>} : vector<16x8xf32>, vector<8x16xf32>, vector<16x16xf32> -> vector<16x16xf32>
    %376 = arith.addf %375, %12 : vector<16x16xf32>
    %cst_116 = arith.constant dense<0xFF800000> : vector<16xf32>
    %377 = vector.multi_reduction <maximumf>, %376, %cst_116 [1] : vector<16x16xf32> to vector<16xf32>
    %378 = vector.shape_cast %377 : vector<16xf32> to vector<16x1xf32>
    %379 = vector.broadcast %378 : vector<16x1xf32> to vector<16x16xf32>
    %380 = arith.subf %376, %379 : vector<16x16xf32>
    %381 = math.exp %380 : vector<16x16xf32>
    %cst_117 = arith.constant dense<0.000000e+00> : vector<16xf32>
    %382 = vector.multi_reduction <add>, %381, %cst_117 [1] : vector<16x16xf32> to vector<16xf32>
    %383 = vector.shape_cast %382 : vector<16xf32> to vector<16x1xf32>
    %384 = tpu.reciprocal %383 {approx = true} : vector<16x1xf32> -> vector<16x1xf32>
    %385 = vector.broadcast %384 : vector<16x1xf32> to vector<16x16xf32>
    %386 = arith.mulf %381, %385 : vector<16x16xf32>
    %387 = vector.extract_strided_slice %356 {offsets = [0, 8], sizes = [16, 8], strides = [1, 1]} : vector<16x32xf32> to vector<16x8xf32>
    %cst_118 = arith.constant dense<0.000000e+00> : vector<16x8xf32>
    %388 = tpu.matmul %386, %387, %cst_118 {dimension_numbers = #tpu.dot_dimension_numbers<[1], [0], [0], [1], [0, 0, 1, 1], [], []>} : vector<16x16xf32>, vector<16x8xf32>, vector<16x8xf32> -> vector<16x8xf32>
    %389 = vector.extract_strided_slice %353 {offsets = [0, 16], sizes = [16, 8], strides = [1, 1]} : vector<16x32xf32> to vector<16x8xf32>
    %390 = vector.extract_strided_slice %355 {offsets = [16, 0], sizes = [8, 16], strides = [1, 1]} : vector<32x16xf32> to vector<8x16xf32>
    %cst_119 = arith.constant dense<0.000000e+00> : vector<16x16xf32>
    %391 = tpu.matmul %389, %390, %cst_119 {dimension_numbers = #tpu.dot_dimension_numbers<[1], [0], [0], [1], [0, 0, 1, 1], [], []>} : vector<16x8xf32>, vector<8x16xf32>, vector<16x16xf32> -> vector<16x16xf32>
    %392 = arith.addf %391, %12 : vector<16x16xf32>
    %cst_120 = arith.constant dense<0xFF800000> : vector<16xf32>
    %393 = vector.multi_reduction <maximumf>, %392, %cst_120 [1] : vector<16x16xf32> to vector<16xf32>
    %394 = vector.shape_cast %393 : vector<16xf32> to vector<16x1xf32>
    %395 = vector.broadcast %394 : vector<16x1xf32> to vector<16x16xf32>
    %396 = arith.subf %392, %395 : vector<16x16xf32>
    %397 = math.exp %396 : vector<16x16xf32>
    %cst_121 = arith.constant dense<0.000000e+00> : vector<16xf32>
    %398 = vector.multi_reduction <add>, %397, %cst_121 [1] : vector<16x16xf32> to vector<16xf32>
    %399 = vector.shape_cast %398 : vector<16xf32> to vector<16x1xf32>
    %400 = tpu.reciprocal %399 {approx = true} : vector<16x1xf32> -> vector<16x1xf32>
    %401 = vector.broadcast %400 : vector<16x1xf32> to vector<16x16xf32>
    %402 = arith.mulf %397, %401 : vector<16x16xf32>
    %403 = vector.extract_strided_slice %356 {offsets = [0, 16], sizes = [16, 8], strides = [1, 1]} : vector<16x32xf32> to vector<16x8xf32>
    %cst_122 = arith.constant dense<0.000000e+00> : vector<16x8xf32>
    %404 = tpu.matmul %402, %403, %cst_122 {dimension_numbers = #tpu.dot_dimension_numbers<[1], [0], [0], [1], [0, 0, 1, 1], [], []>} : vector<16x16xf32>, vector<16x8xf32>, vector<16x8xf32> -> vector<16x8xf32>
    %405 = vector.extract_strided_slice %353 {offsets = [0, 24], sizes = [16, 8], strides = [1, 1]} : vector<16x32xf32> to vector<16x8xf32>
    %406 = vector.extract_strided_slice %355 {offsets = [24, 0], sizes = [8, 16], strides = [1, 1]} : vector<32x16xf32> to vector<8x16xf32>
    %cst_123 = arith.constant dense<0.000000e+00> : vector<16x16xf32>
    %407 = tpu.matmul %405, %406, %cst_123 {dimension_numbers = #tpu.dot_dimension_numbers<[1], [0], [0], [1], [0, 0, 1, 1], [], []>} : vector<16x8xf32>, vector<8x16xf32>, vector<16x16xf32> -> vector<16x16xf32>
    %408 = arith.addf %407, %12 : vector<16x16xf32>
    %cst_124 = arith.constant dense<0xFF800000> : vector<16xf32>
    %409 = vector.multi_reduction <maximumf>, %408, %cst_124 [1] : vector<16x16xf32> to vector<16xf32>
    %410 = vector.shape_cast %409 : vector<16xf32> to vector<16x1xf32>
    %411 = vector.broadcast %410 : vector<16x1xf32> to vector<16x16xf32>
    %412 = arith.subf %408, %411 : vector<16x16xf32>
    %413 = math.exp %412 : vector<16x16xf32>
    %cst_125 = arith.constant dense<0.000000e+00> : vector<16xf32>
    %414 = vector.multi_reduction <add>, %413, %cst_125 [1] : vector<16x16xf32> to vector<16xf32>
    %415 = vector.shape_cast %414 : vector<16xf32> to vector<16x1xf32>
    %416 = tpu.reciprocal %415 {approx = true} : vector<16x1xf32> -> vector<16x1xf32>
    %417 = vector.broadcast %416 : vector<16x1xf32> to vector<16x16xf32>
    %418 = arith.mulf %413, %417 : vector<16x16xf32>
    %419 = vector.extract_strided_slice %356 {offsets = [0, 24], sizes = [16, 8], strides = [1, 1]} : vector<16x32xf32> to vector<16x8xf32>
    %cst_126 = arith.constant dense<0.000000e+00> : vector<16x8xf32>
    %420 = tpu.matmul %418, %419, %cst_126 {dimension_numbers = #tpu.dot_dimension_numbers<[1], [0], [0], [1], [0, 0, 1, 1], [], []>} : vector<16x16xf32>, vector<16x8xf32>, vector<16x8xf32> -> vector<16x8xf32>
    %421 = tpu.concatenate %372, %388, %404, %420 in 1 : vector<16x8xf32>, vector<16x8xf32>, vector<16x8xf32>, vector<16x8xf32> -> vector<16x32xf32>
    %422 = arith.truncf %421 : vector<16x32xf32> to vector<16x32xbf16>
    %c2_127 = arith.constant 2 : index
    %c0_128 = arith.constant 0 : index
    %c0_129 = arith.constant 0 : index
    %423 = vector.load %arg5[%c2_127, %c0_128, %c0_129] : memref<4x32x32xbf16, #tpu.memory_space<vmem>>, vector<1x32x32xbf16>
    %424 = vector.shape_cast %423 : vector<1x32x32xbf16> to vector<32x32xbf16>
    %cst_130 = arith.constant dense<0.000000e+00> : vector<16x32xf32>
    %425 = tpu.matmul %422, %424, %cst_130 {dimension_numbers = #tpu.dot_dimension_numbers<[1], [0], [0], [1], [0, 0, 1, 1], [], []>} : vector<16x32xbf16>, vector<32x32xbf16>, vector<16x32xf32> -> vector<16x32xf32>
    %426 = vector.broadcast %318 : vector<1x32xf32> to vector<16x32xf32>
    %427 = arith.addf %425, %426 : vector<16x32xf32>
    %428 = arith.addf %314, %427 : vector<16x32xf32>
    %cst_131 = arith.constant dense<0.000000e+00> : vector<16xf32>
    %429 = vector.multi_reduction <add>, %428, %cst_131 [1] : vector<16x32xf32> to vector<16xf32>
    %430 = vector.shape_cast %429 : vector<16xf32> to vector<16x1xf32>
    %cst_132 = arith.constant 3.200000e+01 : f32
    %431 = vector.broadcast %cst_132 : f32 to vector<16x1xf32>
    %432 = arith.divf %430, %431 : vector<16x1xf32>
    %433 = vector.broadcast %432 : vector<16x1xf32> to vector<16x32xf32>
    %434 = arith.subf %428, %433 : vector<16x32xf32>
    %435 = arith.mulf %434, %434 : vector<16x32xf32>
    %cst_133 = arith.constant dense<0.000000e+00> : vector<16xf32>
    %436 = vector.multi_reduction <add>, %435, %cst_133 [1] : vector<16x32xf32> to vector<16xf32>
    %437 = vector.shape_cast %436 : vector<16xf32> to vector<16x1xf32>
    %cst_134 = arith.constant 3.200000e+01 : f32
    %438 = vector.broadcast %cst_134 : f32 to vector<16x1xf32>
    %439 = arith.divf %437, %438 : vector<16x1xf32>
    %440 = vector.broadcast %432 : vector<16x1xf32> to vector<16x32xf32>
    %441 = arith.subf %428, %440 : vector<16x32xf32>
    %cst_135 = arith.constant 9.99999974E-6 : f32
    %442 = vector.broadcast %cst_135 : f32 to vector<16x1xf32>
    %443 = arith.addf %439, %442 : vector<16x1xf32>
    %444 = math.rsqrt %443 : vector<16x1xf32>
    %445 = vector.broadcast %444 : vector<16x1xf32> to vector<16x32xf32>
    %446 = arith.mulf %441, %445 : vector<16x32xf32>
    %447 = vector.broadcast %323 : vector<1x32xf32> to vector<16x32xf32>
    %448 = arith.mulf %446, %447 : vector<16x32xf32>
    %449 = vector.broadcast %324 : vector<1x32xf32> to vector<16x32xf32>
    %450 = arith.addf %448, %449 : vector<16x32xf32>
    %451 = arith.truncf %450 : vector<16x32xf32> to vector<16x32xbf16>
    %c2_136 = arith.constant 2 : index
    %c0_137 = arith.constant 0 : index
    %c0_138 = arith.constant 0 : index
    %452 = vector.load %arg6[%c2_136, %c0_137, %c0_138] : memref<4x32x64xbf16, #tpu.memory_space<vmem>>, vector<1x32x64xbf16>
    %453 = vector.shape_cast %452 : vector<1x32x64xbf16> to vector<32x64xbf16>
    %cst_139 = arith.constant dense<0.000000e+00> : vector<16x64xf32>
    %454 = tpu.matmul %451, %453, %cst_139 {dimension_numbers = #tpu.dot_dimension_numbers<[1], [0], [0], [1], [0, 0, 1, 1], [], []>} : vector<16x32xbf16>, vector<32x64xbf16>, vector<16x64xf32> -> vector<16x64xf32>
    %455 = vector.broadcast %319 : vector<1x64xf32> to vector<16x64xf32>
    %456 = arith.addf %454, %455 : vector<16x64xf32>
    %cst_140 = arith.constant 0.000000e+00 : f32
    %457 = vector.broadcast %cst_140 : f32 to vector<16x64xf32>
    %458 = arith.maximumf %456, %457 : vector<16x64xf32>
    %459 = arith.truncf %458 : vector<16x64xf32> to vector<16x64xbf16>
    %c2_141 = arith.constant 2 : index
    %c0_142 = arith.constant 0 : index
    %c0_143 = arith.constant 0 : index
    %460 = vector.load %arg7[%c2_141, %c0_142, %c0_143] : memref<4x64x32xbf16, #tpu.memory_space<vmem>>, vector<1x64x32xbf16>
    %461 = vector.shape_cast %460 : vector<1x64x32xbf16> to vector<64x32xbf16>
    %cst_144 = arith.constant dense<0.000000e+00> : vector<16x32xf32>
    %462 = tpu.matmul %459, %461, %cst_144 {dimension_numbers = #tpu.dot_dimension_numbers<[1], [0], [0], [1], [0, 0, 1, 1], [], []>} : vector<16x64xbf16>, vector<64x32xbf16>, vector<16x32xf32> -> vector<16x32xf32>
    %463 = vector.broadcast %320 : vector<1x32xf32> to vector<16x32xf32>
    %464 = arith.addf %462, %463 : vector<16x32xf32>
    %465 = arith.addf %428, %464 : vector<16x32xf32>
    %c3 = arith.constant 3 : index
    %c0_145 = arith.constant 0 : index
    %c0_146 = arith.constant 0 : index
    %466 = vector.load %arg8[%c3, %c0_145, %c0_146] : memref<4x8x128xf32, #tpu.memory_space<vmem>>, vector<1x8x128xf32>
    %467 = vector.shape_cast %466 : vector<1x8x128xf32> to vector<8x128xf32>
    %468 = vector.extract_strided_slice %467 {offsets = [0, 0], sizes = [1, 96], strides = [1, 1]} : vector<8x128xf32> to vector<1x96xf32>
    %469 = vector.extract_strided_slice %467 {offsets = [1, 0], sizes = [1, 32], strides = [1, 1]} : vector<8x128xf32> to vector<1x32xf32>
    %470 = vector.extract_strided_slice %467 {offsets = [2, 0], sizes = [1, 64], strides = [1, 1]} : vector<8x128xf32> to vector<1x64xf32>
    %471 = vector.extract_strided_slice %467 {offsets = [3, 0], sizes = [1, 32], strides = [1, 1]} : vector<8x128xf32> to vector<1x32xf32>
    %472 = vector.extract_strided_slice %467 {offsets = [4, 0], sizes = [1, 32], strides = [1, 1]} : vector<8x128xf32> to vector<1x32xf32>
    %473 = vector.extract_strided_slice %467 {offsets = [5, 0], sizes = [1, 32], strides = [1, 1]} : vector<8x128xf32> to vector<1x32xf32>
    %474 = vector.extract_strided_slice %467 {offsets = [6, 0], sizes = [1, 32], strides = [1, 1]} : vector<8x128xf32> to vector<1x32xf32>
    %475 = vector.extract_strided_slice %467 {offsets = [7, 0], sizes = [1, 32], strides = [1, 1]} : vector<8x128xf32> to vector<1x32xf32>
    %cst_147 = arith.constant dense<0.000000e+00> : vector<16xf32>
    %476 = vector.multi_reduction <add>, %465, %cst_147 [1] : vector<16x32xf32> to vector<16xf32>
    %477 = vector.shape_cast %476 : vector<16xf32> to vector<16x1xf32>
    %cst_148 = arith.constant 3.200000e+01 : f32
    %478 = vector.broadcast %cst_148 : f32 to vector<16x1xf32>
    %479 = arith.divf %477, %478 : vector<16x1xf32>
    %480 = vector.broadcast %479 : vector<16x1xf32> to vector<16x32xf32>
    %481 = arith.subf %465, %480 : vector<16x32xf32>
    %482 = arith.mulf %481, %481 : vector<16x32xf32>
    %cst_149 = arith.constant dense<0.000000e+00> : vector<16xf32>
    %483 = vector.multi_reduction <add>, %482, %cst_149 [1] : vector<16x32xf32> to vector<16xf32>
    %484 = vector.shape_cast %483 : vector<16xf32> to vector<16x1xf32>
    %cst_150 = arith.constant 3.200000e+01 : f32
    %485 = vector.broadcast %cst_150 : f32 to vector<16x1xf32>
    %486 = arith.divf %484, %485 : vector<16x1xf32>
    %487 = vector.broadcast %479 : vector<16x1xf32> to vector<16x32xf32>
    %488 = arith.subf %465, %487 : vector<16x32xf32>
    %cst_151 = arith.constant 9.99999974E-6 : f32
    %489 = vector.broadcast %cst_151 : f32 to vector<16x1xf32>
    %490 = arith.addf %486, %489 : vector<16x1xf32>
    %491 = math.rsqrt %490 : vector<16x1xf32>
    %492 = vector.broadcast %491 : vector<16x1xf32> to vector<16x32xf32>
    %493 = arith.mulf %488, %492 : vector<16x32xf32>
    %494 = vector.broadcast %472 : vector<1x32xf32> to vector<16x32xf32>
    %495 = arith.mulf %493, %494 : vector<16x32xf32>
    %496 = vector.broadcast %473 : vector<1x32xf32> to vector<16x32xf32>
    %497 = arith.addf %495, %496 : vector<16x32xf32>
    %498 = arith.truncf %497 : vector<16x32xf32> to vector<16x32xbf16>
    %c3_152 = arith.constant 3 : index
    %c0_153 = arith.constant 0 : index
    %c0_154 = arith.constant 0 : index
    %499 = vector.load %arg4[%c3_152, %c0_153, %c0_154] : memref<4x32x96xbf16, #tpu.memory_space<vmem>>, vector<1x32x96xbf16>
    %500 = vector.shape_cast %499 : vector<1x32x96xbf16> to vector<32x96xbf16>
    %cst_155 = arith.constant dense<0.000000e+00> : vector<16x96xf32>
    %501 = tpu.matmul %498, %500, %cst_155 {dimension_numbers = #tpu.dot_dimension_numbers<[1], [0], [0], [1], [0, 0, 1, 1], [], []>} : vector<16x32xbf16>, vector<32x96xbf16>, vector<16x96xf32> -> vector<16x96xf32>
    %502 = vector.broadcast %468 : vector<1x96xf32> to vector<16x96xf32>
    %503 = arith.addf %501, %502 : vector<16x96xf32>
    %504 = vector.extract_strided_slice %503 {offsets = [0, 0], sizes = [16, 32], strides = [1, 1]} : vector<16x96xf32> to vector<16x32xf32>
    %505 = vector.extract_strided_slice %503 {offsets = [0, 32], sizes = [16, 32], strides = [1, 1]} : vector<16x96xf32> to vector<16x32xf32>
    %506 = tpu.transpose %505, [1, 0] : vector<16x32xf32> -> vector<32x16xf32>
    %507 = vector.extract_strided_slice %503 {offsets = [0, 64], sizes = [16, 32], strides = [1, 1]} : vector<16x96xf32> to vector<16x32xf32>
    %508 = vector.extract_strided_slice %504 {offsets = [0, 0], sizes = [16, 8], strides = [1, 1]} : vector<16x32xf32> to vector<16x8xf32>
    %509 = vector.extract_strided_slice %506 {offsets = [0, 0], sizes = [8, 16], strides = [1, 1]} : vector<32x16xf32> to vector<8x16xf32>
    %cst_156 = arith.constant dense<0.000000e+00> : vector<16x16xf32>
    %510 = tpu.matmul %508, %509, %cst_156 {dimension_numbers = #tpu.dot_dimension_numbers<[1], [0], [0], [1], [0, 0, 1, 1], [], []>} : vector<16x8xf32>, vector<8x16xf32>, vector<16x16xf32> -> vector<16x16xf32>
    %511 = arith.addf %510, %12 : vector<16x16xf32>
    %cst_157 = arith.constant dense<0xFF800000> : vector<16xf32>
    %512 = vector.multi_reduction <maximumf>, %511, %cst_157 [1] : vector<16x16xf32> to vector<16xf32>
    %513 = vector.shape_cast %512 : vector<16xf32> to vector<16x1xf32>
    %514 = vector.broadcast %513 : vector<16x1xf32> to vector<16x16xf32>
    %515 = arith.subf %511, %514 : vector<16x16xf32>
    %516 = math.exp %515 : vector<16x16xf32>
    %cst_158 = arith.constant dense<0.000000e+00> : vector<16xf32>
    %517 = vector.multi_reduction <add>, %516, %cst_158 [1] : vector<16x16xf32> to vector<16xf32>
    %518 = vector.shape_cast %517 : vector<16xf32> to vector<16x1xf32>
    %519 = tpu.reciprocal %518 {approx = true} : vector<16x1xf32> -> vector<16x1xf32>
    %520 = vector.broadcast %519 : vector<16x1xf32> to vector<16x16xf32>
    %521 = arith.mulf %516, %520 : vector<16x16xf32>
    %522 = vector.extract_strided_slice %507 {offsets = [0, 0], sizes = [16, 8], strides = [1, 1]} : vector<16x32xf32> to vector<16x8xf32>
    %cst_159 = arith.constant dense<0.000000e+00> : vector<16x8xf32>
    %523 = tpu.matmul %521, %522, %cst_159 {dimension_numbers = #tpu.dot_dimension_numbers<[1], [0], [0], [1], [0, 0, 1, 1], [], []>} : vector<16x16xf32>, vector<16x8xf32>, vector<16x8xf32> -> vector<16x8xf32>
    %524 = vector.extract_strided_slice %504 {offsets = [0, 8], sizes = [16, 8], strides = [1, 1]} : vector<16x32xf32> to vector<16x8xf32>
    %525 = vector.extract_strided_slice %506 {offsets = [8, 0], sizes = [8, 16], strides = [1, 1]} : vector<32x16xf32> to vector<8x16xf32>
    %cst_160 = arith.constant dense<0.000000e+00> : vector<16x16xf32>
    %526 = tpu.matmul %524, %525, %cst_160 {dimension_numbers = #tpu.dot_dimension_numbers<[1], [0], [0], [1], [0, 0, 1, 1], [], []>} : vector<16x8xf32>, vector<8x16xf32>, vector<16x16xf32> -> vector<16x16xf32>
    %527 = arith.addf %526, %12 : vector<16x16xf32>
    %cst_161 = arith.constant dense<0xFF800000> : vector<16xf32>
    %528 = vector.multi_reduction <maximumf>, %527, %cst_161 [1] : vector<16x16xf32> to vector<16xf32>
    %529 = vector.shape_cast %528 : vector<16xf32> to vector<16x1xf32>
    %530 = vector.broadcast %529 : vector<16x1xf32> to vector<16x16xf32>
    %531 = arith.subf %527, %530 : vector<16x16xf32>
    %532 = math.exp %531 : vector<16x16xf32>
    %cst_162 = arith.constant dense<0.000000e+00> : vector<16xf32>
    %533 = vector.multi_reduction <add>, %532, %cst_162 [1] : vector<16x16xf32> to vector<16xf32>
    %534 = vector.shape_cast %533 : vector<16xf32> to vector<16x1xf32>
    %535 = tpu.reciprocal %534 {approx = true} : vector<16x1xf32> -> vector<16x1xf32>
    %536 = vector.broadcast %535 : vector<16x1xf32> to vector<16x16xf32>
    %537 = arith.mulf %532, %536 : vector<16x16xf32>
    %538 = vector.extract_strided_slice %507 {offsets = [0, 8], sizes = [16, 8], strides = [1, 1]} : vector<16x32xf32> to vector<16x8xf32>
    %cst_163 = arith.constant dense<0.000000e+00> : vector<16x8xf32>
    %539 = tpu.matmul %537, %538, %cst_163 {dimension_numbers = #tpu.dot_dimension_numbers<[1], [0], [0], [1], [0, 0, 1, 1], [], []>} : vector<16x16xf32>, vector<16x8xf32>, vector<16x8xf32> -> vector<16x8xf32>
    %540 = vector.extract_strided_slice %504 {offsets = [0, 16], sizes = [16, 8], strides = [1, 1]} : vector<16x32xf32> to vector<16x8xf32>
    %541 = vector.extract_strided_slice %506 {offsets = [16, 0], sizes = [8, 16], strides = [1, 1]} : vector<32x16xf32> to vector<8x16xf32>
    %cst_164 = arith.constant dense<0.000000e+00> : vector<16x16xf32>
    %542 = tpu.matmul %540, %541, %cst_164 {dimension_numbers = #tpu.dot_dimension_numbers<[1], [0], [0], [1], [0, 0, 1, 1], [], []>} : vector<16x8xf32>, vector<8x16xf32>, vector<16x16xf32> -> vector<16x16xf32>
    %543 = arith.addf %542, %12 : vector<16x16xf32>
    %cst_165 = arith.constant dense<0xFF800000> : vector<16xf32>
    %544 = vector.multi_reduction <maximumf>, %543, %cst_165 [1] : vector<16x16xf32> to vector<16xf32>
    %545 = vector.shape_cast %544 : vector<16xf32> to vector<16x1xf32>
    %546 = vector.broadcast %545 : vector<16x1xf32> to vector<16x16xf32>
    %547 = arith.subf %543, %546 : vector<16x16xf32>
    %548 = math.exp %547 : vector<16x16xf32>
    %cst_166 = arith.constant dense<0.000000e+00> : vector<16xf32>
    %549 = vector.multi_reduction <add>, %548, %cst_166 [1] : vector<16x16xf32> to vector<16xf32>
    %550 = vector.shape_cast %549 : vector<16xf32> to vector<16x1xf32>
    %551 = tpu.reciprocal %550 {approx = true} : vector<16x1xf32> -> vector<16x1xf32>
    %552 = vector.broadcast %551 : vector<16x1xf32> to vector<16x16xf32>
    %553 = arith.mulf %548, %552 : vector<16x16xf32>
    %554 = vector.extract_strided_slice %507 {offsets = [0, 16], sizes = [16, 8], strides = [1, 1]} : vector<16x32xf32> to vector<16x8xf32>
    %cst_167 = arith.constant dense<0.000000e+00> : vector<16x8xf32>
    %555 = tpu.matmul %553, %554, %cst_167 {dimension_numbers = #tpu.dot_dimension_numbers<[1], [0], [0], [1], [0, 0, 1, 1], [], []>} : vector<16x16xf32>, vector<16x8xf32>, vector<16x8xf32> -> vector<16x8xf32>
    %556 = vector.extract_strided_slice %504 {offsets = [0, 24], sizes = [16, 8], strides = [1, 1]} : vector<16x32xf32> to vector<16x8xf32>
    %557 = vector.extract_strided_slice %506 {offsets = [24, 0], sizes = [8, 16], strides = [1, 1]} : vector<32x16xf32> to vector<8x16xf32>
    %cst_168 = arith.constant dense<0.000000e+00> : vector<16x16xf32>
    %558 = tpu.matmul %556, %557, %cst_168 {dimension_numbers = #tpu.dot_dimension_numbers<[1], [0], [0], [1], [0, 0, 1, 1], [], []>} : vector<16x8xf32>, vector<8x16xf32>, vector<16x16xf32> -> vector<16x16xf32>
    %559 = arith.addf %558, %12 : vector<16x16xf32>
    %cst_169 = arith.constant dense<0xFF800000> : vector<16xf32>
    %560 = vector.multi_reduction <maximumf>, %559, %cst_169 [1] : vector<16x16xf32> to vector<16xf32>
    %561 = vector.shape_cast %560 : vector<16xf32> to vector<16x1xf32>
    %562 = vector.broadcast %561 : vector<16x1xf32> to vector<16x16xf32>
    %563 = arith.subf %559, %562 : vector<16x16xf32>
    %564 = math.exp %563 : vector<16x16xf32>
    %cst_170 = arith.constant dense<0.000000e+00> : vector<16xf32>
    %565 = vector.multi_reduction <add>, %564, %cst_170 [1] : vector<16x16xf32> to vector<16xf32>
    %566 = vector.shape_cast %565 : vector<16xf32> to vector<16x1xf32>
    %567 = tpu.reciprocal %566 {approx = true} : vector<16x1xf32> -> vector<16x1xf32>
    %568 = vector.broadcast %567 : vector<16x1xf32> to vector<16x16xf32>
    %569 = arith.mulf %564, %568 : vector<16x16xf32>
    %570 = vector.extract_strided_slice %507 {offsets = [0, 24], sizes = [16, 8], strides = [1, 1]} : vector<16x32xf32> to vector<16x8xf32>
    %cst_171 = arith.constant dense<0.000000e+00> : vector<16x8xf32>
    %571 = tpu.matmul %569, %570, %cst_171 {dimension_numbers = #tpu.dot_dimension_numbers<[1], [0], [0], [1], [0, 0, 1, 1], [], []>} : vector<16x16xf32>, vector<16x8xf32>, vector<16x8xf32> -> vector<16x8xf32>
    %572 = tpu.concatenate %523, %539, %555, %571 in 1 : vector<16x8xf32>, vector<16x8xf32>, vector<16x8xf32>, vector<16x8xf32> -> vector<16x32xf32>
    %573 = arith.truncf %572 : vector<16x32xf32> to vector<16x32xbf16>
    %c3_172 = arith.constant 3 : index
    %c0_173 = arith.constant 0 : index
    %c0_174 = arith.constant 0 : index
    %574 = vector.load %arg5[%c3_172, %c0_173, %c0_174] : memref<4x32x32xbf16, #tpu.memory_space<vmem>>, vector<1x32x32xbf16>
    %575 = vector.shape_cast %574 : vector<1x32x32xbf16> to vector<32x32xbf16>
    %cst_175 = arith.constant dense<0.000000e+00> : vector<16x32xf32>
    %576 = tpu.matmul %573, %575, %cst_175 {dimension_numbers = #tpu.dot_dimension_numbers<[1], [0], [0], [1], [0, 0, 1, 1], [], []>} : vector<16x32xbf16>, vector<32x32xbf16>, vector<16x32xf32> -> vector<16x32xf32>
    %577 = vector.broadcast %469 : vector<1x32xf32> to vector<16x32xf32>
    %578 = arith.addf %576, %577 : vector<16x32xf32>
    %579 = arith.addf %465, %578 : vector<16x32xf32>
    %cst_176 = arith.constant dense<0.000000e+00> : vector<16xf32>
    %580 = vector.multi_reduction <add>, %579, %cst_176 [1] : vector<16x32xf32> to vector<16xf32>
    %581 = vector.shape_cast %580 : vector<16xf32> to vector<16x1xf32>
    %cst_177 = arith.constant 3.200000e+01 : f32
    %582 = vector.broadcast %cst_177 : f32 to vector<16x1xf32>
    %583 = arith.divf %581, %582 : vector<16x1xf32>
    %584 = vector.broadcast %583 : vector<16x1xf32> to vector<16x32xf32>
    %585 = arith.subf %579, %584 : vector<16x32xf32>
    %586 = arith.mulf %585, %585 : vector<16x32xf32>
    %cst_178 = arith.constant dense<0.000000e+00> : vector<16xf32>
    %587 = vector.multi_reduction <add>, %586, %cst_178 [1] : vector<16x32xf32> to vector<16xf32>
    %588 = vector.shape_cast %587 : vector<16xf32> to vector<16x1xf32>
    %cst_179 = arith.constant 3.200000e+01 : f32
    %589 = vector.broadcast %cst_179 : f32 to vector<16x1xf32>
    %590 = arith.divf %588, %589 : vector<16x1xf32>
    %591 = vector.broadcast %583 : vector<16x1xf32> to vector<16x32xf32>
    %592 = arith.subf %579, %591 : vector<16x32xf32>
    %cst_180 = arith.constant 9.99999974E-6 : f32
    %593 = vector.broadcast %cst_180 : f32 to vector<16x1xf32>
    %594 = arith.addf %590, %593 : vector<16x1xf32>
    %595 = math.rsqrt %594 : vector<16x1xf32>
    %596 = vector.broadcast %595 : vector<16x1xf32> to vector<16x32xf32>
    %597 = arith.mulf %592, %596 : vector<16x32xf32>
    %598 = vector.broadcast %474 : vector<1x32xf32> to vector<16x32xf32>
    %599 = arith.mulf %597, %598 : vector<16x32xf32>
    %600 = vector.broadcast %475 : vector<1x32xf32> to vector<16x32xf32>
    %601 = arith.addf %599, %600 : vector<16x32xf32>
    %602 = arith.truncf %601 : vector<16x32xf32> to vector<16x32xbf16>
    %c3_181 = arith.constant 3 : index
    %c0_182 = arith.constant 0 : index
    %c0_183 = arith.constant 0 : index
    %603 = vector.load %arg6[%c3_181, %c0_182, %c0_183] : memref<4x32x64xbf16, #tpu.memory_space<vmem>>, vector<1x32x64xbf16>
    %604 = vector.shape_cast %603 : vector<1x32x64xbf16> to vector<32x64xbf16>
    %cst_184 = arith.constant dense<0.000000e+00> : vector<16x64xf32>
    %605 = tpu.matmul %602, %604, %cst_184 {dimension_numbers = #tpu.dot_dimension_numbers<[1], [0], [0], [1], [0, 0, 1, 1], [], []>} : vector<16x32xbf16>, vector<32x64xbf16>, vector<16x64xf32> -> vector<16x64xf32>
    %606 = vector.broadcast %470 : vector<1x64xf32> to vector<16x64xf32>
    %607 = arith.addf %605, %606 : vector<16x64xf32>
    %cst_185 = arith.constant 0.000000e+00 : f32
    %608 = vector.broadcast %cst_185 : f32 to vector<16x64xf32>
    %609 = arith.maximumf %607, %608 : vector<16x64xf32>
    %610 = arith.truncf %609 : vector<16x64xf32> to vector<16x64xbf16>
    %c3_186 = arith.constant 3 : index
    %c0_187 = arith.constant 0 : index
    %c0_188 = arith.constant 0 : index
    %611 = vector.load %arg7[%c3_186, %c0_187, %c0_188] : memref<4x64x32xbf16, #tpu.memory_space<vmem>>, vector<1x64x32xbf16>
    %612 = vector.shape_cast %611 : vector<1x64x32xbf16> to vector<64x32xbf16>
    %cst_189 = arith.constant dense<0.000000e+00> : vector<16x32xf32>
    %613 = tpu.matmul %610, %612, %cst_189 {dimension_numbers = #tpu.dot_dimension_numbers<[1], [0], [0], [1], [0, 0, 1, 1], [], []>} : vector<16x64xbf16>, vector<64x32xbf16>, vector<16x32xf32> -> vector<16x32xf32>
    %614 = vector.broadcast %471 : vector<1x32xf32> to vector<16x32xf32>
    %615 = arith.addf %613, %614 : vector<16x32xf32>
    %616 = arith.addf %579, %615 : vector<16x32xf32>
    %617 = arith.truncf %616 : vector<16x32xf32> to vector<16x32xbf16>
    %c0_190 = arith.constant 0 : index
    %c0_191 = arith.constant 0 : index
    %618 = vector.load %arg9[%c0_190, %c0_191] : memref<32x128xbf16, #tpu.memory_space<vmem>>, vector<32x128xbf16>
    %cst_192 = arith.constant dense<0.000000e+00> : vector<16x128xf32>
    %619 = tpu.matmul %617, %618, %cst_192 {dimension_numbers = #tpu.dot_dimension_numbers<[1], [0], [0], [1], [0, 0, 1, 1], [], []>} : vector<16x32xbf16>, vector<32x128xbf16>, vector<16x128xf32> -> vector<16x128xf32>
    %c0_193 = arith.constant 0 : index
    %c0_194 = arith.constant 0 : index
    %620 = vector.load %arg10[%c0_193, %c0_194] : memref<1x128xf32, #tpu.memory_space<vmem>>, vector<1x128xf32>
    %621 = vector.broadcast %620 : vector<1x128xf32> to vector<16x128xf32>
    %622 = arith.addf %619, %621 : vector<16x128xf32>
    %c0_195 = arith.constant 0 : index
    %c0_196 = arith.constant 0 : index
    %623 = vector.load %arg11[%c0_195, %c0_196] : memref<16x128xf32, #tpu.memory_space<vmem>>, vector<16x128xf32>
    tpu.vector_store %arg11[%c0_195, %c0_196], %622 {strides = array<i32>} : memref<16x128xf32, #tpu.memory_space<vmem>>, vector<16x128xf32>,
    return
  }
}

</mosaic_0001>

<llo_original>
// kernel: eq.8
$region0: #{eq.8}
  %s0 = inlined_call_operand.vmem [shape: s32[8,2], index: 0, kind: input, shape index: {}]
  %s1 = inlined_call_operand.vmem [shape: s32[16], index: 1, kind: output, shape index: {}]
  $region1: #{eq.8} parent=0
    #allocation0 [shape = 'u8[4096]{0}', space=vmem, size = 0x1000, scoped, tag = 'scoped mem for output reshape']
    %v2 = vld [vmem:[%s0] sm:$0x1]
    %vm3 = vcmask 15360
    %4 = vst.msk [vmem:[#allocation0] sm:$0x1] %vm3, %v2
    %s5 = scalar_lea.vmem %s0, 7
    %v6 = vld [vmem:[%s5] sm:$0x1]
    %7 = vrot.lane.b32.xlu0 %v6, 14
    %v8 = vpop.permute.xlu0 %7
    %vm9 = vcmask 130160
    %10 = vst.msk [vmem:[#allocation0] sm:$0x1] %vm9, %v8
    %s11 = scalar_lea.vmem %s0, 6
    %v12 = vld [vmem:[%s11] sm:$0x1]
    %13 = vrot.lane.b32.xlu0 %v12, 12
    %v14 = vpop.permute.xlu0 %13
    %vm15 = vcmask 113760
    %16 = vst.msk [vmem:[#allocation0] sm:$0x1] %vm15, %v14
    %s17 = scalar_lea.vmem %s0, 5
    %v18 = vld [vmem:[%s17] sm:$0x1]
    %19 = vrot.lane.b32.xlu0 %v18, 10
    %v20 = vpop.permute.xlu0 %19
    %vm21 = vcmask 97360
    %22 = vst.msk [vmem:[#allocation0] sm:$0x1] %vm21, %v20
    %s23 = scalar_lea.vmem %s0, 4
    %v24 = vld [vmem:[%s23] sm:$0x1]
    %25 = vrot.lane.b32.xlu0 %v24, 8
    %v26 = vpop.permute.xlu0 %25
    %vm27 = vcmask 80960
    %28 = vst.msk [vmem:[#allocation0] sm:$0x1] %vm27, %v26
    %s29 = scalar_lea.vmem %s0, 3
    %v30 = vld [vmem:[%s29] sm:$0x1]
    %31 = vrot.lane.b32.xlu0 %v30, 6
    %v32 = vpop.permute.xlu0 %31
    %vm33 = vcmask 64560
    %34 = vst.msk [vmem:[#allocation0] sm:$0x1] %vm33, %v32
    %s35 = scalar_lea.vmem %s0, 2
    %v36 = vld [vmem:[%s35] sm:$0x1]
    %37 = vrot.lane.b32.xlu0 %v36, 4
    %v38 = vpop.permute.xlu0 %37
    %vm39 = vcmask 48160
    %40 = vst.msk [vmem:[#allocation0] sm:$0x1] %vm39, %v38
    %s41 = scalar_lea.vmem %s0, 1
    %v42 = vld [vmem:[%s41] sm:$0x1]
    %43 = vrot.lane.b32.xlu0 %v42, 2
    %v44 = vpop.permute.xlu0 %43
    %vm45 = vcmask 31760
    %46 = vst.msk [vmem:[#allocation0] sm:$0x1] %vm45, %v44
    %s48 = sshllo.u32 0, 1
    %v50 = vld [vmem:[#allocation0] sm:%s48]
    %s51 = sshllo.u32 0, 1
    %52 = vst [vmem:[%s1] sm:%s51] %v50

// kernel: transformer_forward.1
$region0: #{transformer_forward.1}
  #allocation0 [shape = 'u32[]', space=smem, size = 0x4, offset = 0x4, fixed_abs, tag = 'smem constant byte address 0x4 - core index']
  #allocation1 [shape = 'u32[144,128]{1,0:T(1,128)}', space=vmem, size = 0x12000, scoped, tag = 'internal scratch']
  %s0 = inlined_call_operand.vmem [shape: s32[16,1], index: 0, kind: input, shape index: {}]
  %s1 = inlined_call_operand.vmem [shape: f32[16,16], index: 1, kind: input, shape index: {}]
  %s2 = inlined_call_operand.vmem [shape: bf16[50,32], index: 2, kind: input, shape index: {}]
  %s3 = inlined_call_operand.vmem [shape: f32[16,32], index: 3, kind: input, shape index: {}]
  %s4 = inlined_call_operand.vmem [shape: bf16[4,32,96], index: 4, kind: input, shape index: {}]
  %s5 = inlined_call_operand.vmem [shape: bf16[4,32,32], index: 5, kind: input, shape index: {}]
  %s6 = inlined_call_operand.vmem [shape: bf16[4,32,64], index: 6, kind: input, shape index: {}]
  %s7 = inlined_call_operand.vmem [shape: bf16[4,64,32], index: 7, kind: input, shape index: {}]
  %s8 = inlined_call_operand.vmem [shape: f32[4,8,128], index: 8, kind: input, shape index: {}]
  %s9 = inlined_call_operand.vmem [shape: bf16[32,128], index: 9, kind: input, shape index: {}]
  %s10 = inlined_call_operand.vmem [shape: f32[1,128], index: 10, kind: input, shape index: {}]
  %s11 = inlined_call_operand.hbm [shape: f32[16,128], index: 11, kind: output, shape index: {}]
  %s12 = sld [smem:[#allocation0]]
  $region54: #{transformer_forward.1} parent=0
    _
  %s14 = ssub.s32 1, %s12
  %s15 = scalar_select 0, %s14, %s12
  $region1: #{transformer_forward.1} parent=0
    #allocation2 [shape = 'u8[8192]{0}', space=vmem, size = 0x2000, scoped, tag = 'output window, operand 0, single buffered']
    #allocation3 [shape = 's32[1]{0}', space=sflag, size = 0x4, scoped, tag = 'scoped memory for transformer_forward.1']
    %16 = vsyncpa [#allocation3], 0
    // Predicated region
    $region2: #{transformer_forward.1} parent=1 // pred_check
      _
    $region3: #{transformer_forward.1} parent=1 // pred_check_branch
      %18 = sbr.rel (0) target = $region5
    $region4: #{transformer_forward.1} parent=1 // pred_region
      _
    $region5: #{transformer_forward.1} parent=1 // pred_fallthru
      _
    // Predicated region
    $region6: #{transformer_forward.1} parent=1 // pred_check
      _
    $region7: #{transformer_forward.1} parent=1 // pred_check_branch
      %20 = sbr.rel (0) target = $region9
    $region8: #{transformer_forward.1} parent=1 // pred_region
      _
    $region9: #{transformer_forward.1} parent=1 // pred_fallthru
      _
    // Predicated region
    $region10: #{transformer_forward.1} parent=1 // pred_check
      _
    $region11: #{transformer_forward.1} parent=1 // pred_check_branch
      %22 = sbr.rel (0) target = $region13
    $region12: #{transformer_forward.1} parent=1 // pred_region
      _
    $region13: #{transformer_forward.1} parent=1 // pred_fallthru
      _
    // Predicated region
    $region14: #{transformer_forward.1} parent=1 // pred_check
      _
    $region15: #{transformer_forward.1} parent=1 // pred_check_branch
      %24 = sbr.rel (0) target = $region17
    $region16: #{transformer_forward.1} parent=1 // pred_region
      _
    $region17: #{transformer_forward.1} parent=1 // pred_fallthru
      _
    // Predicated region
    $region18: #{transformer_forward.1} parent=1 // pred_check
      _
    $region19: #{transformer_forward.1} parent=1 // pred_check_branch
      %26 = sbr.rel (0) target = $region21
    $region20: #{transformer_forward.1} parent=1 // pred_region
      _
    $region21: #{transformer_forward.1} parent=1 // pred_fallthru
      _
    // Predicated region
    $region22: #{transformer_forward.1} parent=1 // pred_check
      _
    $region23: #{transformer_forward.1} parent=1 // pred_check_branch
      %28 = sbr.rel (0) target = $region25
    $region24: #{transformer_forward.1} parent=1 // pred_region
      _
    $region25: #{transformer_forward.1} parent=1 // pred_fallthru
      _
    // Predicated region
    $region26: #{transformer_forward.1} parent=1 // pred_check
      _
    $region27: #{transformer_forward.1} parent=1 // pred_check_branch
      %30 = sbr.rel (0) target = $region29
    $region28: #{transformer_forward.1} parent=1 // pred_region
      _
    $region29: #{transformer_forward.1} parent=1 // pred_fallthru
      _
    // Predicated region
    $region30: #{transformer_forward.1} parent=1 // pred_check
      _
    $region31: #{transformer_forward.1} parent=1 // pred_check_branch
      %32 = sbr.rel (0) target = $region33
    $region32: #{transformer_forward.1} parent=1 // pred_region
      _
    $region33: #{transformer_forward.1} parent=1 // pred_fallthru
      _
    // Predicated region
    $region34: #{transformer_forward.1} parent=1 // pred_check
      _
    $region35: #{transformer_forward.1} parent=1 // pred_check_branch
      %34 = sbr.rel (0) target = $region37
    $region36: #{transformer_forward.1} parent=1 // pred_region
      _
    $region37: #{transformer_forward.1} parent=1 // pred_fallthru
      _
    // Predicated region
    $region38: #{transformer_forward.1} parent=1 // pred_check
      _
    $region39: #{transformer_forward.1} parent=1 // pred_check_branch
      %36 = sbr.rel (0) target = $region41
    $region40: #{transformer_forward.1} parent=1 // pred_region
      _
    $region41: #{transformer_forward.1} parent=1 // pred_fallthru
      _
    // Predicated region
    $region42: #{transformer_forward.1} parent=1 // pred_check
      _
    $region43: #{transformer_forward.1} parent=1 // pred_check_branch
      %38 = sbr.rel (0) target = $region45
    $region44: #{transformer_forward.1} parent=1 // pred_region
      _
    $region45: #{transformer_forward.1} parent=1 // pred_fallthru
      _
    %v40 = vld [vmem:[%s0] sm:$0xff]
    %v41 = vld [vmem:[%s0 + $0x8] sm:$0xff]
    %v42 = vlaneseq
    %v43 = vand.u32 %v42, 127
    %44 = vset.pattern.permute.xlu0 0
    %45 = vperm.xlu0 %44, %v40
    %v46 = vpop.permute.xlu0 %45
    %47 = vset.pattern.permute.xlu0 0
    %48 = vperm.xlu0 %47, %v41
    %v49 = vpop.permute.xlu0 %48
    %vm50 = vcmp.eq.s32.totalorder %v43, %v46
    %vm51 = vcmp.eq.s32.totalorder %v43, %v49
    %v52 = vsel %vm50, 1.0, 0.0
    %v53 = vsel %vm51, 1.0, 0.0
    %v54 = vpack.c.bf16 %v53, %v52
    %v55 = vld [vmem:[%s2] sm:$0xf]
    %v56 = vld [vmem:[%s2 + $0x4] sm:$0xf]
    %v57 = vld [vmem:[%s2 + $0x8] sm:$0xf]
    %v58 = vld [vmem:[%s2 + $0xc] sm:$0xf]
    %v59 = vld [vmem:[%s2 + $0x10] sm:$0xf]
    %v60 = vld [vmem:[%s2 + $0x14] sm:$0xf]
    %v61 = vld [vmem:[%s2 + $0x18] sm:$0x1]
    %v62 = vld [vmem:[%s3] sm:$0xff]
    %v63 = vld [vmem:[%s3 + $0x8] sm:$0xff]
    %v71 = vunpack.c.l.b16 %v55
    %v72 = vunpack.c.l.b16 %v56
    %v73 = vunpack.c.l.b16 %v57
    %v74 = vunpack.c.l.b16 %v58
    %v75 = vunpack.c.l.b16 %v59
    %v76 = vunpack.c.l.b16 %v60
    %v77 = vunpack.c.l.b16 %v61
    %v78 = vpack.c.b16 %v72, %v71
    %v79 = vpack.c.b16 %v74, %v73
    %v80 = vpack.c.b16 %v76, %v75
    %v81 = vpack.c.b16 %v77, %v77
    %vm85 = vcmask 408576
    %v87 = vsel %vm85, %v54, 0
    %vm89 = vcmask 1040384
    %v91 = vsel %vm89, %v81, 0
    %93 = vmatprep.subr.bf16.mxu0 0
    %94 = vmatpush1.bf16.msra.mxu0 %v78
    %95 = vmatprep.subr.bf16.mxu0 0
    %96 = vmatpush1.bf16.msra.mxu0 %v79
    %97 = vmatprep.subr.bf16.mxu0 0
    %98 = vmatpush1.bf16.msra.mxu0 %v80
    %99 = vmatprep.subr.bf16.mxu0 0
    %100 = vmatpush1.bf16.msra.mxu0 %v91
    %101 = vmatprep.subr.bf16.mxu0 0
    %102 = vmatpush1.bf16.msra.mxu0 0
    %103 = vmatprep.subr.bf16.mxu0 0
    %104 = vmatpush1.bf16.msra.mxu0 0
    %105 = vmatprep.subr.bf16.mxu0 0
    %106 = vmatpush1.bf16.msra.mxu0 0
    %107 = vmatprep.subr.bf16.mxu0 0
    %108 = vmatpush1.bf16.msra.mxu0 0
    %109 = vmatprep.subr.bf16.mxu0 0
    %110 = vmatpush1.bf16.msra.mxu0 0
    %111 = vmatprep.subr.bf16.mxu0 0
    %112 = vmatpush1.bf16.msra.mxu0 0
    %113 = vmatprep.subr.bf16.mxu0 0
    %114 = vmatpush1.bf16.msra.mxu0 0
    %115 = vmatprep.subr.bf16.mxu0 0
    %116 = vmatpush1.bf16.msra.mxu0 0
    %117 = vmatprep.subr.bf16.mxu0 0
    %118 = vmatpush1.bf16.msra.mxu0 0
    %119 = vmatprep.subr.bf16.mxu0 0
    %120 = vmatpush1.bf16.msra.mxu0 0
    %121 = vmatprep.subr.bf16.mxu0 0
    %122 = vmatpush1.bf16.msra.mxu0 0
    %123 = vmatprep.subr.bf16.mxu0 0
    %124 = vmatpush1.bf16.msra.mxu0 0
    %125 = vmatprep.mubr.bf16.mxu0 0
    %126 = vmatmul.mubr.bf16.gmra.mrb[0].mxu0 %v87
    %v127 = vpop.f32.mrb[0].mxu0
    %v128 = vadd.f32 %v62, %v127
    %v129 = vpop.f32.mrb[0].mxu0
    %v130 = vpop.f32.mrb[0].mxu0
    %v131 = vadd.f32 %v63, %v130
    %v132 = vpop.f32.mrb[0].mxu0
    %133 = vdwg.mxu0
    %v134 = vld [vmem:[%s1] sm:$0xff]
    %v135 = vld [vmem:[%s1 + $0x8] sm:$0xff]
    %v136 = vld [vmem:[%s8] sm:$0xff]
    %vm137 = vcmask 261120
    %v138 = vsel %vm137, %v128, 0.0
    %139 = vadd.xlane.f32.xlu0 %v138
    %v140 = vpop.xlane.xlu0 %139
    %v141 = vsel %vm137, %v131, 0.0
    %142 = vadd.xlane.f32.xlu0 %v141
    %v143 = vpop.xlane.xlu0 %142
    %v144 = vrcp.pop 32.0
    %v145 = vmul.f32 %v140, %v144
    %v146 = vmul.f32 %v143, %v144
    %v147 = vsub.f32 %v128, %v145
    %v148 = vsub.f32 %v131, %v146
    %v149 = vmul.f32 %v147, %v147
    %v150 = vmul.f32 %v148, %v148
    %v151 = vsel %vm137, %v149, 0.0
    %152 = vadd.xlane.f32.xlu0 %v151
    %v153 = vpop.xlane.xlu0 %152
    %v154 = vsel %vm137, %v150, 0.0
    %155 = vadd.xlane.f32.xlu0 %v154
    %v156 = vpop.xlane.xlu0 %155
    %v157 = vmul.f32 %v153, %v144
    %v158 = vmul.f32 %v156, %v144
    %v159 = vadd.f32 %v157, 1e-05
    %v160 = vadd.f32 %v158, 1e-05
    %v161 = vrsqrt.pop %v159
    %v162 = vrsqrt.pop %v160
    %v163 = vmul.f32 %v147, %v161
    %v164 = vmul.f32 %v148, %v162
    %v165 = vlaneseq
    %v166 = vshrl.u32 %v165, 7
    %v167 = vsub.s32 4, %v166
    %v168 = vrot.slane %v136, %v167
    %v169 = vmul.f32 %v163, %v168
    %v170 = vmul.f32 %v164, %v168
    %v171 = vlaneseq
    %v172 = vshrl.u32 %v171, 7
    %v173 = vsub.s32 5, %v172
    %v174 = vrot.slane %v136, %v173
    %v175 = vadd.f32 %v169, %v174
    %v176 = vadd.f32 %v170, %v174
    %v177 = vpack.c.bf16 %v176, %v175
    %v178 = vld [vmem:[%s4] sm:$0xf]
    %v179 = vld [vmem:[%s4 + $0x4] sm:$0xf]
    %v180 = vld [vmem:[%s4 + $0x8] sm:$0xf]
    %v181 = vld [vmem:[%s4 + $0xc] sm:$0xf]
    %v182 = vlaneseq
    %v183 = vshrl.u32 %v182, 7
    %v184 = vsub.s32 0, %v183
    %v185 = vrot.slane %v136, %v184
    %v190 = vunpack.c.l.b16 %v178
    %v191 = vunpack.c.l.b16 %v179
    %v192 = vunpack.c.l.b16 %v180
    %v193 = vunpack.c.l.b16 %v181
    %v194 = vpack.c.b16 %v191, %v190
    %v195 = vpack.c.b16 %v193, %v192
    %v199 = vsel %vm137, %v177, 0
    %201 = vmatprep.subr.bf16.mxu0 0
    %202 = vmatpush1.bf16.msra.mxu0 %v194
    %203 = vmatprep.subr.bf16.mxu0 0
    %204 = vmatpush1.bf16.msra.mxu0 %v195
    %205 = vmatprep.subr.bf16.mxu0 0
    %206 = vmatpush1.bf16.msra.mxu0 0
    %207 = vmatprep.subr.bf16.mxu0 0
    %208 = vmatpush1.bf16.msra.mxu0 0
    %209 = vmatprep.subr.bf16.mxu0 0
    %210 = vmatpush1.bf16.msra.mxu0 0
    %211 = vmatprep.subr.bf16.mxu0 0
    %212 = vmatpush1.bf16.msra.mxu0 0
    %213 = vmatprep.subr.bf16.mxu0 0
    %214 = vmatpush1.bf16.msra.mxu0 0
    %215 = vmatprep.subr.bf16.mxu0 0
    %216 = vmatpush1.bf16.msra.mxu0 0
    %217 = vmatprep.subr.bf16.mxu0 0
    %218 = vmatpush1.bf16.msra.mxu0 0
    %219 = vmatprep.subr.bf16.mxu0 0
    %220 = vmatpush1.bf16.msra.mxu0 0
    %221 = vmatprep.subr.bf16.mxu0 0
    %222 = vmatpush1.bf16.msra.mxu0 0
    %223 = vmatprep.subr.bf16.mxu0 0
    %224 = vmatpush1.bf16.msra.mxu0 0
    %225 = vmatprep.subr.bf16.mxu0 0
    %226 = vmatpush1.bf16.msra.mxu0 0
    %227 = vmatprep.subr.bf16.mxu0 0
    %228 = vmatpush1.bf16.msra.mxu0 0
    %229 = vmatprep.subr.bf16.mxu0 0
    %230 = vmatpush1.bf16.msra.mxu0 0
    %231 = vmatprep.subr.bf16.mxu0 0
    %232 = vmatpush1.bf16.msra.mxu0 0
    %233 = vmatprep.mubr.bf16.mxu0 0
    %234 = vmatmul.mubr.bf16.gmra.mrb[0].mxu0 %v199
    %v235 = vpop.f32.mrb[0].mxu0
    %v236 = vadd.f32 %v185, %v235
    %v237 = vpop.f32.mrb[0].mxu0
    %v238 = vpop.f32.mrb[0].mxu0
    %v239 = vadd.f32 %v185, %v238
    %v240 = vpop.f32.mrb[0].mxu0
    %241 = vdwg.mxu0
    %244 = vrot.lane.b32.xlu0 %v236, 96
    %v245 = vpop.permute.xlu0 %244
    %246 = vrot.lane.b32.xlu0 %v239, 96
    %v247 = vpop.permute.xlu0 %246
    %vm248 = vcmask 64512
    %v249 = vsel %vm248, %v236, 0
    %v251 = vsel %vm248, %v239, 0
    %v253 = vsel %vm248, %v245, 0
    %v255 = vsel %vm248, %v247, 0
    %257 = vmatprep.subr.mxu0 0.0
    %258 = vmatpush1.xpose.msra.mxu0 %v253
    %259 = vmatprep.subr.mxu0 0.0
    %260 = vmatpush1.xpose.msra.mxu0 %v255
    %261 = vmatprep.subr.mxu0 0.0
    %262 = vmatpush1.xpose.msra.mxu0 0.0
    %263 = vmatprep.subr.mxu0 0.0
    %264 = vmatpush1.xpose.msra.mxu0 0.0
    %265 = vmatprep.subr.mxu0 0.0
    %266 = vmatpush1.xpose.msra.mxu0 0.0
    %267 = vmatprep.subr.mxu0 0.0
    %268 = vmatpush1.xpose.msra.mxu0 0.0
    %269 = vmatprep.subr.mxu0 0.0
    %270 = vmatpush1.xpose.msra.mxu0 0.0
    %271 = vmatprep.subr.mxu0 0.0
    %272 = vmatpush1.xpose.msra.mxu0 0.0
    %273 = vmatprep.subr.mxu0 0.0
    %274 = vmatpush1.xpose.msra.mxu0 0.0
    %275 = vmatprep.subr.mxu0 0.0
    %276 = vmatpush1.xpose.msra.mxu0 0.0
    %277 = vmatprep.subr.mxu0 0.0
    %278 = vmatpush1.xpose.msra.mxu0 0.0
    %279 = vmatprep.subr.mxu0 0.0
    %280 = vmatpush1.xpose.msra.mxu0 0.0
    %281 = vmatprep.subr.mxu0 0.0
    %282 = vmatpush1.xpose.msra.mxu0 0.0
    %283 = vmatprep.subr.mxu0 0.0
    %284 = vmatpush1.xpose.msra.mxu0 0.0
    %285 = vmatprep.subr.mxu0 0.0
    %286 = vmatpush1.xpose.msra.mxu0 0.0
    %287 = vmatprep.subr.mxu0 0.0
    %288 = vmatpush1.xpose.msra.mxu0 0.0
    %289 = vmatprep.subr.mxu0 0.0
    %290 = vmatpush1.xpose.msra.mxu0 0.0
    %291 = vmatprep.subr.mxu0 0.0
    %292 = vmatpush1.xpose.msra.mxu0 0.0
    %293 = vmatprep.subr.mxu0 0.0
    %294 = vmatpush1.xpose.msra.mxu0 0.0
    %295 = vmatprep.subr.mxu0 0.0
    %296 = vmatpush1.xpose.msra.mxu0 0.0
    %297 = vmatprep.subr.mxu0 0.0
    %298 = vmatpush1.xpose.msra.mxu0 0.0
    %299 = vmatprep.subr.mxu0 0.0
    %300 = vmatpush1.xpose.msra.mxu0 0.0
    %301 = vmatprep.subr.mxu0 0.0
    %302 = vmatpush1.xpose.msra.mxu0 0.0
    %303 = vmatprep.subr.mxu0 0.0
    %304 = vmatpush1.xpose.msra.mxu0 0.0
    %305 = vmatprep.subr.mxu0 0.0
    %306 = vmatpush1.xpose.msra.mxu0 0.0
    %307 = vmatprep.subr.mxu0 0.0
    %308 = vmatpush1.xpose.msra.mxu0 0.0
    %309 = vmatprep.subr.mxu0 0.0
    %310 = vmatpush1.xpose.msra.mxu0 0.0
    %311 = vmatprep.subr.mxu0 0.0
    %312 = vmatpush1.xpose.msra.mxu0 0.0
    %313 = vmatprep.subr.mxu0 0.0
    %314 = vmatpush1.xpose.msra.mxu0 0.0
    %315 = vmatprep.subr.mxu0 0.0
    %316 = vmatpush1.xpose.msra.mxu0 0.0
    %317 = vmatprep.subr.mxu0 0.0
    %318 = vmatpush1.xpose.msra.mxu0 0.0
    %319 = vmatprep.subr.mxu0 0.0
    %320 = vmatpush1.xpose.msra.mxu0 0.0
    %321 = vmatprep.mubr.f32.mxu0 0.0
    %322 = vmatmul.mubr.f32.gmra.mrb[0].mxu0 %v249
    %v323 = vpop.f32.mrb[0].mxu0
    %v324 = vadd.f32 %v134, %v323
    %v325 = vpop.f32.mrb[0].mxu0
    %326 = vmatprep.mubr.f32.mxu0 0.0
    %327 = vmatmul.mubr.f32.gmra.mrb[0].mxu0 %v251
    %v328 = vpop.f32.mrb[0].mxu0
    %v329 = vadd.f32 %v135, %v328
    %v330 = vpop.f32.mrb[0].mxu0
    %331 = vdwg.mxu0
    %vm332 = vcmask 130048
    %v333 = vsel %vm332, %v324, -inf
    %334 = vmax.xlane.f32.xlu0 %v333
    %v335 = vpop.xlane.xlu0 %334
    %v336 = vsel %vm332, %v329, -inf
    %337 = vmax.xlane.f32.xlu0 %v336
    %v338 = vpop.xlane.xlu0 %337
    %v339 = vsub.f32 %v324, %v335
    %v340 = vsub.f32 %v329, %v338
    %v341 = vmul.f32 %v339, 1.442695
    %v342 = vpow.pop %v341
    %v343 = vmul.f32 %v340, 1.442695
    %v344 = vpow.pop %v343
    %v345 = vsel %vm332, %v342, 0.0
    %346 = vadd.xlane.f32.xlu0 %v345
    %v347 = vpop.xlane.xlu0 %346
    %v348 = vsel %vm332, %v344, 0.0
    %349 = vadd.xlane.f32.xlu0 %v348
    %v350 = vpop.xlane.xlu0 %349
    %v351 = vrcp.pop %v347
    %v352 = vrcp.pop %v350
    %v353 = vmul.f32 %v342, %v351
    %v354 = vmul.f32 %v344, %v352
    %355 = vrot.lane.b32.xlu0 %v236, 64
    %v356 = vpop.permute.xlu0 %355
    %357 = vrot.lane.b32.xlu0 %v239, 64
    %v358 = vpop.permute.xlu0 %357
    %v362 = vsel %vm332, %v353, 0
    %v365 = vsel %vm332, %v354, 0
    %367 = vmatprep.subr.mxu0 0.0
    %368 = vmatpush1.msra.mxu0 %v356
    %369 = vmatprep.subr.mxu0 0.0
    %370 = vmatpush1.msra.mxu0 %v358
    %371 = vmatprep.subr.mxu0 0.0
    %372 = vmatpush1.msra.mxu0 0.0
    %373 = vmatprep.subr.mxu0 0.0
    %374 = vmatpush1.msra.mxu0 0.0
    %375 = vmatprep.subr.mxu0 0.0
    %376 = vmatpush1.msra.mxu0 0.0
    %377 = vmatprep.subr.mxu0 0.0
    %378 = vmatpush1.msra.mxu0 0.0
    %379 = vmatprep.subr.mxu0 0.0
    %380 = vmatpush1.msra.mxu0 0.0
    %381 = vmatprep.subr.mxu0 0.0
    %382 = vmatpush1.msra.mxu0 0.0
    %383 = vmatprep.subr.mxu0 0.0
    %384 = vmatpush1.msra.mxu0 0.0
    %385 = vmatprep.subr.mxu0 0.0
    %386 = vmatpush1.msra.mxu0 0.0
    %387 = vmatprep.subr.mxu0 0.0
    %388 = vmatpush1.msra.mxu0 0.0
    %389 = vmatprep.subr.mxu0 0.0
    %390 = vmatpush1.msra.mxu0 0.0
    %391 = vmatprep.subr.mxu0 0.0
    %392 = vmatpush1.msra.mxu0 0.0
    %393 = vmatprep.subr.mxu0 0.0
    %394 = vmatpush1.msra.mxu0 0.0
    %395 = vmatprep.subr.mxu0 0.0
    %396 = vmatpush1.msra.mxu0 0.0
    %397 = vmatprep.subr.mxu0 0.0
    %398 = vmatpush1.msra.mxu0 0.0
    %399 = vmatprep.subr.mxu0 0.0
    %400 = vmatpush1.msra.mxu0 0.0
    %401 = vmatprep.subr.mxu0 0.0
    %402 = vmatpush1.msra.mxu0 0.0
    %403 = vmatprep.subr.mxu0 0.0
    %404 = vmatpush1.msra.mxu0 0.0
    %405 = vmatprep.subr.mxu0 0.0
    %406 = vmatpush1.msra.mxu0 0.0
    %407 = vmatprep.subr.mxu0 0.0
    %408 = vmatpush1.msra.mxu0 0.0
    %409 = vmatprep.subr.mxu0 0.0
    %410 = vmatpush1.msra.mxu0 0.0
    %411 = vmatprep.subr.mxu0 0.0
    %412 = vmatpush1.msra.mxu0 0.0
    %413 = vmatprep.subr.mxu0 0.0
    %414 = vmatpush1.msra.mxu0 0.0
    %415 = vmatprep.subr.mxu0 0.0
    %416 = vmatpush1.msra.mxu0 0.0
    %417 = vmatprep.subr.mxu0 0.0
    %418 = vmatpush1.msra.mxu0 0.0
    %419 = vmatprep.subr.mxu0 0.0
    %420 = vmatpush1.msra.mxu0 0.0
    %421 = vmatprep.subr.mxu0 0.0
    %422 = vmatpush1.msra.mxu0 0.0
    %423 = vmatprep.subr.mxu0 0.0
    %424 = vmatpush1.msra.mxu0 0.0
    %425 = vmatprep.subr.mxu0 0.0
    %426 = vmatpush1.msra.mxu0 0.0
    %427 = vmatprep.subr.mxu0 0.0
    %428 = vmatpush1.msra.mxu0 0.0
    %429 = vmatprep.subr.mxu0 0.0
    %430 = vmatpush1.msra.mxu0 0.0
    %431 = vmatprep.mubr.f32.mxu0 0.0
    %432 = vmatmul.mubr.f32.gmra.mrb[0].mxu0 %v362
    %v433 = vpop.f32.mrb[0].mxu0
    %v434 = vadd.f32 0.0, %v433
    %v435 = vpop.f32.mrb[0].mxu0
    %436 = vmatprep.mubr.f32.mxu0 0.0
    %437 = vmatmul.mubr.f32.gmra.mrb[0].mxu0 %v365
    %v438 = vpop.f32.mrb[0].mxu0
    %v439 = vadd.f32 0.0, %v438
    %v440 = vpop.f32.mrb[0].mxu0
    %441 = vdwg.mxu0
    %442 = vrot.lane.b32.xlu0 %v236, 120
    %v443 = vpop.permute.xlu0 %442
    %444 = vrot.lane.b32.xlu0 %v239, 120
    %v445 = vpop.permute.xlu0 %444
    %446 = vrot.lane.b32.xlu0 %v236, 88
    %v447 = vpop.permute.xlu0 %446
    %448 = vrot.lane.b32.xlu0 %v239, 88
    %v449 = vpop.permute.xlu0 %448
    %v450 = vsel %vm248, %v443, 0
    %v452 = vsel %vm248, %v445, 0
    %v454 = vsel %vm248, %v447, 0
    %v456 = vsel %vm248, %v449, 0
    %458 = vmatprep.subr.mxu0 0.0
    %459 = vmatpush1.xpose.msra.mxu0 %v454
    %460 = vmatprep.subr.mxu0 0.0
    %461 = vmatpush1.xpose.msra.mxu0 %v456
    %462 = vmatprep.subr.mxu0 0.0
    %463 = vmatpush1.xpose.msra.mxu0 0.0
    %464 = vmatprep.subr.mxu0 0.0
    %465 = vmatpush1.xpose.msra.mxu0 0.0
    %466 = vmatprep.subr.mxu0 0.0
    %467 = vmatpush1.xpose.msra.mxu0 0.0
    %468 = vmatprep.subr.mxu0 0.0
    %469 = vmatpush1.xpose.msra.mxu0 0.0
    %470 = vmatprep.subr.mxu0 0.0
    %471 = vmatpush1.xpose.msra.mxu0 0.0
    %472 = vmatprep.subr.mxu0 0.0
    %473 = vmatpush1.xpose.msra.mxu0 0.0
    %474 = vmatprep.subr.mxu0 0.0
    %475 = vmatpush1.xpose.msra.mxu0 0.0
    %476 = vmatprep.subr.mxu0 0.0
    %477 = vmatpush1.xpose.msra.mxu0 0.0
    %478 = vmatprep.subr.mxu0 0.0
    %479 = vmatpush1.xpose.msra.mxu0 0.0
    %480 = vmatprep.subr.mxu0 0.0
    %481 = vmatpush1.xpose.msra.mxu0 0.0
    %482 = vmatprep.subr.mxu0 0.0
    %483 = vmatpush1.xpose.msra.mxu0 0.0
    %484 = vmatprep.subr.mxu0 0.0
    %485 = vmatpush1.xpose.msra.mxu0 0.0
    %486 = vmatprep.subr.mxu0 0.0
    %487 = vmatpush1.xpose.msra.mxu0 0.0
    %488 = vmatprep.subr.mxu0 0.0
    %489 = vmatpush1.xpose.msra.mxu0 0.0
    %490 = vmatprep.subr.mxu0 0.0
    %491 = vmatpush1.xpose.msra.mxu0 0.0
    %492 = vmatprep.subr.mxu0 0.0
    %493 = vmatpush1.xpose.msra.mxu0 0.0
    %494 = vmatprep.subr.mxu0 0.0
    %495 = vmatpush1.xpose.msra.mxu0 0.0
    %496 = vmatprep.subr.mxu0 0.0
    %497 = vmatpush1.xpose.msra.mxu0 0.0
    %498 = vmatprep.subr.mxu0 0.0
    %499 = vmatpush1.xpose.msra.mxu0 0.0
    %500 = vmatprep.subr.mxu0 0.0
    %501 = vmatpush1.xpose.msra.mxu0 0.0
    %502 = vmatprep.subr.mxu0 0.0
    %503 = vmatpush1.xpose.msra.mxu0 0.0
    %504 = vmatprep.subr.mxu0 0.0
    %505 = vmatpush1.xpose.msra.mxu0 0.0
    %506 = vmatprep.subr.mxu0 0.0
    %507 = vmatpush1.xpose.msra.mxu0 0.0
    %508 = vmatprep.subr.mxu0 0.0
    %509 = vmatpush1.xpose.msra.mxu0 0.0
    %510 = vmatprep.subr.mxu0 0.0
    %511 = vmatpush1.xpose.msra.mxu0 0.0
    %512 = vmatprep.subr.mxu0 0.0
    %513 = vmatpush1.xpose.msra.mxu0 0.0
    %514 = vmatprep.subr.mxu0 0.0
    %515 = vmatpush1.xpose.msra.mxu0 0.0
    %516 = vmatprep.subr.mxu0 0.0
    %517 = vmatpush1.xpose.msra.mxu0 0.0
    %518 = vmatprep.subr.mxu0 0.0
    %519 = vmatpush1.xpose.msra.mxu0 0.0
    %520 = vmatprep.subr.mxu0 0.0
    %521 = vmatpush1.xpose.msra.mxu0 0.0
    %522 = vmatprep.mubr.f32.mxu0 0.0
    %523 = vmatmul.mubr.f32.gmra.mrb[0].mxu0 %v450
    %v524 = vpop.f32.mrb[0].mxu0
    %v525 = vadd.f32 %v134, %v524
    %v526 = vpop.f32.mrb[0].mxu0
    %527 = vmatprep.mubr.f32.mxu0 0.0
    %528 = vmatmul.mubr.f32.gmra.mrb[0].mxu0 %v452
    %v529 = vpop.f32.mrb[0].mxu0
    %v530 = vadd.f32 %v135, %v529
    %v531 = vpop.f32.mrb[0].mxu0
    %532 = vdwg.mxu0
    %v533 = vsel %vm332, %v525, -inf
    %534 = vmax.xlane.f32.xlu0 %v533
    %v535 = vpop.xlane.xlu0 %534
    %v536 = vsel %vm332, %v530, -inf
    %537 = vmax.xlane.f32.xlu0 %v536
    %v538 = vpop.xlane.xlu0 %537
    %v539 = vsub.f32 %v525, %v535
    %v540 = vsub.f32 %v530, %v538
    %v541 = vmul.f32 %v539, 1.442695
    %v542 = vpow.pop %v541
    %v543 = vmul.f32 %v540, 1.442695
    %v544 = vpow.pop %v543
    %v545 = vsel %vm332, %v542, 0.0
    %546 = vadd.xlane.f32.xlu0 %v545
    %v547 = vpop.xlane.xlu0 %546
    %v548 = vsel %vm332, %v544, 0.0
    %549 = vadd.xlane.f32.xlu0 %v548
    %v550 = vpop.xlane.xlu0 %549
    %v551 = vrcp.pop %v547
    %v552 = vrcp.pop %v550
    %v553 = vmul.f32 %v542, %v551
    %v554 = vmul.f32 %v544, %v552
    %555 = vrot.lane.b32.xlu0 %v236, 56
    %v556 = vpop.permute.xlu0 %555
    %557 = vrot.lane.b32.xlu0 %v239, 56
    %v558 = vpop.permute.xlu0 %557
    %v562 = vsel %vm332, %v553, 0
    %v565 = vsel %vm332, %v554, 0
    %567 = vmatprep.subr.mxu0 0.0
    %568 = vmatpush1.msra.mxu0 %v556
    %569 = vmatprep.subr.mxu0 0.0
    %570 = vmatpush1.msra.mxu0 %v558
    %571 = vmatprep.subr.mxu0 0.0
    %572 = vmatpush1.msra.mxu0 0.0
    %573 = vmatprep.subr.mxu0 0.0
    %574 = vmatpush1.msra.mxu0 0.0
    %575 = vmatprep.subr.mxu0 0.0
    %576 = vmatpush1.msra.mxu0 0.0
    %577 = vmatprep.subr.mxu0 0.0
    %578 = vmatpush1.msra.mxu0 0.0
    %579 = vmatprep.subr.mxu0 0.0
    %580 = vmatpush1.msra.mxu0 0.0
    %581 = vmatprep.subr.mxu0 0.0
    %582 = vmatpush1.msra.mxu0 0.0
    %583 = vmatprep.subr.mxu0 0.0
    %584 = vmatpush1.msra.mxu0 0.0
    %585 = vmatprep.subr.mxu0 0.0
    %586 = vmatpush1.msra.mxu0 0.0
    %587 = vmatprep.subr.mxu0 0.0
    %588 = vmatpush1.msra.mxu0 0.0
    %589 = vmatprep.subr.mxu0 0.0
    %590 = vmatpush1.msra.mxu0 0.0
    %591 = vmatprep.subr.mxu0 0.0
    %592 = vmatpush1.msra.mxu0 0.0
    %593 = vmatprep.subr.mxu0 0.0
    %594 = vmatpush1.msra.mxu0 0.0
    %595 = vmatprep.subr.mxu0 0.0
    %596 = vmatpush1.msra.mxu0 0.0
    %597 = vmatprep.subr.mxu0 0.0
    %598 = vmatpush1.msra.mxu0 0.0
    %599 = vmatprep.subr.mxu0 0.0
    %600 = vmatpush1.msra.mxu0 0.0
    %601 = vmatprep.subr.mxu0 0.0
    %602 = vmatpush1.msra.mxu0 0.0
    %603 = vmatprep.subr.mxu0 0.0
    %604 = vmatpush1.msra.mxu0 0.0
    %605 = vmatprep.subr.mxu0 0.0
    %606 = vmatpush1.msra.mxu0 0.0
    %607 = vmatprep.subr.mxu0 0.0
    %608 = vmatpush1.msra.mxu0 0.0
    %609 = vmatprep.subr.mxu0 0.0
    %610 = vmatpush1.msra.mxu0 0.0
    %611 = vmatprep.subr.mxu0 0.0
    %612 = vmatpush1.msra.mxu0 0.0
    %613 = vmatprep.subr.mxu0 0.0
    %614 = vmatpush1.msra.mxu0 0.0
    %615 = vmatprep.subr.mxu0 0.0
    %616 = vmatpush1.msra.mxu0 0.0
    %617 = vmatprep.subr.mxu0 0.0
    %618 = vmatpush1.msra.mxu0 0.0
    %619 = vmatprep.subr.mxu0 0.0
    %620 = vmatpush1.msra.mxu0 0.0
    %621 = vmatprep.subr.mxu0 0.0
    %622 = vmatpush1.msra.mxu0 0.0
    %623 = vmatprep.subr.mxu0 0.0
    %624 = vmatpush1.msra.mxu0 0.0
    %625 = vmatprep.subr.mxu0 0.0
    %626 = vmatpush1.msra.mxu0 0.0
    %627 = vmatprep.subr.mxu0 0.0
    %628 = vmatpush1.msra.mxu0 0.0
    %629 = vmatprep.subr.mxu0 0.0
    %630 = vmatpush1.msra.mxu0 0.0
    %631 = vmatprep.mubr.f32.mxu0 0.0
    %632 = vmatmul.mubr.f32.gmra.mrb[0].mxu0 %v562
    %v633 = vpop.f32.mrb[0].mxu0
    %v634 = vadd.f32 0.0, %v633
    %v635 = vpop.f32.mrb[0].mxu0
    %636 = vmatprep.mubr.f32.mxu0 0.0
    %637 = vmatmul.mubr.f32.gmra.mrb[0].mxu0 %v565
    %v638 = vpop.f32.mrb[0].mxu0
    %v639 = vadd.f32 0.0, %v638
    %v640 = vpop.f32.mrb[0].mxu0
    %641 = vdwg.mxu0
    %642 = vrot.lane.b32.xlu0 %v236, 112
    %v643 = vpop.permute.xlu0 %642
    %644 = vrot.lane.b32.xlu0 %v239, 112
    %v645 = vpop.permute.xlu0 %644
    %646 = vrot.lane.b32.xlu0 %v236, 80
    %v647 = vpop.permute.xlu0 %646
    %648 = vrot.lane.b32.xlu0 %v239, 80
    %v649 = vpop.permute.xlu0 %648
    %v650 = vsel %vm248, %v643, 0
    %v652 = vsel %vm248, %v645, 0
    %v654 = vsel %vm248, %v647, 0
    %v656 = vsel %vm248, %v649, 0
    %658 = vmatprep.subr.mxu0 0.0
    %659 = vmatpush1.xpose.msra.mxu0 %v654
    %660 = vmatprep.subr.mxu0 0.0
    %661 = vmatpush1.xpose.msra.mxu0 %v656
    %662 = vmatprep.subr.mxu0 0.0
    %663 = vmatpush1.xpose.msra.mxu0 0.0
    %664 = vmatprep.subr.mxu0 0.0
    %665 = vmatpush1.xpose.msra.mxu0 0.0
    %666 = vmatprep.subr.mxu0 0.0
    %667 = vmatpush1.xpose.msra.mxu0 0.0
    %668 = vmatprep.subr.mxu0 0.0
    %669 = vmatpush1.xpose.msra.mxu0 0.0
    %670 = vmatprep.subr.mxu0 0.0
    %671 = vmatpush1.xpose.msra.mxu0 0.0
    %672 = vmatprep.subr.mxu0 0.0
    %673 = vmatpush1.xpose.msra.mxu0 0.0
    %674 = vmatprep.subr.mxu0 0.0
    %675 = vmatpush1.xpose.msra.mxu0 0.0
    %676 = vmatprep.subr.mxu0 0.0
    %677 = vmatpush1.xpose.msra.mxu0 0.0
    %678 = vmatprep.subr.mxu0 0.0
    %679 = vmatpush1.xpose.msra.mxu0 0.0
    %680 = vmatprep.subr.mxu0 0.0
    %681 = vmatpush1.xpose.msra.mxu0 0.0
    %682 = vmatprep.subr.mxu0 0.0
    %683 = vmatpush1.xpose.msra.mxu0 0.0
    %684 = vmatprep.subr.mxu0 0.0
    %685 = vmatpush1.xpose.msra.mxu0 0.0
    %686 = vmatprep.subr.mxu0 0.0
    %687 = vmatpush1.xpose.msra.mxu0 0.0
    %688 = vmatprep.subr.mxu0 0.0
    %689 = vmatpush1.xpose.msra.mxu0 0.0
    %690 = vmatprep.subr.mxu0 0.0
    %691 = vmatpush1.xpose.msra.mxu0 0.0
    %692 = vmatprep.subr.mxu0 0.0
    %693 = vmatpush1.xpose.msra.mxu0 0.0
    %694 = vmatprep.subr.mxu0 0.0
    %695 = vmatpush1.xpose.msra.mxu0 0.0
    %696 = vmatprep.subr.mxu0 0.0
    %697 = vmatpush1.xpose.msra.mxu0 0.0
    %698 = vmatprep.subr.mxu0 0.0
    %699 = vmatpush1.xpose.msra.mxu0 0.0
    %700 = vmatprep.subr.mxu0 0.0
    %701 = vmatpush1.xpose.msra.mxu0 0.0
    %702 = vmatprep.subr.mxu0 0.0
    %703 = vmatpush1.xpose.msra.mxu0 0.0
    %704 = vmatprep.subr.mxu0 0.0
    %705 = vmatpush1.xpose.msra.mxu0 0.0
    %706 = vmatprep.subr.mxu0 0.0
    %707 = vmatpush1.xpose.msra.mxu0 0.0
    %708 = vmatprep.subr.mxu0 0.0
    %709 = vmatpush1.xpose.msra.mxu0 0.0
    %710 = vmatprep.subr.mxu0 0.0
    %711 = vmatpush1.xpose.msra.mxu0 0.0
    %712 = vmatprep.subr.mxu0 0.0
    %713 = vmatpush1.xpose.msra.mxu0 0.0
    %714 = vmatprep.subr.mxu0 0.0
    %715 = vmatpush1.xpose.msra.mxu0 0.0
    %716 = vmatprep.subr.mxu0 0.0
    %717 = vmatpush1.xpose.msra.mxu0 0.0
    %718 = vmatprep.subr.mxu0 0.0
    %719 = vmatpush1.xpose.msra.mxu0 0.0
    %720 = vmatprep.subr.mxu0 0.0
    %721 = vmatpush1.xpose.msra.mxu0 0.0
    %722 = vmatprep.mubr.f32.mxu0 0.0
    %723 = vmatmul.mubr.f32.gmra.mrb[0].mxu0 %v650
    %v724 = vpop.f32.mrb[0].mxu0
    %v725 = vadd.f32 %v134, %v724
    %v726 = vpop.f32.mrb[0].mxu0
    %727 = vmatprep.mubr.f32.mxu0 0.0
    %728 = vmatmul.mubr.f32.gmra.mrb[0].mxu0 %v652
    %v729 = vpop.f32.mrb[0].mxu0
    %v730 = vadd.f32 %v135, %v729
    %v731 = vpop.f32.mrb[0].mxu0
    %732 = vdwg.mxu0
    %v733 = vsel %vm332, %v725, -inf
    %734 = vmax.xlane.f32.xlu0 %v733
    %v735 = vpop.xlane.xlu0 %734
    %v736 = vsel %vm332, %v730, -inf
    %737 = vmax.xlane.f32.xlu0 %v736
    %v738 = vpop.xlane.xlu0 %737
    %v739 = vsub.f32 %v725, %v735
    %v740 = vsub.f32 %v730, %v738
    %v741 = vmul.f32 %v739, 1.442695
    %v742 = vpow.pop %v741
    %v743 = vmul.f32 %v740, 1.442695
    %v744 = vpow.pop %v743
    %v745 = vsel %vm332, %v742, 0.0
    %746 = vadd.xlane.f32.xlu0 %v745
    %v747 = vpop.xlane.xlu0 %746
    %v748 = vsel %vm332, %v744, 0.0
    %749 = vadd.xlane.f32.xlu0 %v748
    %v750 = vpop.xlane.xlu0 %749
    %v751 = vrcp.pop %v747
    %v752 = vrcp.pop %v750
    %v753 = vmul.f32 %v742, %v751
    %v754 = vmul.f32 %v744, %v752
    %755 = vrot.lane.b32.xlu0 %v236, 48
    %v756 = vpop.permute.xlu0 %755
    %757 = vrot.lane.b32.xlu0 %v239, 48
    %v758 = vpop.permute.xlu0 %757
    %v762 = vsel %vm332, %v753, 0
    %v765 = vsel %vm332, %v754, 0
    %767 = vmatprep.subr.mxu0 0.0
    %768 = vmatpush1.msra.mxu0 %v756
    %769 = vmatprep.subr.mxu0 0.0
    %770 = vmatpush1.msra.mxu0 %v758
    %771 = vmatprep.subr.mxu0 0.0
    %772 = vmatpush1.msra.mxu0 0.0
    %773 = vmatprep.subr.mxu0 0.0
    %774 = vmatpush1.msra.mxu0 0.0
    %775 = vmatprep.subr.mxu0 0.0
    %776 = vmatpush1.msra.mxu0 0.0
    %777 = vmatprep.subr.mxu0 0.0
    %778 = vmatpush1.msra.mxu0 0.0
    %779 = vmatprep.subr.mxu0 0.0
    %780 = vmatpush1.msra.mxu0 0.0
    %781 = vmatprep.subr.mxu0 0.0
    %782 = vmatpush1.msra.mxu0 0.0
    %783 = vmatprep.subr.mxu0 0.0
    %784 = vmatpush1.msra.mxu0 0.0
    %785 = vmatprep.subr.mxu0 0.0
    %786 = vmatpush1.msra.mxu0 0.0
    %787 = vmatprep.subr.mxu0 0.0
    %788 = vmatpush1.msra.mxu0 0.0
    %789 = vmatprep.subr.mxu0 0.0
    %790 = vmatpush1.msra.mxu0 0.0
    %791 = vmatprep.subr.mxu0 0.0
    %792 = vmatpush1.msra.mxu0 0.0
    %793 = vmatprep.subr.mxu0 0.0
    %794 = vmatpush1.msra.mxu0 0.0
    %795 = vmatprep.subr.mxu0 0.0
    %796 = vmatpush1.msra.mxu0 0.0
    %797 = vmatprep.subr.mxu0 0.0
    %798 = vmatpush1.msra.mxu0 0.0
    %799 = vmatprep.subr.mxu0 0.0
    %800 = vmatpush1.msra.mxu0 0.0
    %801 = vmatprep.subr.mxu0 0.0
    %802 = vmatpush1.msra.mxu0 0.0
    %803 = vmatprep.subr.mxu0 0.0
    %804 = vmatpush1.msra.mxu0 0.0
    %805 = vmatprep.subr.mxu0 0.0
    %806 = vmatpush1.msra.mxu0 0.0
    %807 = vmatprep.subr.mxu0 0.0
    %808 = vmatpush1.msra.mxu0 0.0
    %809 = vmatprep.subr.mxu0 0.0
    %810 = vmatpush1.msra.mxu0 0.0
    %811 = vmatprep.subr.mxu0 0.0
    %812 = vmatpush1.msra.mxu0 0.0
    %813 = vmatprep.subr.mxu0 0.0
    %814 = vmatpush1.msra.mxu0 0.0
    %815 = vmatprep.subr.mxu0 0.0
    %816 = vmatpush1.msra.mxu0 0.0
    %817 = vmatprep.subr.mxu0 0.0
    %818 = vmatpush1.msra.mxu0 0.0
    %819 = vmatprep.subr.mxu0 0.0
    %820 = vmatpush1.msra.mxu0 0.0
    %821 = vmatprep.subr.mxu0 0.0
    %822 = vmatpush1.msra.mxu0 0.0
    %823 = vmatprep.subr.mxu0 0.0
    %824 = vmatpush1.msra.mxu0 0.0
    %825 = vmatprep.subr.mxu0 0.0
    %826 = vmatpush1.msra.mxu0 0.0
    %827 = vmatprep.subr.mxu0 0.0
    %828 = vmatpush1.msra.mxu0 0.0
    %829 = vmatprep.subr.mxu0 0.0
    %830 = vmatpush1.msra.mxu0 0.0
    %831 = vmatprep.mubr.f32.mxu0 0.0
    %832 = vmatmul.mubr.f32.gmra.mrb[0].mxu0 %v762
    %v833 = vpop.f32.mrb[0].mxu0
    %v834 = vadd.f32 0.0, %v833
    %v835 = vpop.f32.mrb[0].mxu0
    %836 = vmatprep.mubr.f32.mxu0 0.0
    %837 = vmatmul.mubr.f32.gmra.mrb[0].mxu0 %v765
    %v838 = vpop.f32.mrb[0].mxu0
    %v839 = vadd.f32 0.0, %v838
    %v840 = vpop.f32.mrb[0].mxu0
    %841 = vdwg.mxu0
    %842 = vrot.lane.b32.xlu0 %v236, 104
    %v843 = vpop.permute.xlu0 %842
    %844 = vrot.lane.b32.xlu0 %v239, 104
    %v845 = vpop.permute.xlu0 %844
    %846 = vrot.lane.b32.xlu0 %v236, 72
    %v847 = vpop.permute.xlu0 %846
    %848 = vrot.lane.b32.xlu0 %v239, 72
    %v849 = vpop.permute.xlu0 %848
    %v850 = vsel %vm248, %v843, 0
    %v852 = vsel %vm248, %v845, 0
    %v854 = vsel %vm248, %v847, 0
    %v856 = vsel %vm248, %v849, 0
    %858 = vmatprep.subr.mxu0 0.0
    %859 = vmatpush1.xpose.msra.mxu0 %v854
    %860 = vmatprep.subr.mxu0 0.0
    %861 = vmatpush1.xpose.msra.mxu0 %v856
    %862 = vmatprep.subr.mxu0 0.0
    %863 = vmatpush1.xpose.msra.mxu0 0.0
    %864 = vmatprep.subr.mxu0 0.0
    %865 = vmatpush1.xpose.msra.mxu0 0.0
    %866 = vmatprep.subr.mxu0 0.0
    %867 = vmatpush1.xpose.msra.mxu0 0.0
    %868 = vmatprep.subr.mxu0 0.0
    %869 = vmatpush1.xpose.msra.mxu0 0.0
    %870 = vmatprep.subr.mxu0 0.0
    %871 = vmatpush1.xpose.msra.mxu0 0.0
    %872 = vmatprep.subr.mxu0 0.0
    %873 = vmatpush1.xpose.msra.mxu0 0.0
    %874 = vmatprep.subr.mxu0 0.0
    %875 = vmatpush1.xpose.msra.mxu0 0.0
    %876 = vmatprep.subr.mxu0 0.0
    %877 = vmatpush1.xpose.msra.mxu0 0.0
    %878 = vmatprep.subr.mxu0 0.0
    %879 = vmatpush1.xpose.msra.mxu0 0.0
    %880 = vmatprep.subr.mxu0 0.0
    %881 = vmatpush1.xpose.msra.mxu0 0.0
    %882 = vmatprep.subr.mxu0 0.0
    %883 = vmatpush1.xpose.msra.mxu0 0.0
    %884 = vmatprep.subr.mxu0 0.0
    %885 = vmatpush1.xpose.msra.mxu0 0.0
    %886 = vmatprep.subr.mxu0 0.0
    %887 = vmatpush1.xpose.msra.mxu0 0.0
    %888 = vmatprep.subr.mxu0 0.0
    %889 = vmatpush1.xpose.msra.mxu0 0.0
    %890 = vmatprep.subr.mxu0 0.0
    %891 = vmatpush1.xpose.msra.mxu0 0.0
    %892 = vmatprep.subr.mxu0 0.0
    %893 = vmatpush1.xpose.msra.mxu0 0.0
    %894 = vmatprep.subr.mxu0 0.0
    %895 = vmatpush1.xpose.msra.mxu0 0.0
    %896 = vmatprep.subr.mxu0 0.0
    %897 = vmatpush1.xpose.msra.mxu0 0.0
    %898 = vmatprep.subr.mxu0 0.0
    %899 = vmatpush1.xpose.msra.mxu0 0.0
    %900 = vmatprep.subr.mxu0 0.0
    %901 = vmatpush1.xpose.msra.mxu0 0.0
    %902 = vmatprep.subr.mxu0 0.0
    %903 = vmatpush1.xpose.msra.mxu0 0.0
    %904 = vmatprep.subr.mxu0 0.0
    %905 = vmatpush1.xpose.msra.mxu0 0.0
    %906 = vmatprep.subr.mxu0 0.0
    %907 = vmatpush1.xpose.msra.mxu0 0.0
    %908 = vmatprep.subr.mxu0 0.0
    %909 = vmatpush1.xpose.msra.mxu0 0.0
    %910 = vmatprep.subr.mxu0 0.0
    %911 = vmatpush1.xpose.msra.mxu0 0.0
    %912 = vmatprep.subr.mxu0 0.0
    %913 = vmatpush1.xpose.msra.mxu0 0.0
    %914 = vmatprep.subr.mxu0 0.0
    %915 = vmatpush1.xpose.msra.mxu0 0.0
    %916 = vmatprep.subr.mxu0 0.0
    %917 = vmatpush1.xpose.msra.mxu0 0.0
    %918 = vmatprep.subr.mxu0 0.0
    %919 = vmatpush1.xpose.msra.mxu0 0.0
    %920 = vmatprep.subr.mxu0 0.0
    %921 = vmatpush1.xpose.msra.mxu0 0.0
    %922 = vmatprep.mubr.f32.mxu0 0.0
    %923 = vmatmul.mubr.f32.gmra.mrb[0].mxu0 %v850
    %v924 = vpop.f32.mrb[0].mxu0
    %v925 = vadd.f32 %v134, %v924
    %v926 = vpop.f32.mrb[0].mxu0
    %927 = vmatprep.mubr.f32.mxu0 0.0
    %928 = vmatmul.mubr.f32.gmra.mrb[0].mxu0 %v852
    %v929 = vpop.f32.mrb[0].mxu0
    %v930 = vadd.f32 %v135, %v929
    %v931 = vpop.f32.mrb[0].mxu0
    %932 = vdwg.mxu0
    %v933 = vsel %vm332, %v925, -inf
    %934 = vmax.xlane.f32.xlu0 %v933
    %v935 = vpop.xlane.xlu0 %934
    %v936 = vsel %vm332, %v930, -inf
    %937 = vmax.xlane.f32.xlu0 %v936
    %v938 = vpop.xlane.xlu0 %937
    %v939 = vsub.f32 %v925, %v935
    %v940 = vsub.f32 %v930, %v938
    %v941 = vmul.f32 %v939, 1.442695
    %v942 = vpow.pop %v941
    %v943 = vmul.f32 %v940, 1.442695
    %v944 = vpow.pop %v943
    %v945 = vsel %vm332, %v942, 0.0
    %946 = vadd.xlane.f32.xlu0 %v945
    %v947 = vpop.xlane.xlu0 %946
    %v948 = vsel %vm332, %v944, 0.0
    %949 = vadd.xlane.f32.xlu0 %v948
    %v950 = vpop.xlane.xlu0 %949
    %v951 = vrcp.pop %v947
    %v952 = vrcp.pop %v950
    %v953 = vmul.f32 %v942, %v951
    %v954 = vmul.f32 %v944, %v952
    %955 = vrot.lane.b32.xlu0 %v236, 40
    %v956 = vpop.permute.xlu0 %955
    %957 = vrot.lane.b32.xlu0 %v239, 40
    %v958 = vpop.permute.xlu0 %957
    %v962 = vsel %vm332, %v953, 0
    %v965 = vsel %vm332, %v954, 0
    %967 = vmatprep.subr.mxu0 0.0
    %968 = vmatpush1.msra.mxu0 %v956
    %969 = vmatprep.subr.mxu0 0.0
    %970 = vmatpush1.msra.mxu0 %v958
    %971 = vmatprep.subr.mxu0 0.0
    %972 = vmatpush1.msra.mxu0 0.0
    %973 = vmatprep.subr.mxu0 0.0
    %974 = vmatpush1.msra.mxu0 0.0
    %975 = vmatprep.subr.mxu0 0.0
    %976 = vmatpush1.msra.mxu0 0.0
    %977 = vmatprep.subr.mxu0 0.0
    %978 = vmatpush1.msra.mxu0 0.0
    %979 = vmatprep.subr.mxu0 0.0
    %980 = vmatpush1.msra.mxu0 0.0
    %981 = vmatprep.subr.mxu0 0.0
    %982 = vmatpush1.msra.mxu0 0.0
    %983 = vmatprep.subr.mxu0 0.0
    %984 = vmatpush1.msra.mxu0 0.0
    %985 = vmatprep.subr.mxu0 0.0
    %986 = vmatpush1.msra.mxu0 0.0
    %987 = vmatprep.subr.mxu0 0.0
    %988 = vmatpush1.msra.mxu0 0.0
    %989 = vmatprep.subr.mxu0 0.0
    %990 = vmatpush1.msra.mxu0 0.0
    %991 = vmatprep.subr.mxu0 0.0
    %992 = vmatpush1.msra.mxu0 0.0
    %993 = vmatprep.subr.mxu0 0.0
    %994 = vmatpush1.msra.mxu0 0.0
    %995 = vmatprep.subr.mxu0 0.0
    %996 = vmatpush1.msra.mxu0 0.0
    %997 = vmatprep.subr.mxu0 0.0
    %998 = vmatpush1.msra.mxu0 0.0
    %999 = vmatprep.subr.mxu0 0.0
    %1000 = vmatpush1.msra.mxu0 0.0
    %1001 = vmatprep.subr.mxu0 0.0
    %1002 = vmatpush1.msra.mxu0 0.0
    %1003 = vmatprep.subr.mxu0 0.0
    %1004 = vmatpush1.msra.mxu0 0.0
    %1005 = vmatprep.subr.mxu0 0.0
    %1006 = vmatpush1.msra.mxu0 0.0
    %1007 = vmatprep.subr.mxu0 0.0
    %1008 = vmatpush1.msra.mxu0 0.0
    %1009 = vmatprep.subr.mxu0 0.0
    %1010 = vmatpush1.msra.mxu0 0.0
    %1011 = vmatprep.subr.mxu0 0.0
    %1012 = vmatpush1.msra.mxu0 0.0
    %1013 = vmatprep.subr.mxu0 0.0
    %1014 = vmatpush1.msra.mxu0 0.0
    %1015 = vmatprep.subr.mxu0 0.0
    %1016 = vmatpush1.msra.mxu0 0.0
    %1017 = vmatprep.subr.mxu0 0.0
    %1018 = vmatpush1.msra.mxu0 0.0
    %1019 = vmatprep.subr.mxu0 0.0
    %1020 = vmatpush1.msra.mxu0 0.0
    %1021 = vmatprep.subr.mxu0 0.0
    %1022 = vmatpush1.msra.mxu0 0.0
    %1023 = vmatprep.subr.mxu0 0.0
    %1024 = vmatpush1.msra.mxu0 0.0
    %1025 = vmatprep.subr.mxu0 0.0
    %1026 = vmatpush1.msra.mxu0 0.0
    %1027 = vmatprep.subr.mxu0 0.0
    %1028 = vmatpush1.msra.mxu0 0.0
    %1029 = vmatprep.subr.mxu0 0.0
    %1030 = vmatpush1.msra.mxu0 0.0
    %1031 = vmatprep.mubr.f32.mxu0 0.0
    %1032 = vmatmul.mubr.f32.gmra.mrb[0].mxu0 %v962
    %v1033 = vpop.f32.mrb[0].mxu0
    %v1034 = vadd.f32 0.0, %v1033
    %v1035 = vpop.f32.mrb[0].mxu0
    %1036 = vmatprep.mubr.f32.mxu0 0.0
    %1037 = vmatmul.mubr.f32.gmra.mrb[0].mxu0 %v965
    %v1038 = vpop.f32.mrb[0].mxu0
    %v1039 = vadd.f32 0.0, %v1038
    %v1040 = vpop.f32.mrb[0].mxu0
    %1041 = vdwg.mxu0
    %1044 = vrot.lane.b32.xlu0 %v634, 8
    %v1045 = vpop.permute.xlu0 %1044
    %1046 = vrot.lane.b32.xlu0 %v639, 8
    %v1047 = vpop.permute.xlu0 %1046
    %1052 = vrot.lane.b32.xlu0 %v834, 16
    %v1053 = vpop.permute.xlu0 %1052
    %1054 = vrot.lane.b32.xlu0 %v839, 16
    %v1055 = vpop.permute.xlu0 %1054
    %1060 = vrot.lane.b32.xlu0 %v1034, 24
    %v1061 = vpop.permute.xlu0 %1060
    %1062 = vrot.lane.b32.xlu0 %v1039, 24
    %v1063 = vpop.permute.xlu0 %1062
    %v1066 = vsel %vm248, %v434, %v1045
    %v1067 = vsel %vm248, %v439, %v1047
    %v1068 = vsel %vm332, %v1066, %v1053
    %v1069 = vsel %vm332, %v1067, %v1055
    %vm1070 = vcmask 195584
    %v1071 = vsel %vm1070, %v1068, %v1061
    %v1072 = vsel %vm1070, %v1069, %v1063
    %v1073 = vpack.c.bf16 %v1072, %v1071
    %v1074 = vld [vmem:[%s5] sm:$0xf]
    %v1075 = vld [vmem:[%s5 + $0x4] sm:$0xf]
    %v1076 = vld [vmem:[%s5 + $0x8] sm:$0xf]
    %v1077 = vld [vmem:[%s5 + $0xc] sm:$0xf]
    %v1078 = vlaneseq
    %v1079 = vshrl.u32 %v1078, 7
    %v1080 = vsub.s32 1, %v1079
    %v1081 = vrot.slane %v136, %v1080
    %v1086 = vunpack.c.l.b16 %v1074
    %v1087 = vunpack.c.l.b16 %v1075
    %v1088 = vunpack.c.l.b16 %v1076
    %v1089 = vunpack.c.l.b16 %v1077
    %v1090 = vpack.c.b16 %v1087, %v1086
    %v1091 = vpack.c.b16 %v1089, %v1088
    %v1095 = vsel %vm137, %v1073, 0
    %1097 = vmatprep.subr.bf16.mxu0 0
    %1098 = vmatpush1.bf16.msra.mxu0 %v1090
    %1099 = vmatprep.subr.bf16.mxu0 0
    %1100 = vmatpush1.bf16.msra.mxu0 %v1091
    %1101 = vmatprep.subr.bf16.mxu0 0
    %1102 = vmatpush1.bf16.msra.mxu0 0
    %1103 = vmatprep.subr.bf16.mxu0 0
    %1104 = vmatpush1.bf16.msra.mxu0 0
    %1105 = vmatprep.subr.bf16.mxu0 0
    %1106 = vmatpush1.bf16.msra.mxu0 0
    %1107 = vmatprep.subr.bf16.mxu0 0
    %1108 = vmatpush1.bf16.msra.mxu0 0
    %1109 = vmatprep.subr.bf16.mxu0 0
    %1110 = vmatpush1.bf16.msra.mxu0 0
    %1111 = vmatprep.subr.bf16.mxu0 0
    %1112 = vmatpush1.bf16.msra.mxu0 0
    %1113 = vmatprep.subr.bf16.mxu0 0
    %1114 = vmatpush1.bf16.msra.mxu0 0
    %1115 = vmatprep.subr.bf16.mxu0 0
    %1116 = vmatpush1.bf16.msra.mxu0 0
    %1117 = vmatprep.subr.bf16.mxu0 0
    %1118 = vmatpush1.bf16.msra.mxu0 0
    %1119 = vmatprep.subr.bf16.mxu0 0
    %1120 = vmatpush1.bf16.msra.mxu0 0
    %1121 = vmatprep.subr.bf16.mxu0 0
    %1122 = vmatpush1.bf16.msra.mxu0 0
    %1123 = vmatprep.subr.bf16.mxu0 0
    %1124 = vmatpush1.bf16.msra.mxu0 0
    %1125 = vmatprep.subr.bf16.mxu0 0
    %1126 = vmatpush1.bf16.msra.mxu0 0
    %1127 = vmatprep.subr.bf16.mxu0 0
    %1128 = vmatpush1.bf16.msra.mxu0 0
    %1129 = vmatprep.mubr.bf16.mxu0 0
    %1130 = vmatmul.mubr.bf16.gmra.mrb[0].mxu0 %v1095
    %v1131 = vpop.f32.mrb[0].mxu0
    %v1132 = vadd.f32 %v1081, %v1131
    %v1133 = vpop.f32.mrb[0].mxu0
    %v1134 = vpop.f32.mrb[0].mxu0
    %v1135 = vadd.f32 %v1081, %v1134
    %v1136 = vpop.f32.mrb[0].mxu0
    %1137 = vdwg.mxu0
    %v1138 = vadd.f32 %v128, %v1132
    %v1139 = vadd.f32 %v131, %v1135
    %v1140 = vsel %vm137, %v1138, 0.0
    %1141 = vadd.xlane.f32.xlu0 %v1140
    %v1142 = vpop.xlane.xlu0 %1141
    %v1143 = vsel %vm137, %v1139, 0.0
    %1144 = vadd.xlane.f32.xlu0 %v1143
    %v1145 = vpop.xlane.xlu0 %1144
    %v1146 = vmul.f32 %v1142, %v144
    %v1147 = vmul.f32 %v1145, %v144
    %v1148 = vsub.f32 %v1138, %v1146
    %v1149 = vsub.f32 %v1139, %v1147
    %v1150 = vmul.f32 %v1148, %v1148
    %v1151 = vmul.f32 %v1149, %v1149
    %v1152 = vsel %vm137, %v1150, 0.0
    %1153 = vadd.xlane.f32.xlu0 %v1152
    %v1154 = vpop.xlane.xlu0 %1153
    %v1155 = vsel %vm137, %v1151, 0.0
    %1156 = vadd.xlane.f32.xlu0 %v1155
    %v1157 = vpop.xlane.xlu0 %1156
    %v1158 = vmul.f32 %v1154, %v144
    %v1159 = vmul.f32 %v1157, %v144
    %v1160 = vadd.f32 %v1158, 1e-05
    %v1161 = vadd.f32 %v1159, 1e-05
    %v1162 = vrsqrt.pop %v1160
    %v1163 = vrsqrt.pop %v1161
    %v1164 = vmul.f32 %v1148, %v1162
    %v1165 = vmul.f32 %v1149, %v1163
    %v1166 = vlaneseq
    %v1167 = vshrl.u32 %v1166, 7
    %v1168 = vsub.s32 6, %v1167
    %v1169 = vrot.slane %v136, %v1168
    %v1170 = vmul.f32 %v1164, %v1169
    %v1171 = vmul.f32 %v1165, %v1169
    %v1172 = vlaneseq
    %v1173 = vshrl.u32 %v1172, 7
    %v1174 = vsub.s32 7, %v1173
    %v1175 = vrot.slane %v136, %v1174
    %v1176 = vadd.f32 %v1170, %v1175
    %v1177 = vadd.f32 %v1171, %v1175
    %v1178 = vpack.c.bf16 %v1177, %v1176
    %v1179 = vld [vmem:[%s6] sm:$0xf]
    %v1180 = vld [vmem:[%s6 + $0x4] sm:$0xf]
    %v1181 = vld [vmem:[%s6 + $0x8] sm:$0xf]
    %v1182 = vld [vmem:[%s6 + $0xc] sm:$0xf]
    %v1183 = vlaneseq
    %v1184 = vshrl.u32 %v1183, 7
    %v1185 = vsub.s32 2, %v1184
    %v1186 = vrot.slane %v136, %v1185
    %v1191 = vunpack.c.l.b16 %v1179
    %v1192 = vunpack.c.l.b16 %v1180
    %v1193 = vunpack.c.l.b16 %v1181
    %v1194 = vunpack.c.l.b16 %v1182
    %v1195 = vpack.c.b16 %v1192, %v1191
    %v1196 = vpack.c.b16 %v1194, %v1193
    %v1200 = vsel %vm137, %v1178, 0
    %1202 = vmatprep.subr.bf16.mxu0 0
    %1203 = vmatpush1.bf16.msra.mxu0 %v1195
    %1204 = vmatprep.subr.bf16.mxu0 0
    %1205 = vmatpush1.bf16.msra.mxu0 %v1196
    %1206 = vmatprep.subr.bf16.mxu0 0
    %1207 = vmatpush1.bf16.msra.mxu0 0
    %1208 = vmatprep.subr.bf16.mxu0 0
    %1209 = vmatpush1.bf16.msra.mxu0 0
    %1210 = vmatprep.subr.bf16.mxu0 0
    %1211 = vmatpush1.bf16.msra.mxu0 0
    %1212 = vmatprep.subr.bf16.mxu0 0
    %1213 = vmatpush1.bf16.msra.mxu0 0
    %1214 = vmatprep.subr.bf16.mxu0 0
    %1215 = vmatpush1.bf16.msra.mxu0 0
    %1216 = vmatprep.subr.bf16.mxu0 0
    %1217 = vmatpush1.bf16.msra.mxu0 0
    %1218 = vmatprep.subr.bf16.mxu0 0
    %1219 = vmatpush1.bf16.msra.mxu0 0
    %1220 = vmatprep.subr.bf16.mxu0 0
    %1221 = vmatpush1.bf16.msra.mxu0 0
    %1222 = vmatprep.subr.bf16.mxu0 0
    %1223 = vmatpush1.bf16.msra.mxu0 0
    %1224 = vmatprep.subr.bf16.mxu0 0
    %1225 = vmatpush1.bf16.msra.mxu0 0
    %1226 = vmatprep.subr.bf16.mxu0 0
    %1227 = vmatpush1.bf16.msra.mxu0 0
    %1228 = vmatprep.subr.bf16.mxu0 0
    %1229 = vmatpush1.bf16.msra.mxu0 0
    %1230 = vmatprep.subr.bf16.mxu0 0
    %1231 = vmatpush1.bf16.msra.mxu0 0
    %1232 = vmatprep.subr.bf16.mxu0 0
    %1233 = vmatpush1.bf16.msra.mxu0 0
    %1234 = vmatprep.mubr.bf16.mxu0 0
    %1235 = vmatmul.mubr.bf16.gmra.mrb[0].mxu0 %v1200
    %v1236 = vpop.f32.mrb[0].mxu0
    %v1237 = vadd.f32 %v1186, %v1236
    %v1238 = vpop.f32.mrb[0].mxu0
    %v1239 = vpop.f32.mrb[0].mxu0
    %v1240 = vadd.f32 %v1186, %v1239
    %v1241 = vpop.f32.mrb[0].mxu0
    %1242 = vdwg.mxu0
    %v1243 = vmax.f32 %v1237, 0.0
    %v1244 = vmax.f32 %v1240, 0.0
    %v1245 = vpack.c.bf16 %v1244, %v1243
    %v1246 = vld [vmem:[%s7] sm:$0xf]
    %v1247 = vld [vmem:[%s7 + $0x4] sm:$0xf]
    %v1248 = vld [vmem:[%s7 + $0x8] sm:$0xf]
    %v1249 = vld [vmem:[%s7 + $0xc] sm:$0xf]
    %v1250 = vld [vmem:[%s7 + $0x10] sm:$0xf]
    %v1251 = vld [vmem:[%s7 + $0x14] sm:$0xf]
    %v1252 = vld [vmem:[%s7 + $0x18] sm:$0xf]
    %v1253 = vld [vmem:[%s7 + $0x1c] sm:$0xf]
    %v1254 = vlaneseq
    %v1255 = vshrl.u32 %v1254, 7
    %v1256 = vsub.s32 3, %v1255
    %v1257 = vrot.slane %v136, %v1256
    %v1266 = vunpack.c.l.b16 %v1246
    %v1267 = vunpack.c.l.b16 %v1247
    %v1268 = vunpack.c.l.b16 %v1248
    %v1269 = vunpack.c.l.b16 %v1249
    %v1270 = vunpack.c.l.b16 %v1250
    %v1271 = vunpack.c.l.b16 %v1251
    %v1272 = vunpack.c.l.b16 %v1252
    %v1273 = vunpack.c.l.b16 %v1253
    %v1274 = vpack.c.b16 %v1267, %v1266
    %v1275 = vpack.c.b16 %v1269, %v1268
    %v1276 = vpack.c.b16 %v1271, %v1270
    %v1277 = vpack.c.b16 %v1273, %v1272
    %vm1282 = vcmask 523264
    %v1284 = vsel %vm1282, %v1245, 0
    %1286 = vmatprep.subr.bf16.mxu0 0
    %1287 = vmatpush1.bf16.msra.mxu0 %v1274
    %1288 = vmatprep.subr.bf16.mxu0 0
    %1289 = vmatpush1.bf16.msra.mxu0 %v1275
    %1290 = vmatprep.subr.bf16.mxu0 0
    %1291 = vmatpush1.bf16.msra.mxu0 %v1276
    %1292 = vmatprep.subr.bf16.mxu0 0
    %1293 = vmatpush1.bf16.msra.mxu0 %v1277
    %1294 = vmatprep.subr.bf16.mxu0 0
    %1295 = vmatpush1.bf16.msra.mxu0 0
    %1296 = vmatprep.subr.bf16.mxu0 0
    %1297 = vmatpush1.bf16.msra.mxu0 0
    %1298 = vmatprep.subr.bf16.mxu0 0
    %1299 = vmatpush1.bf16.msra.mxu0 0
    %1300 = vmatprep.subr.bf16.mxu0 0
    %1301 = vmatpush1.bf16.msra.mxu0 0
    %1302 = vmatprep.subr.bf16.mxu0 0
    %1303 = vmatpush1.bf16.msra.mxu0 0
    %1304 = vmatprep.subr.bf16.mxu0 0
    %1305 = vmatpush1.bf16.msra.mxu0 0
    %1306 = vmatprep.subr.bf16.mxu0 0
    %1307 = vmatpush1.bf16.msra.mxu0 0
    %1308 = vmatprep.subr.bf16.mxu0 0
    %1309 = vmatpush1.bf16.msra.mxu0 0
    %1310 = vmatprep.subr.bf16.mxu0 0
    %1311 = vmatpush1.bf16.msra.mxu0 0
    %1312 = vmatprep.subr.bf16.mxu0 0
    %1313 = vmatpush1.bf16.msra.mxu0 0
    %1314 = vmatprep.subr.bf16.mxu0 0
    %1315 = vmatpush1.bf16.msra.mxu0 0
    %1316 = vmatprep.subr.bf16.mxu0 0
    %1317 = vmatpush1.bf16.msra.mxu0 0
    %1318 = vmatprep.mubr.bf16.mxu0 0
    %1319 = vmatmul.mubr.bf16.gmra.mrb[0].mxu0 %v1284
    %v1320 = vpop.f32.mrb[0].mxu0
    %v1321 = vadd.f32 %v1257, %v1320
    %v1322 = vpop.f32.mrb[0].mxu0
    %v1323 = vpop.f32.mrb[0].mxu0
    %v1324 = vadd.f32 %v1257, %v1323
    %v1325 = vpop.f32.mrb[0].mxu0
    %1326 = vdwg.mxu0
    %v1327 = vadd.f32 %v1138, %v1321
    %v1328 = vadd.f32 %v1139, %v1324
    %s1329 = scalar_lea.vmem %s8, 8
    %v1330 = vld [vmem:[%s1329] sm:$0xff]
    %v1331 = vsel %vm137, %v1327, 0.0
    %1332 = vadd.xlane.f32.xlu0 %v1331
    %v1333 = vpop.xlane.xlu0 %1332
    %v1334 = vsel %vm137, %v1328, 0.0
    %1335 = vadd.xlane.f32.xlu0 %v1334
    %v1336 = vpop.xlane.xlu0 %1335
    %v1337 = vmul.f32 %v1333, %v144
    %v1338 = vmul.f32 %v1336, %v144
    %v1339 = vsub.f32 %v1327, %v1337
    %v1340 = vsub.f32 %v1328, %v1338
    %v1341 = vmul.f32 %v1339, %v1339
    %v1342 = vmul.f32 %v1340, %v1340
    %v1343 = vsel %vm137, %v1341, 0.0
    %1344 = vadd.xlane.f32.xlu0 %v1343
    %v1345 = vpop.xlane.xlu0 %1344
    %v1346 = vsel %vm137, %v1342, 0.0
    %1347 = vadd.xlane.f32.xlu0 %v1346
    %v1348 = vpop.xlane.xlu0 %1347
    %v1349 = vmul.f32 %v1345, %v144
    %v1350 = vmul.f32 %v1348, %v144
    %v1351 = vadd.f32 %v1349, 1e-05
    %v1352 = vadd.f32 %v1350, 1e-05
    %v1353 = vrsqrt.pop %v1351
    %v1354 = vrsqrt.pop %v1352
    %v1355 = vmul.f32 %v1339, %v1353
    %v1356 = vmul.f32 %v1340, %v1354
    %v1357 = vlaneseq
    %v1358 = vshrl.u32 %v1357, 7
    %v1359 = vsub.s32 4, %v1358
    %v1360 = vrot.slane %v1330, %v1359
    %v1361 = vmul.f32 %v1355, %v1360
    %v1362 = vmul.f32 %v1356, %v1360
    %v1363 = vlaneseq
    %v1364 = vshrl.u32 %v1363, 7
    %v1365 = vsub.s32 5, %v1364
    %v1366 = vrot.slane %v1330, %v1365
    %v1367 = vadd.f32 %v1361, %v1366
    %v1368 = vadd.f32 %v1362, %v1366
    %v1369 = vpack.c.bf16 %v1368, %v1367
    %s1370 = scalar_lea.vmem %s4, 16
    %v1371 = vld [vmem:[%s1370] sm:$0xf]
    %v1372 = vld [vmem:[%s1370 + $0x4] sm:$0xf]
    %v1373 = vld [vmem:[%s1370 + $0x8] sm:$0xf]
    %v1374 = vld [vmem:[%s1370 + $0xc] sm:$0xf]
    %v1375 = vlaneseq
    %v1376 = vshrl.u32 %v1375, 7
    %v1377 = vsub.s32 0, %v1376
    %v1378 = vrot.slane %v1330, %v1377
    %v1383 = vunpack.c.l.b16 %v1371
    %v1384 = vunpack.c.l.b16 %v1372
    %v1385 = vunpack.c.l.b16 %v1373
    %v1386 = vunpack.c.l.b16 %v1374
    %v1387 = vpack.c.b16 %v1384, %v1383
    %v1388 = vpack.c.b16 %v1386, %v1385
    %v1392 = vsel %vm137, %v1369, 0
    %1394 = vmatprep.subr.bf16.mxu0 0
    %1395 = vmatpush1.bf16.msra.mxu0 %v1387
    %1396 = vmatprep.subr.bf16.mxu0 0
    %1397 = vmatpush1.bf16.msra.mxu0 %v1388
    %1398 = vmatprep.subr.bf16.mxu0 0
    %1399 = vmatpush1.bf16.msra.mxu0 0
    %1400 = vmatprep.subr.bf16.mxu0 0
    %1401 = vmatpush1.bf16.msra.mxu0 0
    %1402 = vmatprep.subr.bf16.mxu0 0
    %1403 = vmatpush1.bf16.msra.mxu0 0
    %1404 = vmatprep.subr.bf16.mxu0 0
    %1405 = vmatpush1.bf16.msra.mxu0 0
    %1406 = vmatprep.subr.bf16.mxu0 0
    %1407 = vmatpush1.bf16.msra.mxu0 0
    %1408 = vmatprep.subr.bf16.mxu0 0
    %1409 = vmatpush1.bf16.msra.mxu0 0
    %1410 = vmatprep.subr.bf16.mxu0 0
    %1411 = vmatpush1.bf16.msra.mxu0 0
    %1412 = vmatprep.subr.bf16.mxu0 0
    %1413 = vmatpush1.bf16.msra.mxu0 0
    %1414 = vmatprep.subr.bf16.mxu0 0
    %1415 = vmatpush1.bf16.msra.mxu0 0
    %1416 = vmatprep.subr.bf16.mxu0 0
    %1417 = vmatpush1.bf16.msra.mxu0 0
    %1418 = vmatprep.subr.bf16.mxu0 0
    %1419 = vmatpush1.bf16.msra.mxu0 0
    %1420 = vmatprep.subr.bf16.mxu0 0
    %1421 = vmatpush1.bf16.msra.mxu0 0
    %1422 = vmatprep.subr.bf16.mxu0 0
    %1423 = vmatpush1.bf16.msra.mxu0 0
    %1424 = vmatprep.subr.bf16.mxu0 0
    %1425 = vmatpush1.bf16.msra.mxu0 0
    %1426 = vmatprep.mubr.bf16.mxu0 0
    %1427 = vmatmul.mubr.bf16.gmra.mrb[0].mxu0 %v1392
    %v1428 = vpop.f32.mrb[0].mxu0
    %v1429 = vadd.f32 %v1378, %v1428
    %v1430 = vpop.f32.mrb[0].mxu0
    %v1431 = vpop.f32.mrb[0].mxu0
    %v1432 = vadd.f32 %v1378, %v1431
    %v1433 = vpop.f32.mrb[0].mxu0
    %1434 = vdwg.mxu0
    %1437 = vrot.lane.b32.xlu0 %v1429, 96
    %v1438 = vpop.permute.xlu0 %1437
    %1439 = vrot.lane.b32.xlu0 %v1432, 96
    %v1440 = vpop.permute.xlu0 %1439
    %v1441 = vsel %vm248, %v1429, 0
    %v1443 = vsel %vm248, %v1432, 0
    %v1445 = vsel %vm248, %v1438, 0
    %v1447 = vsel %vm248, %v1440, 0
    %1449 = vmatprep.subr.mxu0 0.0
    %1450 = vmatpush1.xpose.msra.mxu0 %v1445
    %1451 = vmatprep.subr.mxu0 0.0
    %1452 = vmatpush1.xpose.msra.mxu0 %v1447
    %1453 = vmatprep.subr.mxu0 0.0
    %1454 = vmatpush1.xpose.msra.mxu0 0.0
    %1455 = vmatprep.subr.mxu0 0.0
    %1456 = vmatpush1.xpose.msra.mxu0 0.0
    %1457 = vmatprep.subr.mxu0 0.0
    %1458 = vmatpush1.xpose.msra.mxu0 0.0
    %1459 = vmatprep.subr.mxu0 0.0
    %1460 = vmatpush1.xpose.msra.mxu0 0.0
    %1461 = vmatprep.subr.mxu0 0.0
    %1462 = vmatpush1.xpose.msra.mxu0 0.0
    %1463 = vmatprep.subr.mxu0 0.0
    %1464 = vmatpush1.xpose.msra.mxu0 0.0
    %1465 = vmatprep.subr.mxu0 0.0
    %1466 = vmatpush1.xpose.msra.mxu0 0.0
    %1467 = vmatprep.subr.mxu0 0.0
    %1468 = vmatpush1.xpose.msra.mxu0 0.0
    %1469 = vmatprep.subr.mxu0 0.0
    %1470 = vmatpush1.xpose.msra.mxu0 0.0
    %1471 = vmatprep.subr.mxu0 0.0
    %1472 = vmatpush1.xpose.msra.mxu0 0.0
    %1473 = vmatprep.subr.mxu0 0.0
    %1474 = vmatpush1.xpose.msra.mxu0 0.0
    %1475 = vmatprep.subr.mxu0 0.0
    %1476 = vmatpush1.xpose.msra.mxu0 0.0
    %1477 = vmatprep.subr.mxu0 0.0
    %1478 = vmatpush1.xpose.msra.mxu0 0.0
    %1479 = vmatprep.subr.mxu0 0.0
    %1480 = vmatpush1.xpose.msra.mxu0 0.0
    %1481 = vmatprep.subr.mxu0 0.0
    %1482 = vmatpush1.xpose.msra.mxu0 0.0
    %1483 = vmatprep.subr.mxu0 0.0
    %1484 = vmatpush1.xpose.msra.mxu0 0.0
    %1485 = vmatprep.subr.mxu0 0.0
    %1486 = vmatpush1.xpose.msra.mxu0 0.0
    %1487 = vmatprep.subr.mxu0 0.0
    %1488 = vmatpush1.xpose.msra.mxu0 0.0
    %1489 = vmatprep.subr.mxu0 0.0
    %1490 = vmatpush1.xpose.msra.mxu0 0.0
    %1491 = vmatprep.subr.mxu0 0.0
    %1492 = vmatpush1.xpose.msra.mxu0 0.0
    %1493 = vmatprep.subr.mxu0 0.0
    %1494 = vmatpush1.xpose.msra.mxu0 0.0
    %1495 = vmatprep.subr.mxu0 0.0
    %1496 = vmatpush1.xpose.msra.mxu0 0.0
    %1497 = vmatprep.subr.mxu0 0.0
    %1498 = vmatpush1.xpose.msra.mxu0 0.0
    %1499 = vmatprep.subr.mxu0 0.0
    %1500 = vmatpush1.xpose.msra.mxu0 0.0
    %1501 = vmatprep.subr.mxu0 0.0
    %1502 = vmatpush1.xpose.msra.mxu0 0.0
    %1503 = vmatprep.subr.mxu0 0.0
    %1504 = vmatpush1.xpose.msra.mxu0 0.0
    %1505 = vmatprep.subr.mxu0 0.0
    %1506 = vmatpush1.xpose.msra.mxu0 0.0
    %1507 = vmatprep.subr.mxu0 0.0
    %1508 = vmatpush1.xpose.msra.mxu0 0.0
    %1509 = vmatprep.subr.mxu0 0.0
    %1510 = vmatpush1.xpose.msra.mxu0 0.0
    %1511 = vmatprep.subr.mxu0 0.0
    %1512 = vmatpush1.xpose.msra.mxu0 0.0
    %1513 = vmatprep.mubr.f32.mxu0 0.0
    %1514 = vmatmul.mubr.f32.gmra.mrb[0].mxu0 %v1441
    %v1515 = vpop.f32.mrb[0].mxu0
    %v1516 = vadd.f32 %v134, %v1515
    %v1517 = vpop.f32.mrb[0].mxu0
    %1518 = vmatprep.mubr.f32.mxu0 0.0
    %1519 = vmatmul.mubr.f32.gmra.mrb[0].mxu0 %v1443
    %v1520 = vpop.f32.mrb[0].mxu0
    %v1521 = vadd.f32 %v135, %v1520
    %v1522 = vpop.f32.mrb[0].mxu0
    %1523 = vdwg.mxu0
    %v1524 = vsel %vm332, %v1516, -inf
    %1525 = vmax.xlane.f32.xlu0 %v1524
    %v1526 = vpop.xlane.xlu0 %1525
    %v1527 = vsel %vm332, %v1521, -inf
    %1528 = vmax.xlane.f32.xlu0 %v1527
    %v1529 = vpop.xlane.xlu0 %1528
    %v1530 = vsub.f32 %v1516, %v1526
    %v1531 = vsub.f32 %v1521, %v1529
    %v1532 = vmul.f32 %v1530, 1.442695
    %v1533 = vpow.pop %v1532
    %v1534 = vmul.f32 %v1531, 1.442695
    %v1535 = vpow.pop %v1534
    %v1536 = vsel %vm332, %v1533, 0.0
    %1537 = vadd.xlane.f32.xlu0 %v1536
    %v1538 = vpop.xlane.xlu0 %1537
    %v1539 = vsel %vm332, %v1535, 0.0
    %1540 = vadd.xlane.f32.xlu0 %v1539
    %v1541 = vpop.xlane.xlu0 %1540
    %v1542 = vrcp.pop %v1538
    %v1543 = vrcp.pop %v1541
    %v1544 = vmul.f32 %v1533, %v1542
    %v1545 = vmul.f32 %v1535, %v1543
    %1546 = vrot.lane.b32.xlu0 %v1429, 64
    %v1547 = vpop.permute.xlu0 %1546
    %1548 = vrot.lane.b32.xlu0 %v1432, 64
    %v1549 = vpop.permute.xlu0 %1548
    %v1553 = vsel %vm332, %v1544, 0
    %v1556 = vsel %vm332, %v1545, 0
    %1558 = vmatprep.subr.mxu0 0.0
    %1559 = vmatpush1.msra.mxu0 %v1547
    %1560 = vmatprep.subr.mxu0 0.0
    %1561 = vmatpush1.msra.mxu0 %v1549
    %1562 = vmatprep.subr.mxu0 0.0
    %1563 = vmatpush1.msra.mxu0 0.0
    %1564 = vmatprep.subr.mxu0 0.0
    %1565 = vmatpush1.msra.mxu0 0.0
    %1566 = vmatprep.subr.mxu0 0.0
    %1567 = vmatpush1.msra.mxu0 0.0
    %1568 = vmatprep.subr.mxu0 0.0
    %1569 = vmatpush1.msra.mxu0 0.0
    %1570 = vmatprep.subr.mxu0 0.0
    %1571 = vmatpush1.msra.mxu0 0.0
    %1572 = vmatprep.subr.mxu0 0.0
    %1573 = vmatpush1.msra.mxu0 0.0
    %1574 = vmatprep.subr.mxu0 0.0
    %1575 = vmatpush1.msra.mxu0 0.0
    %1576 = vmatprep.subr.mxu0 0.0
    %1577 = vmatpush1.msra.mxu0 0.0
    %1578 = vmatprep.subr.mxu0 0.0
    %1579 = vmatpush1.msra.mxu0 0.0
    %1580 = vmatprep.subr.mxu0 0.0
    %1581 = vmatpush1.msra.mxu0 0.0
    %1582 = vmatprep.subr.mxu0 0.0
    %1583 = vmatpush1.msra.mxu0 0.0
    %1584 = vmatprep.subr.mxu0 0.0
    %1585 = vmatpush1.msra.mxu0 0.0
    %1586 = vmatprep.subr.mxu0 0.0
    %1587 = vmatpush1.msra.mxu0 0.0
    %1588 = vmatprep.subr.mxu0 0.0
    %1589 = vmatpush1.msra.mxu0 0.0
    %1590 = vmatprep.subr.mxu0 0.0
    %1591 = vmatpush1.msra.mxu0 0.0
    %1592 = vmatprep.subr.mxu0 0.0
    %1593 = vmatpush1.msra.mxu0 0.0
    %1594 = vmatprep.subr.mxu0 0.0
    %1595 = vmatpush1.msra.mxu0 0.0
    %1596 = vmatprep.subr.mxu0 0.0
    %1597 = vmatpush1.msra.mxu0 0.0
    %1598 = vmatprep.subr.mxu0 0.0
    %1599 = vmatpush1.msra.mxu0 0.0
    %1600 = vmatprep.subr.mxu0 0.0
    %1601 = vmatpush1.msra.mxu0 0.0
    %1602 = vmatprep.subr.mxu0 0.0
    %1603 = vmatpush1.msra.mxu0 0.0
    %1604 = vmatprep.subr.mxu0 0.0
    %1605 = vmatpush1.msra.mxu0 0.0
    %1606 = vmatprep.subr.mxu0 0.0
    %1607 = vmatpush1.msra.mxu0 0.0
    %1608 = vmatprep.subr.mxu0 0.0
    %1609 = vmatpush1.msra.mxu0 0.0
    %1610 = vmatprep.subr.mxu0 0.0
    %1611 = vmatpush1.msra.mxu0 0.0
    %1612 = vmatprep.subr.mxu0 0.0
    %1613 = vmatpush1.msra.mxu0 0.0
    %1614 = vmatprep.subr.mxu0 0.0
    %1615 = vmatpush1.msra.mxu0 0.0
    %1616 = vmatprep.subr.mxu0 0.0
    %1617 = vmatpush1.msra.mxu0 0.0
    %1618 = vmatprep.subr.mxu0 0.0
    %1619 = vmatpush1.msra.mxu0 0.0
    %1620 = vmatprep.subr.mxu0 0.0
    %1621 = vmatpush1.msra.mxu0 0.0
    %1622 = vmatprep.mubr.f32.mxu0 0.0
    %1623 = vmatmul.mubr.f32.gmra.mrb[0].mxu0 %v1553
    %v1624 = vpop.f32.mrb[0].mxu0
    %v1625 = vadd.f32 0.0, %v1624
    %v1626 = vpop.f32.mrb[0].mxu0
    %1627 = vmatprep.mubr.f32.mxu0 0.0
    %1628 = vmatmul.mubr.f32.gmra.mrb[0].mxu0 %v1556
    %v1629 = vpop.f32.mrb[0].mxu0
    %v1630 = vadd.f32 0.0, %v1629
    %v1631 = vpop.f32.mrb[0].mxu0
    %1632 = vdwg.mxu0
    %1633 = vrot.lane.b32.xlu0 %v1429, 120
    %v1634 = vpop.permute.xlu0 %1633
    %1635 = vrot.lane.b32.xlu0 %v1432, 120
    %v1636 = vpop.permute.xlu0 %1635
    %1637 = vrot.lane.b32.xlu0 %v1429, 88
    %v1638 = vpop.permute.xlu0 %1637
    %1639 = vrot.lane.b32.xlu0 %v1432, 88
    %v1640 = vpop.permute.xlu0 %1639
    %v1641 = vsel %vm248, %v1634, 0
    %v1643 = vsel %vm248, %v1636, 0
    %v1645 = vsel %vm248, %v1638, 0
    %v1647 = vsel %vm248, %v1640, 0
    %1649 = vmatprep.subr.mxu0 0.0
    %1650 = vmatpush1.xpose.msra.mxu0 %v1645
    %1651 = vmatprep.subr.mxu0 0.0
    %1652 = vmatpush1.xpose.msra.mxu0 %v1647
    %1653 = vmatprep.subr.mxu0 0.0
    %1654 = vmatpush1.xpose.msra.mxu0 0.0
    %1655 = vmatprep.subr.mxu0 0.0
    %1656 = vmatpush1.xpose.msra.mxu0 0.0
    %1657 = vmatprep.subr.mxu0 0.0
    %1658 = vmatpush1.xpose.msra.mxu0 0.0
    %1659 = vmatprep.subr.mxu0 0.0
    %1660 = vmatpush1.xpose.msra.mxu0 0.0
    %1661 = vmatprep.subr.mxu0 0.0
    %1662 = vmatpush1.xpose.msra.mxu0 0.0
    %1663 = vmatprep.subr.mxu0 0.0
    %1664 = vmatpush1.xpose.msra.mxu0 0.0
    %1665 = vmatprep.subr.mxu0 0.0
    %1666 = vmatpush1.xpose.msra.mxu0 0.0
    %1667 = vmatprep.subr.mxu0 0.0
    %1668 = vmatpush1.xpose.msra.mxu0 0.0
    %1669 = vmatprep.subr.mxu0 0.0
    %1670 = vmatpush1.xpose.msra.mxu0 0.0
    %1671 = vmatprep.subr.mxu0 0.0
    %1672 = vmatpush1.xpose.msra.mxu0 0.0
    %1673 = vmatprep.subr.mxu0 0.0
    %1674 = vmatpush1.xpose.msra.mxu0 0.0
    %1675 = vmatprep.subr.mxu0 0.0
    %1676 = vmatpush1.xpose.msra.mxu0 0.0
    %1677 = vmatprep.subr.mxu0 0.0
    %1678 = vmatpush1.xpose.msra.mxu0 0.0
    %1679 = vmatprep.subr.mxu0 0.0
    %1680 = vmatpush1.xpose.msra.mxu0 0.0
    %1681 = vmatprep.subr.mxu0 0.0
    %1682 = vmatpush1.xpose.msra.mxu0 0.0
    %1683 = vmatprep.subr.mxu0 0.0
    %1684 = vmatpush1.xpose.msra.mxu0 0.0
    %1685 = vmatprep.subr.mxu0 0.0
    %1686 = vmatpush1.xpose.msra.mxu0 0.0
    %1687 = vmatprep.subr.mxu0 0.0
    %1688 = vmatpush1.xpose.msra.mxu0 0.0
    %1689 = vmatprep.subr.mxu0 0.0
    %1690 = vmatpush1.xpose.msra.mxu0 0.0
    %1691 = vmatprep.subr.mxu0 0.0
    %1692 = vmatpush1.xpose.msra.mxu0 0.0
    %1693 = vmatprep.subr.mxu0 0.0
    %1694 = vmatpush1.xpose.msra.mxu0 0.0
    %1695 = vmatprep.subr.mxu0 0.0
    %1696 = vmatpush1.xpose.msra.mxu0 0.0
    %1697 = vmatprep.subr.mxu0 0.0
    %1698 = vmatpush1.xpose.msra.mxu0 0.0
    %1699 = vmatprep.subr.mxu0 0.0
    %1700 = vmatpush1.xpose.msra.mxu0 0.0
    %1701 = vmatprep.subr.mxu0 0.0
    %1702 = vmatpush1.xpose.msra.mxu0 0.0
    %1703 = vmatprep.subr.mxu0 0.0
    %1704 = vmatpush1.xpose.msra.mxu0 0.0
    %1705 = vmatprep.subr.mxu0 0.0
    %1706 = vmatpush1.xpose.msra.mxu0 0.0
    %1707 = vmatprep.subr.mxu0 0.0
    %1708 = vmatpush1.xpose.msra.mxu0 0.0
    %1709 = vmatprep.subr.mxu0 0.0
    %1710 = vmatpush1.xpose.msra.mxu0 0.0
    %1711 = vmatprep.subr.mxu0 0.0
    %1712 = vmatpush1.xpose.msra.mxu0 0.0
    %1713 = vmatprep.mubr.f32.mxu0 0.0
    %1714 = vmatmul.mubr.f32.gmra.mrb[0].mxu0 %v1641
    %v1715 = vpop.f32.mrb[0].mxu0
    %v1716 = vadd.f32 %v134, %v1715
    %v1717 = vpop.f32.mrb[0].mxu0
    %1718 = vmatprep.mubr.f32.mxu0 0.0
    %1719 = vmatmul.mubr.f32.gmra.mrb[0].mxu0 %v1643
    %v1720 = vpop.f32.mrb[0].mxu0
    %v1721 = vadd.f32 %v135, %v1720
    %v1722 = vpop.f32.mrb[0].mxu0
    %1723 = vdwg.mxu0
    %v1724 = vsel %vm332, %v1716, -inf
    %1725 = vmax.xlane.f32.xlu0 %v1724
    %v1726 = vpop.xlane.xlu0 %1725
    %v1727 = vsel %vm332, %v1721, -inf
    %1728 = vmax.xlane.f32.xlu0 %v1727
    %v1729 = vpop.xlane.xlu0 %1728
    %v1730 = vsub.f32 %v1716, %v1726
    %v1731 = vsub.f32 %v1721, %v1729
    %v1732 = vmul.f32 %v1730, 1.442695
    %v1733 = vpow.pop %v1732
    %v1734 = vmul.f32 %v1731, 1.442695
    %v1735 = vpow.pop %v1734
    %v1736 = vsel %vm332, %v1733, 0.0
    %1737 = vadd.xlane.f32.xlu0 %v1736
    %v1738 = vpop.xlane.xlu0 %1737
    %v1739 = vsel %vm332, %v1735, 0.0
    %1740 = vadd.xlane.f32.xlu0 %v1739
    %v1741 = vpop.xlane.xlu0 %1740
    %v1742 = vrcp.pop %v1738
    %v1743 = vrcp.pop %v1741
    %v1744 = vmul.f32 %v1733, %v1742
    %v1745 = vmul.f32 %v1735, %v1743
    %1746 = vrot.lane.b32.xlu0 %v1429, 56
    %v1747 = vpop.permute.xlu0 %1746
    %1748 = vrot.lane.b32.xlu0 %v1432, 56
    %v1749 = vpop.permute.xlu0 %1748
    %v1753 = vsel %vm332, %v1744, 0
    %v1756 = vsel %vm332, %v1745, 0
    %1758 = vmatprep.subr.mxu0 0.0
    %1759 = vmatpush1.msra.mxu0 %v1747
    %1760 = vmatprep.subr.mxu0 0.0
    %1761 = vmatpush1.msra.mxu0 %v1749
    %1762 = vmatprep.subr.mxu0 0.0
    %1763 = vmatpush1.msra.mxu0 0.0
    %1764 = vmatprep.subr.mxu0 0.0
    %1765 = vmatpush1.msra.mxu0 0.0
    %1766 = vmatprep.subr.mxu0 0.0
    %1767 = vmatpush1.msra.mxu0 0.0
    %1768 = vmatprep.subr.mxu0 0.0
    %1769 = vmatpush1.msra.mxu0 0.0
    %1770 = vmatprep.subr.mxu0 0.0
    %1771 = vmatpush1.msra.mxu0 0.0
    %1772 = vmatprep.subr.mxu0 0.0
    %1773 = vmatpush1.msra.mxu0 0.0
    %1774 = vmatprep.subr.mxu0 0.0
    %1775 = vmatpush1.msra.mxu0 0.0
    %1776 = vmatprep.subr.mxu0 0.0
    %1777 = vmatpush1.msra.mxu0 0.0
    %1778 = vmatprep.subr.mxu0 0.0
    %1779 = vmatpush1.msra.mxu0 0.0
    %1780 = vmatprep.subr.mxu0 0.0
    %1781 = vmatpush1.msra.mxu0 0.0
    %1782 = vmatprep.subr.mxu0 0.0
    %1783 = vmatpush1.msra.mxu0 0.0
    %1784 = vmatprep.subr.mxu0 0.0
    %1785 = vmatpush1.msra.mxu0 0.0
    %1786 = vmatprep.subr.mxu0 0.0
    %1787 = vmatpush1.msra.mxu0 0.0
    %1788 = vmatprep.subr.mxu0 0.0
    %1789 = vmatpush1.msra.mxu0 0.0
    %1790 = vmatprep.subr.mxu0 0.0
    %1791 = vmatpush1.msra.mxu0 0.0
    %1792 = vmatprep.subr.mxu0 0.0
    %1793 = vmatpush1.msra.mxu0 0.0
    %1794 = vmatprep.subr.mxu0 0.0
    %1795 = vmatpush1.msra.mxu0 0.0
    %1796 = vmatprep.subr.mxu0 0.0
    %1797 = vmatpush1.msra.mxu0 0.0
    %1798 = vmatprep.subr.mxu0 0.0
    %1799 = vmatpush1.msra.mxu0 0.0
    %1800 = vmatprep.subr.mxu0 0.0
    %1801 = vmatpush1.msra.mxu0 0.0
    %1802 = vmatprep.subr.mxu0 0.0
    %1803 = vmatpush1.msra.mxu0 0.0
    %1804 = vmatprep.subr.mxu0 0.0
    %1805 = vmatpush1.msra.mxu0 0.0
    %1806 = vmatprep.subr.mxu0 0.0
    %1807 = vmatpush1.msra.mxu0 0.0
    %1808 = vmatprep.subr.mxu0 0.0
    %1809 = vmatpush1.msra.mxu0 0.0
    %1810 = vmatprep.subr.mxu0 0.0
    %1811 = vmatpush1.msra.mxu0 0.0
    %1812 = vmatprep.subr.mxu0 0.0
    %1813 = vmatpush1.msra.mxu0 0.0
    %1814 = vmatprep.subr.mxu0 0.0
    %1815 = vmatpush1.msra.mxu0 0.0
    %1816 = vmatprep.subr.mxu0 0.0
    %1817 = vmatpush1.msra.mxu0 0.0
    %1818 = vmatprep.subr.mxu0 0.0
    %1819 = vmatpush1.msra.mxu0 0.0
    %1820 = vmatprep.subr.mxu0 0.0
    %1821 = vmatpush1.msra.mxu0 0.0
    %1822 = vmatprep.mubr.f32.mxu0 0.0
    %1823 = vmatmul.mubr.f32.gmra.mrb[0].mxu0 %v1753
    %v1824 = vpop.f32.mrb[0].mxu0
    %v1825 = vadd.f32 0.0, %v1824
    %v1826 = vpop.f32.mrb[0].mxu0
    %1827 = vmatprep.mubr.f32.mxu0 0.0
    %1828 = vmatmul.mubr.f32.gmra.mrb[0].mxu0 %v1756
    %v1829 = vpop.f32.mrb[0].mxu0
    %v1830 = vadd.f32 0.0, %v1829
    %v1831 = vpop.f32.mrb[0].mxu0
    %1832 = vdwg.mxu0
    %1833 = vrot.lane.b32.xlu0 %v1429, 112
    %v1834 = vpop.permute.xlu0 %1833
    %1835 = vrot.lane.b32.xlu0 %v1432, 112
    %v1836 = vpop.permute.xlu0 %1835
    %1837 = vrot.lane.b32.xlu0 %v1429, 80
    %v1838 = vpop.permute.xlu0 %1837
    %1839 = vrot.lane.b32.xlu0 %v1432, 80
    %v1840 = vpop.permute.xlu0 %1839
    %v1841 = vsel %vm248, %v1834, 0
    %v1843 = vsel %vm248, %v1836, 0
    %v1845 = vsel %vm248, %v1838, 0
    %v1847 = vsel %vm248, %v1840, 0
    %1849 = vmatprep.subr.mxu0 0.0
    %1850 = vmatpush1.xpose.msra.mxu0 %v1845
    %1851 = vmatprep.subr.mxu0 0.0
    %1852 = vmatpush1.xpose.msra.mxu0 %v1847
    %1853 = vmatprep.subr.mxu0 0.0
    %1854 = vmatpush1.xpose.msra.mxu0 0.0
    %1855 = vmatprep.subr.mxu0 0.0
    %1856 = vmatpush1.xpose.msra.mxu0 0.0
    %1857 = vmatprep.subr.mxu0 0.0
    %1858 = vmatpush1.xpose.msra.mxu0 0.0
    %1859 = vmatprep.subr.mxu0 0.0
    %1860 = vmatpush1.xpose.msra.mxu0 0.0
    %1861 = vmatprep.subr.mxu0 0.0
    %1862 = vmatpush1.xpose.msra.mxu0 0.0
    %1863 = vmatprep.subr.mxu0 0.0
    %1864 = vmatpush1.xpose.msra.mxu0 0.0
    %1865 = vmatprep.subr.mxu0 0.0
    %1866 = vmatpush1.xpose.msra.mxu0 0.0
    %1867 = vmatprep.subr.mxu0 0.0
    %1868 = vmatpush1.xpose.msra.mxu0 0.0
    %1869 = vmatprep.subr.mxu0 0.0
    %1870 = vmatpush1.xpose.msra.mxu0 0.0
    %1871 = vmatprep.subr.mxu0 0.0
    %1872 = vmatpush1.xpose.msra.mxu0 0.0
    %1873 = vmatprep.subr.mxu0 0.0
    %1874 = vmatpush1.xpose.msra.mxu0 0.0
    %1875 = vmatprep.subr.mxu0 0.0
    %1876 = vmatpush1.xpose.msra.mxu0 0.0
    %1877 = vmatprep.subr.mxu0 0.0
    %1878 = vmatpush1.xpose.msra.mxu0 0.0
    %1879 = vmatprep.subr.mxu0 0.0
    %1880 = vmatpush1.xpose.msra.mxu0 0.0
    %1881 = vmatprep.subr.mxu0 0.0
    %1882 = vmatpush1.xpose.msra.mxu0 0.0
    %1883 = vmatprep.subr.mxu0 0.0
    %1884 = vmatpush1.xpose.msra.mxu0 0.0
    %1885 = vmatprep.subr.mxu0 0.0
    %1886 = vmatpush1.xpose.msra.mxu0 0.0
    %1887 = vmatprep.subr.mxu0 0.0
    %1888 = vmatpush1.xpose.msra.mxu0 0.0
    %1889 = vmatprep.subr.mxu0 0.0
    %1890 = vmatpush1.xpose.msra.mxu0 0.0
    %1891 = vmatprep.subr.mxu0 0.0
    %1892 = vmatpush1.xpose.msra.mxu0 0.0
    %1893 = vmatprep.subr.mxu0 0.0
    %1894 = vmatpush1.xpose.msra.mxu0 0.0
    %1895 = vmatprep.subr.mxu0 0.0
    %1896 = vmatpush1.xpose.msra.mxu0 0.0
    %1897 = vmatprep.subr.mxu0 0.0
    %1898 = vmatpush1.xpose.msra.mxu0 0.0
    %1899 = vmatprep.subr.mxu0 0.0
    %1900 = vmatpush1.xpose.msra.mxu0 0.0
    %1901 = vmatprep.subr.mxu0 0.0
    %1902 = vmatpush1.xpose.msra.mxu0 0.0
    %1903 = vmatprep.subr.mxu0 0.0
    %1904 = vmatpush1.xpose.msra.mxu0 0.0
    %1905 = vmatprep.subr.mxu0 0.0
    %1906 = vmatpush1.xpose.msra.mxu0 0.0
    %1907 = vmatprep.subr.mxu0 0.0
    %1908 = vmatpush1.xpose.msra.mxu0 0.0
    %1909 = vmatprep.subr.mxu0 0.0
    %1910 = vmatpush1.xpose.msra.mxu0 0.0
    %1911 = vmatprep.subr.mxu0 0.0
    %1912 = vmatpush1.xpose.msra.mxu0 0.0
    %1913 = vmatprep.mubr.f32.mxu0 0.0
    %1914 = vmatmul.mubr.f32.gmra.mrb[0].mxu0 %v1841
    %v1915 = vpop.f32.mrb[0].mxu0
    %v1916 = vadd.f32 %v134, %v1915
    %v1917 = vpop.f32.mrb[0].mxu0
    %1918 = vmatprep.mubr.f32.mxu0 0.0
    %1919 = vmatmul.mubr.f32.gmra.mrb[0].mxu0 %v1843
    %v1920 = vpop.f32.mrb[0].mxu0
    %v1921 = vadd.f32 %v135, %v1920
    %v1922 = vpop.f32.mrb[0].mxu0
    %1923 = vdwg.mxu0
    %v1924 = vsel %vm332, %v1916, -inf
    %1925 = vmax.xlane.f32.xlu0 %v1924
    %v1926 = vpop.xlane.xlu0 %1925
    %v1927 = vsel %vm332, %v1921, -inf
    %1928 = vmax.xlane.f32.xlu0 %v1927
    %v1929 = vpop.xlane.xlu0 %1928
    %v1930 = vsub.f32 %v1916, %v1926
    %v1931 = vsub.f32 %v1921, %v1929
    %v1932 = vmul.f32 %v1930, 1.442695
    %v1933 = vpow.pop %v1932
    %v1934 = vmul.f32 %v1931, 1.442695
    %v1935 = vpow.pop %v1934
    %v1936 = vsel %vm332, %v1933, 0.0
    %1937 = vadd.xlane.f32.xlu0 %v1936
    %v1938 = vpop.xlane.xlu0 %1937
    %v1939 = vsel %vm332, %v1935, 0.0
    %1940 = vadd.xlane.f32.xlu0 %v1939
    %v1941 = vpop.xlane.xlu0 %1940
    %v1942 = vrcp.pop %v1938
    %v1943 = vrcp.pop %v1941
    %v1944 = vmul.f32 %v1933, %v1942
    %v1945 = vmul.f32 %v1935, %v1943
    %1946 = vrot.lane.b32.xlu0 %v1429, 48
    %v1947 = vpop.permute.xlu0 %1946
    %1948 = vrot.lane.b32.xlu0 %v1432, 48
    %v1949 = vpop.permute.xlu0 %1948
    %v1953 = vsel %vm332, %v1944, 0
    %v1956 = vsel %vm332, %v1945, 0
    %1958 = vmatprep.subr.mxu0 0.0
    %1959 = vmatpush1.msra.mxu0 %v1947
    %1960 = vmatprep.subr.mxu0 0.0
    %1961 = vmatpush1.msra.mxu0 %v1949
    %1962 = vmatprep.subr.mxu0 0.0
    %1963 = vmatpush1.msra.mxu0 0.0
    %1964 = vmatprep.subr.mxu0 0.0
    %1965 = vmatpush1.msra.mxu0 0.0
    %1966 = vmatprep.subr.mxu0 0.0
    %1967 = vmatpush1.msra.mxu0 0.0
    %1968 = vmatprep.subr.mxu0 0.0
    %1969 = vmatpush1.msra.mxu0 0.0
    %1970 = vmatprep.subr.mxu0 0.0
    %1971 = vmatpush1.msra.mxu0 0.0
    %1972 = vmatprep.subr.mxu0 0.0
    %1973 = vmatpush1.msra.mxu0 0.0
    %1974 = vmatprep.subr.mxu0 0.0
    %1975 = vmatpush1.msra.mxu0 0.0
    %1976 = vmatprep.subr.mxu0 0.0
    %1977 = vmatpush1.msra.mxu0 0.0
    %1978 = vmatprep.subr.mxu0 0.0
    %1979 = vmatpush1.msra.mxu0 0.0
    %1980 = vmatprep.subr.mxu0 0.0
    %1981 = vmatpush1.msra.mxu0 0.0
    %1982 = vmatprep.subr.mxu0 0.0
    %1983 = vmatpush1.msra.mxu0 0.0
    %1984 = vmatprep.subr.mxu0 0.0
    %1985 = vmatpush1.msra.mxu0 0.0
    %1986 = vmatprep.subr.mxu0 0.0
    %1987 = vmatpush1.msra.mxu0 0.0
    %1988 = vmatprep.subr.mxu0 0.0
    %1989 = vmatpush1.msra.mxu0 0.0
    %1990 = vmatprep.subr.mxu0 0.0
    %1991 = vmatpush1.msra.mxu0 0.0
    %1992 = vmatprep.subr.mxu0 0.0
    %1993 = vmatpush1.msra.mxu0 0.0
    %1994 = vmatprep.subr.mxu0 0.0
    %1995 = vmatpush1.msra.mxu0 0.0
    %1996 = vmatprep.subr.mxu0 0.0
    %1997 = vmatpush1.msra.mxu0 0.0
    %1998 = vmatprep.subr.mxu0 0.0
    %1999 = vmatpush1.msra.mxu0 0.0
    %2000 = vmatprep.subr.mxu0 0.0
    %2001 = vmatpush1.msra.mxu0 0.0
    %2002 = vmatprep.subr.mxu0 0.0
    %2003 = vmatpush1.msra.mxu0 0.0
    %2004 = vmatprep.subr.mxu0 0.0
    %2005 = vmatpush1.msra.mxu0 0.0
    %2006 = vmatprep.subr.mxu0 0.0
    %2007 = vmatpush1.msra.mxu0 0.0
    %2008 = vmatprep.subr.mxu0 0.0
    %2009 = vmatpush1.msra.mxu0 0.0
    %2010 = vmatprep.subr.mxu0 0.0
    %2011 = vmatpush1.msra.mxu0 0.0
    %2012 = vmatprep.subr.mxu0 0.0
    %2013 = vmatpush1.msra.mxu0 0.0
    %2014 = vmatprep.subr.mxu0 0.0
    %2015 = vmatpush1.msra.mxu0 0.0
    %2016 = vmatprep.subr.mxu0 0.0
    %2017 = vmatpush1.msra.mxu0 0.0
    %2018 = vmatprep.subr.mxu0 0.0
    %2019 = vmatpush1.msra.mxu0 0.0
    %2020 = vmatprep.subr.mxu0 0.0
    %2021 = vmatpush1.msra.mxu0 0.0
    %2022 = vmatprep.mubr.f32.mxu0 0.0
    %2023 = vmatmul.mubr.f32.gmra.mrb[0].mxu0 %v1953
    %v2024 = vpop.f32.mrb[0].mxu0
    %v2025 = vadd.f32 0.0, %v2024
    %v2026 = vpop.f32.mrb[0].mxu0
    %2027 = vmatprep.mubr.f32.mxu0 0.0
    %2028 = vmatmul.mubr.f32.gmra.mrb[0].mxu0 %v1956
    %v2029 = vpop.f32.mrb[0].mxu0
    %v2030 = vadd.f32 0.0, %v2029
    %v2031 = vpop.f32.mrb[0].mxu0
    %2032 = vdwg.mxu0
    %2033 = vrot.lane.b32.xlu0 %v1429, 104
    %v2034 = vpop.permute.xlu0 %2033
    %2035 = vrot.lane.b32.xlu0 %v1432, 104
    %v2036 = vpop.permute.xlu0 %2035
    %2037 = vrot.lane.b32.xlu0 %v1429, 72
    %v2038 = vpop.permute.xlu0 %2037
    %2039 = vrot.lane.b32.xlu0 %v1432, 72
    %v2040 = vpop.permute.xlu0 %2039
    %v2041 = vsel %vm248, %v2034, 0
    %v2043 = vsel %vm248, %v2036, 0
    %v2045 = vsel %vm248, %v2038, 0
    %v2047 = vsel %vm248, %v2040, 0
    %2049 = vmatprep.subr.mxu0 0.0
    %2050 = vmatpush1.xpose.msra.mxu0 %v2045
    %2051 = vmatprep.subr.mxu0 0.0
    %2052 = vmatpush1.xpose.msra.mxu0 %v2047
    %2053 = vmatprep.subr.mxu0 0.0
    %2054 = vmatpush1.xpose.msra.mxu0 0.0
    %2055 = vmatprep.subr.mxu0 0.0
    %2056 = vmatpush1.xpose.msra.mxu0 0.0
    %2057 = vmatprep.subr.mxu0 0.0
    %2058 = vmatpush1.xpose.msra.mxu0 0.0
    %2059 = vmatprep.subr.mxu0 0.0
    %2060 = vmatpush1.xpose.msra.mxu0 0.0
    %2061 = vmatprep.subr.mxu0 0.0
    %2062 = vmatpush1.xpose.msra.mxu0 0.0
    %2063 = vmatprep.subr.mxu0 0.0
    %2064 = vmatpush1.xpose.msra.mxu0 0.0
    %2065 = vmatprep.subr.mxu0 0.0
    %2066 = vmatpush1.xpose.msra.mxu0 0.0
    %2067 = vmatprep.subr.mxu0 0.0
    %2068 = vmatpush1.xpose.msra.mxu0 0.0
    %2069 = vmatprep.subr.mxu0 0.0
    %2070 = vmatpush1.xpose.msra.mxu0 0.0
    %2071 = vmatprep.subr.mxu0 0.0
    %2072 = vmatpush1.xpose.msra.mxu0 0.0
    %2073 = vmatprep.subr.mxu0 0.0
    %2074 = vmatpush1.xpose.msra.mxu0 0.0
    %2075 = vmatprep.subr.mxu0 0.0
    %2076 = vmatpush1.xpose.msra.mxu0 0.0
    %2077 = vmatprep.subr.mxu0 0.0
    %2078 = vmatpush1.xpose.msra.mxu0 0.0
    %2079 = vmatprep.subr.mxu0 0.0
    %2080 = vmatpush1.xpose.msra.mxu0 0.0
    %2081 = vmatprep.subr.mxu0 0.0
    %2082 = vmatpush1.xpose.msra.mxu0 0.0
    %2083 = vmatprep.subr.mxu0 0.0
    %2084 = vmatpush1.xpose.msra.mxu0 0.0
    %2085 = vmatprep.subr.mxu0 0.0
    %2086 = vmatpush1.xpose.msra.mxu0 0.0
    %2087 = vmatprep.subr.mxu0 0.0
    %2088 = vmatpush1.xpose.msra.mxu0 0.0
    %2089 = vmatprep.subr.mxu0 0.0
    %2090 = vmatpush1.xpose.msra.mxu0 0.0
    %2091 = vmatprep.subr.mxu0 0.0
    %2092 = vmatpush1.xpose.msra.mxu0 0.0
    %2093 = vmatprep.subr.mxu0 0.0
    %2094 = vmatpush1.xpose.msra.mxu0 0.0
    %2095 = vmatprep.subr.mxu0 0.0
    %2096 = vmatpush1.xpose.msra.mxu0 0.0
    %2097 = vmatprep.subr.mxu0 0.0
    %2098 = vmatpush1.xpose.msra.mxu0 0.0
    %2099 = vmatprep.subr.mxu0 0.0
    %2100 = vmatpush1.xpose.msra.mxu0 0.0
    %2101 = vmatprep.subr.mxu0 0.0
    %2102 = vmatpush1.xpose.msra.mxu0 0.0
    %2103 = vmatprep.subr.mxu0 0.0
    %2104 = vmatpush1.xpose.msra.mxu0 0.0
    %2105 = vmatprep.subr.mxu0 0.0
    %2106 = vmatpush1.xpose.msra.mxu0 0.0
    %2107 = vmatprep.subr.mxu0 0.0
    %2108 = vmatpush1.xpose.msra.mxu0 0.0
    %2109 = vmatprep.subr.mxu0 0.0
    %2110 = vmatpush1.xpose.msra.mxu0 0.0
    %2111 = vmatprep.subr.mxu0 0.0
    %2112 = vmatpush1.xpose.msra.mxu0 0.0
    %2113 = vmatprep.mubr.f32.mxu0 0.0
    %2114 = vmatmul.mubr.f32.gmra.mrb[0].mxu0 %v2041
    %v2115 = vpop.f32.mrb[0].mxu0
    %v2116 = vadd.f32 %v134, %v2115
    %v2117 = vpop.f32.mrb[0].mxu0
    %2118 = vmatprep.mubr.f32.mxu0 0.0
    %2119 = vmatmul.mubr.f32.gmra.mrb[0].mxu0 %v2043
    %v2120 = vpop.f32.mrb[0].mxu0
    %v2121 = vadd.f32 %v135, %v2120
    %v2122 = vpop.f32.mrb[0].mxu0
    %2123 = vdwg.mxu0
    %v2124 = vsel %vm332, %v2116, -inf
    %2125 = vmax.xlane.f32.xlu0 %v2124
    %v2126 = vpop.xlane.xlu0 %2125
    %v2127 = vsel %vm332, %v2121, -inf
    %2128 = vmax.xlane.f32.xlu0 %v2127
    %v2129 = vpop.xlane.xlu0 %2128
    %v2130 = vsub.f32 %v2116, %v2126
    %v2131 = vsub.f32 %v2121, %v2129
    %v2132 = vmul.f32 %v2130, 1.442695
    %v2133 = vpow.pop %v2132
    %v2134 = vmul.f32 %v2131, 1.442695
    %v2135 = vpow.pop %v2134
    %v2136 = vsel %vm332, %v2133, 0.0
    %2137 = vadd.xlane.f32.xlu0 %v2136
    %v2138 = vpop.xlane.xlu0 %2137
    %v2139 = vsel %vm332, %v2135, 0.0
    %2140 = vadd.xlane.f32.xlu0 %v2139
    %v2141 = vpop.xlane.xlu0 %2140
    %v2142 = vrcp.pop %v2138
    %v2143 = vrcp.pop %v2141
    %v2144 = vmul.f32 %v2133, %v2142
    %v2145 = vmul.f32 %v2135, %v2143
    %2146 = vrot.lane.b32.xlu0 %v1429, 40
    %v2147 = vpop.permute.xlu0 %2146
    %2148 = vrot.lane.b32.xlu0 %v1432, 40
    %v2149 = vpop.permute.xlu0 %2148
    %v2153 = vsel %vm332, %v2144, 0
    %v2156 = vsel %vm332, %v2145, 0
    %2158 = vmatprep.subr.mxu0 0.0
    %2159 = vmatpush1.msra.mxu0 %v2147
    %2160 = vmatprep.subr.mxu0 0.0
    %2161 = vmatpush1.msra.mxu0 %v2149
    %2162 = vmatprep.subr.mxu0 0.0
    %2163 = vmatpush1.msra.mxu0 0.0
    %2164 = vmatprep.subr.mxu0 0.0
    %2165 = vmatpush1.msra.mxu0 0.0
    %2166 = vmatprep.subr.mxu0 0.0
    %2167 = vmatpush1.msra.mxu0 0.0
    %2168 = vmatprep.subr.mxu0 0.0
    %2169 = vmatpush1.msra.mxu0 0.0
    %2170 = vmatprep.subr.mxu0 0.0
    %2171 = vmatpush1.msra.mxu0 0.0
    %2172 = vmatprep.subr.mxu0 0.0
    %2173 = vmatpush1.msra.mxu0 0.0
    %2174 = vmatprep.subr.mxu0 0.0
    %2175 = vmatpush1.msra.mxu0 0.0
    %2176 = vmatprep.subr.mxu0 0.0
    %2177 = vmatpush1.msra.mxu0 0.0
    %2178 = vmatprep.subr.mxu0 0.0
    %2179 = vmatpush1.msra.mxu0 0.0
    %2180 = vmatprep.subr.mxu0 0.0
    %2181 = vmatpush1.msra.mxu0 0.0
    %2182 = vmatprep.subr.mxu0 0.0
    %2183 = vmatpush1.msra.mxu0 0.0
    %2184 = vmatprep.subr.mxu0 0.0
    %2185 = vmatpush1.msra.mxu0 0.0
    %2186 = vmatprep.subr.mxu0 0.0
    %2187 = vmatpush1.msra.mxu0 0.0
    %2188 = vmatprep.subr.mxu0 0.0
    %2189 = vmatpush1.msra.mxu0 0.0
    %2190 = vmatprep.subr.mxu0 0.0
    %2191 = vmatpush1.msra.mxu0 0.0
    %2192 = vmatprep.subr.mxu0 0.0
    %2193 = vmatpush1.msra.mxu0 0.0
    %2194 = vmatprep.subr.mxu0 0.0
    %2195 = vmatpush1.msra.mxu0 0.0
    %2196 = vmatprep.subr.mxu0 0.0
    %2197 = vmatpush1.msra.mxu0 0.0
    %2198 = vmatprep.subr.mxu0 0.0
    %2199 = vmatpush1.msra.mxu0 0.0
    %2200 = vmatprep.subr.mxu0 0.0
    %2201 = vmatpush1.msra.mxu0 0.0
    %2202 = vmatprep.subr.mxu0 0.0
    %2203 = vmatpush1.msra.mxu0 0.0
    %2204 = vmatprep.subr.mxu0 0.0
    %2205 = vmatpush1.msra.mxu0 0.0
    %2206 = vmatprep.subr.mxu0 0.0
    %2207 = vmatpush1.msra.mxu0 0.0
    %2208 = vmatprep.subr.mxu0 0.0
    %2209 = vmatpush1.msra.mxu0 0.0
    %2210 = vmatprep.subr.mxu0 0.0
    %2211 = vmatpush1.msra.mxu0 0.0
    %2212 = vmatprep.subr.mxu0 0.0
    %2213 = vmatpush1.msra.mxu0 0.0
    %2214 = vmatprep.subr.mxu0 0.0
    %2215 = vmatpush1.msra.mxu0 0.0
    %2216 = vmatprep.subr.mxu0 0.0
    %2217 = vmatpush1.msra.mxu0 0.0
    %2218 = vmatprep.subr.mxu0 0.0
    %2219 = vmatpush1.msra.mxu0 0.0
    %2220 = vmatprep.subr.mxu0 0.0
    %2221 = vmatpush1.msra.mxu0 0.0
    %2222 = vmatprep.mubr.f32.mxu0 0.0
    %2223 = vmatmul.mubr.f32.gmra.mrb[0].mxu0 %v2153
    %v2224 = vpop.f32.mrb[0].mxu0
    %v2225 = vadd.f32 0.0, %v2224
    %v2226 = vpop.f32.mrb[0].mxu0
    %2227 = vmatprep.mubr.f32.mxu0 0.0
    %2228 = vmatmul.mubr.f32.gmra.mrb[0].mxu0 %v2156
    %v2229 = vpop.f32.mrb[0].mxu0
    %v2230 = vadd.f32 0.0, %v2229
    %v2231 = vpop.f32.mrb[0].mxu0
    %2232 = vdwg.mxu0
    %2235 = vrot.lane.b32.xlu0 %v1825, 8
    %v2236 = vpop.permute.xlu0 %2235
    %2237 = vrot.lane.b32.xlu0 %v1830, 8
    %v2238 = vpop.permute.xlu0 %2237
    %2243 = vrot.lane.b32.xlu0 %v2025, 16
    %v2244 = vpop.permute.xlu0 %2243
    %2245 = vrot.lane.b32.xlu0 %v2030, 16
    %v2246 = vpop.permute.xlu0 %2245
    %2251 = vrot.lane.b32.xlu0 %v2225, 24
    %v2252 = vpop.permute.xlu0 %2251
    %2253 = vrot.lane.b32.xlu0 %v2230, 24
    %v2254 = vpop.permute.xlu0 %2253
    %v2257 = vsel %vm248, %v1625, %v2236
    %v2258 = vsel %vm248, %v1630, %v2238
    %v2259 = vsel %vm332, %v2257, %v2244
    %v2260 = vsel %vm332, %v2258, %v2246
    %v2261 = vsel %vm1070, %v2259, %v2252
    %v2262 = vsel %vm1070, %v2260, %v2254
    %v2263 = vpack.c.bf16 %v2262, %v2261
    %s2264 = scalar_lea.vmem %s5, 16
    %v2265 = vld [vmem:[%s2264] sm:$0xf]
    %v2266 = vld [vmem:[%s2264 + $0x4] sm:$0xf]
    %v2267 = vld [vmem:[%s2264 + $0x8] sm:$0xf]
    %v2268 = vld [vmem:[%s2264 + $0xc] sm:$0xf]
    %v2269 = vlaneseq
    %v2270 = vshrl.u32 %v2269, 7
    %v2271 = vsub.s32 1, %v2270
    %v2272 = vrot.slane %v1330, %v2271
    %v2277 = vunpack.c.l.b16 %v2265
    %v2278 = vunpack.c.l.b16 %v2266
    %v2279 = vunpack.c.l.b16 %v2267
    %v2280 = vunpack.c.l.b16 %v2268
    %v2281 = vpack.c.b16 %v2278, %v2277
    %v2282 = vpack.c.b16 %v2280, %v2279
    %v2286 = vsel %vm137, %v2263, 0
    %2288 = vmatprep.subr.bf16.mxu0 0
    %2289 = vmatpush1.bf16.msra.mxu0 %v2281
    %2290 = vmatprep.subr.bf16.mxu0 0
    %2291 = vmatpush1.bf16.msra.mxu0 %v2282
    %2292 = vmatprep.subr.bf16.mxu0 0
    %2293 = vmatpush1.bf16.msra.mxu0 0
    %2294 = vmatprep.subr.bf16.mxu0 0
    %2295 = vmatpush1.bf16.msra.mxu0 0
    %2296 = vmatprep.subr.bf16.mxu0 0
    %2297 = vmatpush1.bf16.msra.mxu0 0
    %2298 = vmatprep.subr.bf16.mxu0 0
    %2299 = vmatpush1.bf16.msra.mxu0 0
    %2300 = vmatprep.subr.bf16.mxu0 0
    %2301 = vmatpush1.bf16.msra.mxu0 0
    %2302 = vmatprep.subr.bf16.mxu0 0
    %2303 = vmatpush1.bf16.msra.mxu0 0
    %2304 = vmatprep.subr.bf16.mxu0 0
    %2305 = vmatpush1.bf16.msra.mxu0 0
    %2306 = vmatprep.subr.bf16.mxu0 0
    %2307 = vmatpush1.bf16.msra.mxu0 0
    %2308 = vmatprep.subr.bf16.mxu0 0
    %2309 = vmatpush1.bf16.msra.mxu0 0
    %2310 = vmatprep.subr.bf16.mxu0 0
    %2311 = vmatpush1.bf16.msra.mxu0 0
    %2312 = vmatprep.subr.bf16.mxu0 0
    %2313 = vmatpush1.bf16.msra.mxu0 0
    %2314 = vmatprep.subr.bf16.mxu0 0
    %2315 = vmatpush1.bf16.msra.mxu0 0
    %2316 = vmatprep.subr.bf16.mxu0 0
    %2317 = vmatpush1.bf16.msra.mxu0 0
    %2318 = vmatprep.subr.bf16.mxu0 0
    %2319 = vmatpush1.bf16.msra.mxu0 0
    %2320 = vmatprep.mubr.bf16.mxu0 0
    %2321 = vmatmul.mubr.bf16.gmra.mrb[0].mxu0 %v2286
    %v2322 = vpop.f32.mrb[0].mxu0
    %v2323 = vadd.f32 %v2272, %v2322
    %v2324 = vpop.f32.mrb[0].mxu0
    %v2325 = vpop.f32.mrb[0].mxu0
    %v2326 = vadd.f32 %v2272, %v2325
    %v2327 = vpop.f32.mrb[0].mxu0
    %2328 = vdwg.mxu0
    %v2329 = vadd.f32 %v1327, %v2323
    %v2330 = vadd.f32 %v1328, %v2326
    %v2331 = vsel %vm137, %v2329, 0.0
    %2332 = vadd.xlane.f32.xlu0 %v2331
    %v2333 = vpop.xlane.xlu0 %2332
    %v2334 = vsel %vm137, %v2330, 0.0
    %2335 = vadd.xlane.f32.xlu0 %v2334
    %v2336 = vpop.xlane.xlu0 %2335
    %v2337 = vmul.f32 %v2333, %v144
    %v2338 = vmul.f32 %v2336, %v144
    %v2339 = vsub.f32 %v2329, %v2337
    %v2340 = vsub.f32 %v2330, %v2338
    %v2341 = vmul.f32 %v2339, %v2339
    %v2342 = vmul.f32 %v2340, %v2340
    %v2343 = vsel %vm137, %v2341, 0.0
    %2344 = vadd.xlane.f32.xlu0 %v2343
    %v2345 = vpop.xlane.xlu0 %2344
    %v2346 = vsel %vm137, %v2342, 0.0
    %2347 = vadd.xlane.f32.xlu0 %v2346
    %v2348 = vpop.xlane.xlu0 %2347
    %v2349 = vmul.f32 %v2345, %v144
    %v2350 = vmul.f32 %v2348, %v144
    %v2351 = vadd.f32 %v2349, 1e-05
    %v2352 = vadd.f32 %v2350, 1e-05
    %v2353 = vrsqrt.pop %v2351
    %v2354 = vrsqrt.pop %v2352
    %v2355 = vmul.f32 %v2339, %v2353
    %v2356 = vmul.f32 %v2340, %v2354
    %v2357 = vlaneseq
    %v2358 = vshrl.u32 %v2357, 7
    %v2359 = vsub.s32 6, %v2358
    %v2360 = vrot.slane %v1330, %v2359
    %v2361 = vmul.f32 %v2355, %v2360
    %v2362 = vmul.f32 %v2356, %v2360
    %v2363 = vlaneseq
    %v2364 = vshrl.u32 %v2363, 7
    %v2365 = vsub.s32 7, %v2364
    %v2366 = vrot.slane %v1330, %v2365
    %v2367 = vadd.f32 %v2361, %v2366
    %v2368 = vadd.f32 %v2362, %v2366
    %v2369 = vpack.c.bf16 %v2368, %v2367
    %s2370 = scalar_lea.vmem %s6, 16
    %v2371 = vld [vmem:[%s2370] sm:$0xf]
    %v2372 = vld [vmem:[%s2370 + $0x4] sm:$0xf]
    %v2373 = vld [vmem:[%s2370 + $0x8] sm:$0xf]
    %v2374 = vld [vmem:[%s2370 + $0xc] sm:$0xf]
    %v2375 = vlaneseq
    %v2376 = vshrl.u32 %v2375, 7
    %v2377 = vsub.s32 2, %v2376
    %v2378 = vrot.slane %v1330, %v2377
    %v2383 = vunpack.c.l.b16 %v2371
    %v2384 = vunpack.c.l.b16 %v2372
    %v2385 = vunpack.c.l.b16 %v2373
    %v2386 = vunpack.c.l.b16 %v2374
    %v2387 = vpack.c.b16 %v2384, %v2383
    %v2388 = vpack.c.b16 %v2386, %v2385
    %v2392 = vsel %vm137, %v2369, 0
    %2394 = vmatprep.subr.bf16.mxu0 0
    %2395 = vmatpush1.bf16.msra.mxu0 %v2387
    %2396 = vmatprep.subr.bf16.mxu0 0
    %2397 = vmatpush1.bf16.msra.mxu0 %v2388
    %2398 = vmatprep.subr.bf16.mxu0 0
    %2399 = vmatpush1.bf16.msra.mxu0 0
    %2400 = vmatprep.subr.bf16.mxu0 0
    %2401 = vmatpush1.bf16.msra.mxu0 0
    %2402 = vmatprep.subr.bf16.mxu0 0
    %2403 = vmatpush1.bf16.msra.mxu0 0
    %2404 = vmatprep.subr.bf16.mxu0 0
    %2405 = vmatpush1.bf16.msra.mxu0 0
    %2406 = vmatprep.subr.bf16.mxu0 0
    %2407 = vmatpush1.bf16.msra.mxu0 0
    %2408 = vmatprep.subr.bf16.mxu0 0
    %2409 = vmatpush1.bf16.msra.mxu0 0
    %2410 = vmatprep.subr.bf16.mxu0 0
    %2411 = vmatpush1.bf16.msra.mxu0 0
    %2412 = vmatprep.subr.bf16.mxu0 0
    %2413 = vmatpush1.bf16.msra.mxu0 0
    %2414 = vmatprep.subr.bf16.mxu0 0
    %2415 = vmatpush1.bf16.msra.mxu0 0
    %2416 = vmatprep.subr.bf16.mxu0 0
    %2417 = vmatpush1.bf16.msra.mxu0 0
    %2418 = vmatprep.subr.bf16.mxu0 0
    %2419 = vmatpush1.bf16.msra.mxu0 0
    %2420 = vmatprep.subr.bf16.mxu0 0
    %2421 = vmatpush1.bf16.msra.mxu0 0
    %2422 = vmatprep.subr.bf16.mxu0 0
    %2423 = vmatpush1.bf16.msra.mxu0 0
    %2424 = vmatprep.subr.bf16.mxu0 0
    %2425 = vmatpush1.bf16.msra.mxu0 0
    %2426 = vmatprep.mubr.bf16.mxu0 0
    %2427 = vmatmul.mubr.bf16.gmra.mrb[0].mxu0 %v2392
    %v2428 = vpop.f32.mrb[0].mxu0
    %v2429 = vadd.f32 %v2378, %v2428
    %v2430 = vpop.f32.mrb[0].mxu0
    %v2431 = vpop.f32.mrb[0].mxu0
    %v2432 = vadd.f32 %v2378, %v2431
    %v2433 = vpop.f32.mrb[0].mxu0
    %2434 = vdwg.mxu0
    %v2435 = vmax.f32 %v2429, 0.0
    %v2436 = vmax.f32 %v2432, 0.0
    %v2437 = vpack.c.bf16 %v2436, %v2435
    %s2438 = scalar_lea.vmem %s7, 32
    %v2439 = vld [vmem:[%s2438] sm:$0xf]
    %v2440 = vld [vmem:[%s2438 + $0x4] sm:$0xf]
    %v2441 = vld [vmem:[%s2438 + $0x8] sm:$0xf]
    %v2442 = vld [vmem:[%s2438 + $0xc] sm:$0xf]
    %v2443 = vld [vmem:[%s2438 + $0x10] sm:$0xf]
    %v2444 = vld [vmem:[%s2438 + $0x14] sm:$0xf]
    %v2445 = vld [vmem:[%s2438 + $0x18] sm:$0xf]
    %v2446 = vld [vmem:[%s2438 + $0x1c] sm:$0xf]
    %v2447 = vlaneseq
    %v2448 = vshrl.u32 %v2447, 7
    %v2449 = vsub.s32 3, %v2448
    %v2450 = vrot.slane %v1330, %v2449
    %v2459 = vunpack.c.l.b16 %v2439
    %v2460 = vunpack.c.l.b16 %v2440
    %v2461 = vunpack.c.l.b16 %v2441
    %v2462 = vunpack.c.l.b16 %v2442
    %v2463 = vunpack.c.l.b16 %v2443
    %v2464 = vunpack.c.l.b16 %v2444
    %v2465 = vunpack.c.l.b16 %v2445
    %v2466 = vunpack.c.l.b16 %v2446
    %v2467 = vpack.c.b16 %v2460, %v2459
    %v2468 = vpack.c.b16 %v2462, %v2461
    %v2469 = vpack.c.b16 %v2464, %v2463
    %v2470 = vpack.c.b16 %v2466, %v2465
    %v2476 = vsel %vm1282, %v2437, 0
    %2478 = vmatprep.subr.bf16.mxu0 0
    %2479 = vmatpush1.bf16.msra.mxu0 %v2467
    %2480 = vmatprep.subr.bf16.mxu0 0
    %2481 = vmatpush1.bf16.msra.mxu0 %v2468
    %2482 = vmatprep.subr.bf16.mxu0 0
    %2483 = vmatpush1.bf16.msra.mxu0 %v2469
    %2484 = vmatprep.subr.bf16.mxu0 0
    %2485 = vmatpush1.bf16.msra.mxu0 %v2470
    %2486 = vmatprep.subr.bf16.mxu0 0
    %2487 = vmatpush1.bf16.msra.mxu0 0
    %2488 = vmatprep.subr.bf16.mxu0 0
    %2489 = vmatpush1.bf16.msra.mxu0 0
    %2490 = vmatprep.subr.bf16.mxu0 0
    %2491 = vmatpush1.bf16.msra.mxu0 0
    %2492 = vmatprep.subr.bf16.mxu0 0
    %2493 = vmatpush1.bf16.msra.mxu0 0
    %2494 = vmatprep.subr.bf16.mxu0 0
    %2495 = vmatpush1.bf16.msra.mxu0 0
    %2496 = vmatprep.subr.bf16.mxu0 0
    %2497 = vmatpush1.bf16.msra.mxu0 0
    %2498 = vmatprep.subr.bf16.mxu0 0
    %2499 = vmatpush1.bf16.msra.mxu0 0
    %2500 = vmatprep.subr.bf16.mxu0 0
    %2501 = vmatpush1.bf16.msra.mxu0 0
    %2502 = vmatprep.subr.bf16.mxu0 0
    %2503 = vmatpush1.bf16.msra.mxu0 0
    %2504 = vmatprep.subr.bf16.mxu0 0
    %2505 = vmatpush1.bf16.msra.mxu0 0
    %2506 = vmatprep.subr.bf16.mxu0 0
    %2507 = vmatpush1.bf16.msra.mxu0 0
    %2508 = vmatprep.subr.bf16.mxu0 0
    %2509 = vmatpush1.bf16.msra.mxu0 0
    %2510 = vmatprep.mubr.bf16.mxu0 0
    %2511 = vmatmul.mubr.bf16.gmra.mrb[0].mxu0 %v2476
    %v2512 = vpop.f32.mrb[0].mxu0
    %v2513 = vadd.f32 %v2450, %v2512
    %v2514 = vpop.f32.mrb[0].mxu0
    %v2515 = vpop.f32.mrb[0].mxu0
    %v2516 = vadd.f32 %v2450, %v2515
    %v2517 = vpop.f32.mrb[0].mxu0
    %2518 = vdwg.mxu0
    %v2519 = vadd.f32 %v2329, %v2513
    %v2520 = vadd.f32 %v2330, %v2516
    %s2521 = scalar_lea.vmem %s8, 16
    %v2522 = vld [vmem:[%s2521] sm:$0xff]
    %v2523 = vsel %vm137, %v2519, 0.0
    %2524 = vadd.xlane.f32.xlu0 %v2523
    %v2525 = vpop.xlane.xlu0 %2524
    %v2526 = vsel %vm137, %v2520, 0.0
    %2527 = vadd.xlane.f32.xlu0 %v2526
    %v2528 = vpop.xlane.xlu0 %2527
    %v2529 = vmul.f32 %v2525, %v144
    %v2530 = vmul.f32 %v2528, %v144
    %v2531 = vsub.f32 %v2519, %v2529
    %v2532 = vsub.f32 %v2520, %v2530
    %v2533 = vmul.f32 %v2531, %v2531
    %v2534 = vmul.f32 %v2532, %v2532
    %v2535 = vsel %vm137, %v2533, 0.0
    %2536 = vadd.xlane.f32.xlu0 %v2535
    %v2537 = vpop.xlane.xlu0 %2536
    %v2538 = vsel %vm137, %v2534, 0.0
    %2539 = vadd.xlane.f32.xlu0 %v2538
    %v2540 = vpop.xlane.xlu0 %2539
    %v2541 = vmul.f32 %v2537, %v144
    %v2542 = vmul.f32 %v2540, %v144
    %v2543 = vadd.f32 %v2541, 1e-05
    %v2544 = vadd.f32 %v2542, 1e-05
    %v2545 = vrsqrt.pop %v2543
    %v2546 = vrsqrt.pop %v2544
    %v2547 = vmul.f32 %v2531, %v2545
    %v2548 = vmul.f32 %v2532, %v2546
    %v2549 = vlaneseq
    %v2550 = vshrl.u32 %v2549, 7
    %v2551 = vsub.s32 4, %v2550
    %v2552 = vrot.slane %v2522, %v2551
    %v2553 = vmul.f32 %v2547, %v2552
    %v2554 = vmul.f32 %v2548, %v2552
    %v2555 = vlaneseq
    %v2556 = vshrl.u32 %v2555, 7
    %v2557 = vsub.s32 5, %v2556
    %v2558 = vrot.slane %v2522, %v2557
    %v2559 = vadd.f32 %v2553, %v2558
    %v2560 = vadd.f32 %v2554, %v2558
    %v2561 = vpack.c.bf16 %v2560, %v2559
    %s2562 = scalar_lea.vmem %s4, 32
    %v2563 = vld [vmem:[%s2562] sm:$0xf]
    %v2564 = vld [vmem:[%s2562 + $0x4] sm:$0xf]
    %v2565 = vld [vmem:[%s2562 + $0x8] sm:$0xf]
    %v2566 = vld [vmem:[%s2562 + $0xc] sm:$0xf]
    %v2567 = vlaneseq
    %v2568 = vshrl.u32 %v2567, 7
    %v2569 = vsub.s32 0, %v2568
    %v2570 = vrot.slane %v2522, %v2569
    %v2575 = vunpack.c.l.b16 %v2563
    %v2576 = vunpack.c.l.b16 %v2564
    %v2577 = vunpack.c.l.b16 %v2565
    %v2578 = vunpack.c.l.b16 %v2566
    %v2579 = vpack.c.b16 %v2576, %v2575
    %v2580 = vpack.c.b16 %v2578, %v2577
    %v2584 = vsel %vm137, %v2561, 0
    %2586 = vmatprep.subr.bf16.mxu0 0
    %2587 = vmatpush1.bf16.msra.mxu0 %v2579
    %2588 = vmatprep.subr.bf16.mxu0 0
    %2589 = vmatpush1.bf16.msra.mxu0 %v2580
    %2590 = vmatprep.subr.bf16.mxu0 0
    %2591 = vmatpush1.bf16.msra.mxu0 0
    %2592 = vmatprep.subr.bf16.mxu0 0
    %2593 = vmatpush1.bf16.msra.mxu0 0
    %2594 = vmatprep.subr.bf16.mxu0 0
    %2595 = vmatpush1.bf16.msra.mxu0 0
    %2596 = vmatprep.subr.bf16.mxu0 0
    %2597 = vmatpush1.bf16.msra.mxu0 0
    %2598 = vmatprep.subr.bf16.mxu0 0
    %2599 = vmatpush1.bf16.msra.mxu0 0
    %2600 = vmatprep.subr.bf16.mxu0 0
    %2601 = vmatpush1.bf16.msra.mxu0 0
    %2602 = vmatprep.subr.bf16.mxu0 0
    %2603 = vmatpush1.bf16.msra.mxu0 0
    %2604 = vmatprep.subr.bf16.mxu0 0
    %2605 = vmatpush1.bf16.msra.mxu0 0
    %2606 = vmatprep.subr.bf16.mxu0 0
    %2607 = vmatpush1.bf16.msra.mxu0 0
    %2608 = vmatprep.subr.bf16.mxu0 0
    %2609 = vmatpush1.bf16.msra.mxu0 0
    %2610 = vmatprep.subr.bf16.mxu0 0
    %2611 = vmatpush1.bf16.msra.mxu0 0
    %2612 = vmatprep.subr.bf16.mxu0 0
    %2613 = vmatpush1.bf16.msra.mxu0 0
    %2614 = vmatprep.subr.bf16.mxu0 0
    %2615 = vmatpush1.bf16.msra.mxu0 0
    %2616 = vmatprep.subr.bf16.mxu0 0
    %2617 = vmatpush1.bf16.msra.mxu0 0
    %2618 = vmatprep.mubr.bf16.mxu0 0
    %2619 = vmatmul.mubr.bf16.gmra.mrb[0].mxu0 %v2584
    %v2620 = vpop.f32.mrb[0].mxu0
    %v2621 = vadd.f32 %v2570, %v2620
    %v2622 = vpop.f32.mrb[0].mxu0
    %v2623 = vpop.f32.mrb[0].mxu0
    %v2624 = vadd.f32 %v2570, %v2623
    %v2625 = vpop.f32.mrb[0].mxu0
    %2626 = vdwg.mxu0
    %2629 = vrot.lane.b32.xlu0 %v2621, 96
    %v2630 = vpop.permute.xlu0 %2629
    %2631 = vrot.lane.b32.xlu0 %v2624, 96
    %v2632 = vpop.permute.xlu0 %2631
    %v2633 = vsel %vm248, %v2621, 0
    %v2635 = vsel %vm248, %v2624, 0
    %v2637 = vsel %vm248, %v2630, 0
    %v2639 = vsel %vm248, %v2632, 0
    %2641 = vmatprep.subr.mxu0 0.0
    %2642 = vmatpush1.xpose.msra.mxu0 %v2637
    %2643 = vmatprep.subr.mxu0 0.0
    %2644 = vmatpush1.xpose.msra.mxu0 %v2639
    %2645 = vmatprep.subr.mxu0 0.0
    %2646 = vmatpush1.xpose.msra.mxu0 0.0
    %2647 = vmatprep.subr.mxu0 0.0
    %2648 = vmatpush1.xpose.msra.mxu0 0.0
    %2649 = vmatprep.subr.mxu0 0.0
    %2650 = vmatpush1.xpose.msra.mxu0 0.0
    %2651 = vmatprep.subr.mxu0 0.0
    %2652 = vmatpush1.xpose.msra.mxu0 0.0
    %2653 = vmatprep.subr.mxu0 0.0
    %2654 = vmatpush1.xpose.msra.mxu0 0.0
    %2655 = vmatprep.subr.mxu0 0.0
    %2656 = vmatpush1.xpose.msra.mxu0 0.0
    %2657 = vmatprep.subr.mxu0 0.0
    %2658 = vmatpush1.xpose.msra.mxu0 0.0
    %2659 = vmatprep.subr.mxu0 0.0
    %2660 = vmatpush1.xpose.msra.mxu0 0.0
    %2661 = vmatprep.subr.mxu0 0.0
    %2662 = vmatpush1.xpose.msra.mxu0 0.0
    %2663 = vmatprep.subr.mxu0 0.0
    %2664 = vmatpush1.xpose.msra.mxu0 0.0
    %2665 = vmatprep.subr.mxu0 0.0
    %2666 = vmatpush1.xpose.msra.mxu0 0.0
    %2667 = vmatprep.subr.mxu0 0.0
    %2668 = vmatpush1.xpose.msra.mxu0 0.0
    %2669 = vmatprep.subr.mxu0 0.0
    %2670 = vmatpush1.xpose.msra.mxu0 0.0
    %2671 = vmatprep.subr.mxu0 0.0
    %2672 = vmatpush1.xpose.msra.mxu0 0.0
    %2673 = vmatprep.subr.mxu0 0.0
    %2674 = vmatpush1.xpose.msra.mxu0 0.0
    %2675 = vmatprep.subr.mxu0 0.0
    %2676 = vmatpush1.xpose.msra.mxu0 0.0
    %2677 = vmatprep.subr.mxu0 0.0
    %2678 = vmatpush1.xpose.msra.mxu0 0.0
    %2679 = vmatprep.subr.mxu0 0.0
    %2680 = vmatpush1.xpose.msra.mxu0 0.0
    %2681 = vmatprep.subr.mxu0 0.0
    %2682 = vmatpush1.xpose.msra.mxu0 0.0
    %2683 = vmatprep.subr.mxu0 0.0
    %2684 = vmatpush1.xpose.msra.mxu0 0.0
    %2685 = vmatprep.subr.mxu0 0.0
    %2686 = vmatpush1.xpose.msra.mxu0 0.0
    %2687 = vmatprep.subr.mxu0 0.0
    %2688 = vmatpush1.xpose.msra.mxu0 0.0
    %2689 = vmatprep.subr.mxu0 0.0
    %2690 = vmatpush1.xpose.msra.mxu0 0.0
    %2691 = vmatprep.subr.mxu0 0.0
    %2692 = vmatpush1.xpose.msra.mxu0 0.0
    %2693 = vmatprep.subr.mxu0 0.0
    %2694 = vmatpush1.xpose.msra.mxu0 0.0
    %2695 = vmatprep.subr.mxu0 0.0
    %2696 = vmatpush1.xpose.msra.mxu0 0.0
    %2697 = vmatprep.subr.mxu0 0.0
    %2698 = vmatpush1.xpose.msra.mxu0 0.0
    %2699 = vmatprep.subr.mxu0 0.0
    %2700 = vmatpush1.xpose.msra.mxu0 0.0
    %2701 = vmatprep.subr.mxu0 0.0
    %2702 = vmatpush1.xpose.msra.mxu0 0.0
    %2703 = vmatprep.subr.mxu0 0.0
    %2704 = vmatpush1.xpose.msra.mxu0 0.0
    %2705 = vmatprep.mubr.f32.mxu0 0.0
    %2706 = vmatmul.mubr.f32.gmra.mrb[0].mxu0 %v2633
    %v2707 = vpop.f32.mrb[0].mxu0
    %v2708 = vadd.f32 %v134, %v2707
    %v2709 = vpop.f32.mrb[0].mxu0
    %2710 = vmatprep.mubr.f32.mxu0 0.0
    %2711 = vmatmul.mubr.f32.gmra.mrb[0].mxu0 %v2635
    %v2712 = vpop.f32.mrb[0].mxu0
    %v2713 = vadd.f32 %v135, %v2712
    %v2714 = vpop.f32.mrb[0].mxu0
    %2715 = vdwg.mxu0
    %v2716 = vsel %vm332, %v2708, -inf
    %2717 = vmax.xlane.f32.xlu0 %v2716
    %v2718 = vpop.xlane.xlu0 %2717
    %v2719 = vsel %vm332, %v2713, -inf
    %2720 = vmax.xlane.f32.xlu0 %v2719
    %v2721 = vpop.xlane.xlu0 %2720
    %v2722 = vsub.f32 %v2708, %v2718
    %v2723 = vsub.f32 %v2713, %v2721
    %v2724 = vmul.f32 %v2722, 1.442695
    %v2725 = vpow.pop %v2724
    %v2726 = vmul.f32 %v2723, 1.442695
    %v2727 = vpow.pop %v2726
    %v2728 = vsel %vm332, %v2725, 0.0
    %2729 = vadd.xlane.f32.xlu0 %v2728
    %v2730 = vpop.xlane.xlu0 %2729
    %v2731 = vsel %vm332, %v2727, 0.0
    %2732 = vadd.xlane.f32.xlu0 %v2731
    %v2733 = vpop.xlane.xlu0 %2732
    %v2734 = vrcp.pop %v2730
    %v2735 = vrcp.pop %v2733
    %v2736 = vmul.f32 %v2725, %v2734
    %v2737 = vmul.f32 %v2727, %v2735
    %2738 = vrot.lane.b32.xlu0 %v2621, 64
    %v2739 = vpop.permute.xlu0 %2738
    %2740 = vrot.lane.b32.xlu0 %v2624, 64
    %v2741 = vpop.permute.xlu0 %2740
    %v2745 = vsel %vm332, %v2736, 0
    %v2748 = vsel %vm332, %v2737, 0
    %2750 = vmatprep.subr.mxu0 0.0
    %2751 = vmatpush1.msra.mxu0 %v2739
    %2752 = vmatprep.subr.mxu0 0.0
    %2753 = vmatpush1.msra.mxu0 %v2741
    %2754 = vmatprep.subr.mxu0 0.0
    %2755 = vmatpush1.msra.mxu0 0.0
    %2756 = vmatprep.subr.mxu0 0.0
    %2757 = vmatpush1.msra.mxu0 0.0
    %2758 = vmatprep.subr.mxu0 0.0
    %2759 = vmatpush1.msra.mxu0 0.0
    %2760 = vmatprep.subr.mxu0 0.0
    %2761 = vmatpush1.msra.mxu0 0.0
    %2762 = vmatprep.subr.mxu0 0.0
    %2763 = vmatpush1.msra.mxu0 0.0
    %2764 = vmatprep.subr.mxu0 0.0
    %2765 = vmatpush1.msra.mxu0 0.0
    %2766 = vmatprep.subr.mxu0 0.0
    %2767 = vmatpush1.msra.mxu0 0.0
    %2768 = vmatprep.subr.mxu0 0.0
    %2769 = vmatpush1.msra.mxu0 0.0
    %2770 = vmatprep.subr.mxu0 0.0
    %2771 = vmatpush1.msra.mxu0 0.0
    %2772 = vmatprep.subr.mxu0 0.0
    %2773 = vmatpush1.msra.mxu0 0.0
    %2774 = vmatprep.subr.mxu0 0.0
    %2775 = vmatpush1.msra.mxu0 0.0
    %2776 = vmatprep.subr.mxu0 0.0
    %2777 = vmatpush1.msra.mxu0 0.0
    %2778 = vmatprep.subr.mxu0 0.0
    %2779 = vmatpush1.msra.mxu0 0.0
    %2780 = vmatprep.subr.mxu0 0.0
    %2781 = vmatpush1.msra.mxu0 0.0
    %2782 = vmatprep.subr.mxu0 0.0
    %2783 = vmatpush1.msra.mxu0 0.0
    %2784 = vmatprep.subr.mxu0 0.0
    %2785 = vmatpush1.msra.mxu0 0.0
    %2786 = vmatprep.subr.mxu0 0.0
    %2787 = vmatpush1.msra.mxu0 0.0
    %2788 = vmatprep.subr.mxu0 0.0
    %2789 = vmatpush1.msra.mxu0 0.0
    %2790 = vmatprep.subr.mxu0 0.0
    %2791 = vmatpush1.msra.mxu0 0.0
    %2792 = vmatprep.subr.mxu0 0.0
    %2793 = vmatpush1.msra.mxu0 0.0
    %2794 = vmatprep.subr.mxu0 0.0
    %2795 = vmatpush1.msra.mxu0 0.0
    %2796 = vmatprep.subr.mxu0 0.0
    %2797 = vmatpush1.msra.mxu0 0.0
    %2798 = vmatprep.subr.mxu0 0.0
    %2799 = vmatpush1.msra.mxu0 0.0
    %2800 = vmatprep.subr.mxu0 0.0
    %2801 = vmatpush1.msra.mxu0 0.0
    %2802 = vmatprep.subr.mxu0 0.0
    %2803 = vmatpush1.msra.mxu0 0.0
    %2804 = vmatprep.subr.mxu0 0.0
    %2805 = vmatpush1.msra.mxu0 0.0
    %2806 = vmatprep.subr.mxu0 0.0
    %2807 = vmatpush1.msra.mxu0 0.0
    %2808 = vmatprep.subr.mxu0 0.0
    %2809 = vmatpush1.msra.mxu0 0.0
    %2810 = vmatprep.subr.mxu0 0.0
    %2811 = vmatpush1.msra.mxu0 0.0
    %2812 = vmatprep.subr.mxu0 0.0
    %2813 = vmatpush1.msra.mxu0 0.0
    %2814 = vmatprep.mubr.f32.mxu0 0.0
    %2815 = vmatmul.mubr.f32.gmra.mrb[0].mxu0 %v2745
    %v2816 = vpop.f32.mrb[0].mxu0
    %v2817 = vadd.f32 0.0, %v2816
    %v2818 = vpop.f32.mrb[0].mxu0
    %2819 = vmatprep.mubr.f32.mxu0 0.0
    %2820 = vmatmul.mubr.f32.gmra.mrb[0].mxu0 %v2748
    %v2821 = vpop.f32.mrb[0].mxu0
    %v2822 = vadd.f32 0.0, %v2821
    %v2823 = vpop.f32.mrb[0].mxu0
    %2824 = vdwg.mxu0
    %2825 = vrot.lane.b32.xlu0 %v2621, 120
    %v2826 = vpop.permute.xlu0 %2825
    %2827 = vrot.lane.b32.xlu0 %v2624, 120
    %v2828 = vpop.permute.xlu0 %2827
    %2829 = vrot.lane.b32.xlu0 %v2621, 88
    %v2830 = vpop.permute.xlu0 %2829
    %2831 = vrot.lane.b32.xlu0 %v2624, 88
    %v2832 = vpop.permute.xlu0 %2831
    %v2833 = vsel %vm248, %v2826, 0
    %v2835 = vsel %vm248, %v2828, 0
    %v2837 = vsel %vm248, %v2830, 0
    %v2839 = vsel %vm248, %v2832, 0
    %2841 = vmatprep.subr.mxu0 0.0
    %2842 = vmatpush1.xpose.msra.mxu0 %v2837
    %2843 = vmatprep.subr.mxu0 0.0
    %2844 = vmatpush1.xpose.msra.mxu0 %v2839
    %2845 = vmatprep.subr.mxu0 0.0
    %2846 = vmatpush1.xpose.msra.mxu0 0.0
    %2847 = vmatprep.subr.mxu0 0.0
    %2848 = vmatpush1.xpose.msra.mxu0 0.0
    %2849 = vmatprep.subr.mxu0 0.0
    %2850 = vmatpush1.xpose.msra.mxu0 0.0
    %2851 = vmatprep.subr.mxu0 0.0
    %2852 = vmatpush1.xpose.msra.mxu0 0.0
    %2853 = vmatprep.subr.mxu0 0.0
    %2854 = vmatpush1.xpose.msra.mxu0 0.0
    %2855 = vmatprep.subr.mxu0 0.0
    %2856 = vmatpush1.xpose.msra.mxu0 0.0
    %2857 = vmatprep.subr.mxu0 0.0
    %2858 = vmatpush1.xpose.msra.mxu0 0.0
    %2859 = vmatprep.subr.mxu0 0.0
    %2860 = vmatpush1.xpose.msra.mxu0 0.0
    %2861 = vmatprep.subr.mxu0 0.0
    %2862 = vmatpush1.xpose.msra.mxu0 0.0
    %2863 = vmatprep.subr.mxu0 0.0
    %2864 = vmatpush1.xpose.msra.mxu0 0.0
    %2865 = vmatprep.subr.mxu0 0.0
    %2866 = vmatpush1.xpose.msra.mxu0 0.0
    %2867 = vmatprep.subr.mxu0 0.0
    %2868 = vmatpush1.xpose.msra.mxu0 0.0
    %2869 = vmatprep.subr.mxu0 0.0
    %2870 = vmatpush1.xpose.msra.mxu0 0.0
    %2871 = vmatprep.subr.mxu0 0.0
    %2872 = vmatpush1.xpose.msra.mxu0 0.0
    %2873 = vmatprep.subr.mxu0 0.0
    %2874 = vmatpush1.xpose.msra.mxu0 0.0
    %2875 = vmatprep.subr.mxu0 0.0
    %2876 = vmatpush1.xpose.msra.mxu0 0.0
    %2877 = vmatprep.subr.mxu0 0.0
    %2878 = vmatpush1.xpose.msra.mxu0 0.0
    %2879 = vmatprep.subr.mxu0 0.0
    %2880 = vmatpush1.xpose.msra.mxu0 0.0
    %2881 = vmatprep.subr.mxu0 0.0
    %2882 = vmatpush1.xpose.msra.mxu0 0.0
    %2883 = vmatprep.subr.mxu0 0.0
    %2884 = vmatpush1.xpose.msra.mxu0 0.0
    %2885 = vmatprep.subr.mxu0 0.0
    %2886 = vmatpush1.xpose.msra.mxu0 0.0
    %2887 = vmatprep.subr.mxu0 0.0
    %2888 = vmatpush1.xpose.msra.mxu0 0.0
    %2889 = vmatprep.subr.mxu0 0.0
    %2890 = vmatpush1.xpose.msra.mxu0 0.0
    %2891 = vmatprep.subr.mxu0 0.0
    %2892 = vmatpush1.xpose.msra.mxu0 0.0
    %2893 = vmatprep.subr.mxu0 0.0
    %2894 = vmatpush1.xpose.msra.mxu0 0.0
    %2895 = vmatprep.subr.mxu0 0.0
    %2896 = vmatpush1.xpose.msra.mxu0 0.0
    %2897 = vmatprep.subr.mxu0 0.0
    %2898 = vmatpush1.xpose.msra.mxu0 0.0
    %2899 = vmatprep.subr.mxu0 0.0
    %2900 = vmatpush1.xpose.msra.mxu0 0.0
    %2901 = vmatprep.subr.mxu0 0.0
    %2902 = vmatpush1.xpose.msra.mxu0 0.0
    %2903 = vmatprep.subr.mxu0 0.0
    %2904 = vmatpush1.xpose.msra.mxu0 0.0
    %2905 = vmatprep.mubr.f32.mxu0 0.0
    %2906 = vmatmul.mubr.f32.gmra.mrb[0].mxu0 %v2833
    %v2907 = vpop.f32.mrb[0].mxu0
    %v2908 = vadd.f32 %v134, %v2907
    %v2909 = vpop.f32.mrb[0].mxu0
    %2910 = vmatprep.mubr.f32.mxu0 0.0
    %2911 = vmatmul.mubr.f32.gmra.mrb[0].mxu0 %v2835
    %v2912 = vpop.f32.mrb[0].mxu0
    %v2913 = vadd.f32 %v135, %v2912
    %v2914 = vpop.f32.mrb[0].mxu0
    %2915 = vdwg.mxu0
    %v2916 = vsel %vm332, %v2908, -inf
    %2917 = vmax.xlane.f32.xlu0 %v2916
    %v2918 = vpop.xlane.xlu0 %2917
    %v2919 = vsel %vm332, %v2913, -inf
    %2920 = vmax.xlane.f32.xlu0 %v2919
    %v2921 = vpop.xlane.xlu0 %2920
    %v2922 = vsub.f32 %v2908, %v2918
    %v2923 = vsub.f32 %v2913, %v2921
    %v2924 = vmul.f32 %v2922, 1.442695
    %v2925 = vpow.pop %v2924
    %v2926 = vmul.f32 %v2923, 1.442695
    %v2927 = vpow.pop %v2926
    %v2928 = vsel %vm332, %v2925, 0.0
    %2929 = vadd.xlane.f32.xlu0 %v2928
    %v2930 = vpop.xlane.xlu0 %2929
    %v2931 = vsel %vm332, %v2927, 0.0
    %2932 = vadd.xlane.f32.xlu0 %v2931
    %v2933 = vpop.xlane.xlu0 %2932
    %v2934 = vrcp.pop %v2930
    %v2935 = vrcp.pop %v2933
    %v2936 = vmul.f32 %v2925, %v2934
    %v2937 = vmul.f32 %v2927, %v2935
    %2938 = vrot.lane.b32.xlu0 %v2621, 56
    %v2939 = vpop.permute.xlu0 %2938
    %2940 = vrot.lane.b32.xlu0 %v2624, 56
    %v2941 = vpop.permute.xlu0 %2940
    %v2945 = vsel %vm332, %v2936, 0
    %v2948 = vsel %vm332, %v2937, 0
    %2950 = vmatprep.subr.mxu0 0.0
    %2951 = vmatpush1.msra.mxu0 %v2939
    %2952 = vmatprep.subr.mxu0 0.0
    %2953 = vmatpush1.msra.mxu0 %v2941
    %2954 = vmatprep.subr.mxu0 0.0
    %2955 = vmatpush1.msra.mxu0 0.0
    %2956 = vmatprep.subr.mxu0 0.0
    %2957 = vmatpush1.msra.mxu0 0.0
    %2958 = vmatprep.subr.mxu0 0.0
    %2959 = vmatpush1.msra.mxu0 0.0
    %2960 = vmatprep.subr.mxu0 0.0
    %2961 = vmatpush1.msra.mxu0 0.0
    %2962 = vmatprep.subr.mxu0 0.0
    %2963 = vmatpush1.msra.mxu0 0.0
    %2964 = vmatprep.subr.mxu0 0.0
    %2965 = vmatpush1.msra.mxu0 0.0
    %2966 = vmatprep.subr.mxu0 0.0
    %2967 = vmatpush1.msra.mxu0 0.0
    %2968 = vmatprep.subr.mxu0 0.0
    %2969 = vmatpush1.msra.mxu0 0.0
    %2970 = vmatprep.subr.mxu0 0.0
    %2971 = vmatpush1.msra.mxu0 0.0
    %2972 = vmatprep.subr.mxu0 0.0
    %2973 = vmatpush1.msra.mxu0 0.0
    %2974 = vmatprep.subr.mxu0 0.0
    %2975 = vmatpush1.msra.mxu0 0.0
    %2976 = vmatprep.subr.mxu0 0.0
    %2977 = vmatpush1.msra.mxu0 0.0
    %2978 = vmatprep.subr.mxu0 0.0
    %2979 = vmatpush1.msra.mxu0 0.0
    %2980 = vmatprep.subr.mxu0 0.0
    %2981 = vmatpush1.msra.mxu0 0.0
    %2982 = vmatprep.subr.mxu0 0.0
    %2983 = vmatpush1.msra.mxu0 0.0
    %2984 = vmatprep.subr.mxu0 0.0
    %2985 = vmatpush1.msra.mxu0 0.0
    %2986 = vmatprep.subr.mxu0 0.0
    %2987 = vmatpush1.msra.mxu0 0.0
    %2988 = vmatprep.subr.mxu0 0.0
    %2989 = vmatpush1.msra.mxu0 0.0
    %2990 = vmatprep.subr.mxu0 0.0
    %2991 = vmatpush1.msra.mxu0 0.0
    %2992 = vmatprep.subr.mxu0 0.0
    %2993 = vmatpush1.msra.mxu0 0.0
    %2994 = vmatprep.subr.mxu0 0.0
    %2995 = vmatpush1.msra.mxu0 0.0
    %2996 = vmatprep.subr.mxu0 0.0
    %2997 = vmatpush1.msra.mxu0 0.0
    %2998 = vmatprep.subr.mxu0 0.0
    %2999 = vmatpush1.msra.mxu0 0.0
    %3000 = vmatprep.subr.mxu0 0.0
    %3001 = vmatpush1.msra.mxu0 0.0
    %3002 = vmatprep.subr.mxu0 0.0
    %3003 = vmatpush1.msra.mxu0 0.0
    %3004 = vmatprep.subr.mxu0 0.0
    %3005 = vmatpush1.msra.mxu0 0.0
    %3006 = vmatprep.subr.mxu0 0.0
    %3007 = vmatpush1.msra.mxu0 0.0
    %3008 = vmatprep.subr.mxu0 0.0
    %3009 = vmatpush1.msra.mxu0 0.0
    %3010 = vmatprep.subr.mxu0 0.0
    %3011 = vmatpush1.msra.mxu0 0.0
    %3012 = vmatprep.subr.mxu0 0.0
    %3013 = vmatpush1.msra.mxu0 0.0
    %3014 = vmatprep.mubr.f32.mxu0 0.0
    %3015 = vmatmul.mubr.f32.gmra.mrb[0].mxu0 %v2945
    %v3016 = vpop.f32.mrb[0].mxu0
    %v3017 = vadd.f32 0.0, %v3016
    %v3018 = vpop.f32.mrb[0].mxu0
    %3019 = vmatprep.mubr.f32.mxu0 0.0
    %3020 = vmatmul.mubr.f32.gmra.mrb[0].mxu0 %v2948
    %v3021 = vpop.f32.mrb[0].mxu0
    %v3022 = vadd.f32 0.0, %v3021
    %v3023 = vpop.f32.mrb[0].mxu0
    %3024 = vdwg.mxu0
    %3025 = vrot.lane.b32.xlu0 %v2621, 112
    %v3026 = vpop.permute.xlu0 %3025
    %3027 = vrot.lane.b32.xlu0 %v2624, 112
    %v3028 = vpop.permute.xlu0 %3027
    %3029 = vrot.lane.b32.xlu0 %v2621, 80
    %v3030 = vpop.permute.xlu0 %3029
    %3031 = vrot.lane.b32.xlu0 %v2624, 80
    %v3032 = vpop.permute.xlu0 %3031
    %v3033 = vsel %vm248, %v3026, 0
    %v3035 = vsel %vm248, %v3028, 0
    %v3037 = vsel %vm248, %v3030, 0
    %v3039 = vsel %vm248, %v3032, 0
    %3041 = vmatprep.subr.mxu0 0.0
    %3042 = vmatpush1.xpose.msra.mxu0 %v3037
    %3043 = vmatprep.subr.mxu0 0.0
    %3044 = vmatpush1.xpose.msra.mxu0 %v3039
    %3045 = vmatprep.subr.mxu0 0.0
    %3046 = vmatpush1.xpose.msra.mxu0 0.0
    %3047 = vmatprep.subr.mxu0 0.0
    %3048 = vmatpush1.xpose.msra.mxu0 0.0
    %3049 = vmatprep.subr.mxu0 0.0
    %3050 = vmatpush1.xpose.msra.mxu0 0.0
    %3051 = vmatprep.subr.mxu0 0.0
    %3052 = vmatpush1.xpose.msra.mxu0 0.0
    %3053 = vmatprep.subr.mxu0 0.0
    %3054 = vmatpush1.xpose.msra.mxu0 0.0
    %3055 = vmatprep.subr.mxu0 0.0
    %3056 = vmatpush1.xpose.msra.mxu0 0.0
    %3057 = vmatprep.subr.mxu0 0.0
    %3058 = vmatpush1.xpose.msra.mxu0 0.0
    %3059 = vmatprep.subr.mxu0 0.0
    %3060 = vmatpush1.xpose.msra.mxu0 0.0
    %3061 = vmatprep.subr.mxu0 0.0
    %3062 = vmatpush1.xpose.msra.mxu0 0.0
    %3063 = vmatprep.subr.mxu0 0.0
    %3064 = vmatpush1.xpose.msra.mxu0 0.0
    %3065 = vmatprep.subr.mxu0 0.0
    %3066 = vmatpush1.xpose.msra.mxu0 0.0
    %3067 = vmatprep.subr.mxu0 0.0
    %3068 = vmatpush1.xpose.msra.mxu0 0.0
    %3069 = vmatprep.subr.mxu0 0.0
    %3070 = vmatpush1.xpose.msra.mxu0 0.0
    %3071 = vmatprep.subr.mxu0 0.0
    %3072 = vmatpush1.xpose.msra.mxu0 0.0
    %3073 = vmatprep.subr.mxu0 0.0
    %3074 = vmatpush1.xpose.msra.mxu0 0.0
    %3075 = vmatprep.subr.mxu0 0.0
    %3076 = vmatpush1.xpose.msra.mxu0 0.0
    %3077 = vmatprep.subr.mxu0 0.0
    %3078 = vmatpush1.xpose.msra.mxu0 0.0
    %3079 = vmatprep.subr.mxu0 0.0
    %3080 = vmatpush1.xpose.msra.mxu0 0.0
    %3081 = vmatprep.subr.mxu0 0.0
    %3082 = vmatpush1.xpose.msra.mxu0 0.0
    %3083 = vmatprep.subr.mxu0 0.0
    %3084 = vmatpush1.xpose.msra.mxu0 0.0
    %3085 = vmatprep.subr.mxu0 0.0
    %3086 = vmatpush1.xpose.msra.mxu0 0.0
    %3087 = vmatprep.subr.mxu0 0.0
    %3088 = vmatpush1.xpose.msra.mxu0 0.0
    %3089 = vmatprep.subr.mxu0 0.0
    %3090 = vmatpush1.xpose.msra.mxu0 0.0
    %3091 = vmatprep.subr.mxu0 0.0
    %3092 = vmatpush1.xpose.msra.mxu0 0.0
    %3093 = vmatprep.subr.mxu0 0.0
    %3094 = vmatpush1.xpose.msra.mxu0 0.0
    %3095 = vmatprep.subr.mxu0 0.0
    %3096 = vmatpush1.xpose.msra.mxu0 0.0
    %3097 = vmatprep.subr.mxu0 0.0
    %3098 = vmatpush1.xpose.msra.mxu0 0.0
    %3099 = vmatprep.subr.mxu0 0.0
    %3100 = vmatpush1.xpose.msra.mxu0 0.0
    %3101 = vmatprep.subr.mxu0 0.0
    %3102 = vmatpush1.xpose.msra.mxu0 0.0
    %3103 = vmatprep.subr.mxu0 0.0
    %3104 = vmatpush1.xpose.msra.mxu0 0.0
    %3105 = vmatprep.mubr.f32.mxu0 0.0
    %3106 = vmatmul.mubr.f32.gmra.mrb[0].mxu0 %v3033
    %v3107 = vpop.f32.mrb[0].mxu0
    %v3108 = vadd.f32 %v134, %v3107
    %v3109 = vpop.f32.mrb[0].mxu0
    %3110 = vmatprep.mubr.f32.mxu0 0.0
    %3111 = vmatmul.mubr.f32.gmra.mrb[0].mxu0 %v3035
    %v3112 = vpop.f32.mrb[0].mxu0
    %v3113 = vadd.f32 %v135, %v3112
    %v3114 = vpop.f32.mrb[0].mxu0
    %3115 = vdwg.mxu0
    %v3116 = vsel %vm332, %v3108, -inf
    %3117 = vmax.xlane.f32.xlu0 %v3116
    %v3118 = vpop.xlane.xlu0 %3117
    %v3119 = vsel %vm332, %v3113, -inf
    %3120 = vmax.xlane.f32.xlu0 %v3119
    %v3121 = vpop.xlane.xlu0 %3120
    %v3122 = vsub.f32 %v3108, %v3118
    %v3123 = vsub.f32 %v3113, %v3121
    %v3124 = vmul.f32 %v3122, 1.442695
    %v3125 = vpow.pop %v3124
    %v3126 = vmul.f32 %v3123, 1.442695
    %v3127 = vpow.pop %v3126
    %v3128 = vsel %vm332, %v3125, 0.0
    %3129 = vadd.xlane.f32.xlu0 %v3128
    %v3130 = vpop.xlane.xlu0 %3129
    %v3131 = vsel %vm332, %v3127, 0.0
    %3132 = vadd.xlane.f32.xlu0 %v3131
    %v3133 = vpop.xlane.xlu0 %3132
    %v3134 = vrcp.pop %v3130
    %v3135 = vrcp.pop %v3133
    %v3136 = vmul.f32 %v3125, %v3134
    %v3137 = vmul.f32 %v3127, %v3135
    %3138 = vrot.lane.b32.xlu0 %v2621, 48
    %v3139 = vpop.permute.xlu0 %3138
    %3140 = vrot.lane.b32.xlu0 %v2624, 48
    %v3141 = vpop.permute.xlu0 %3140
    %v3145 = vsel %vm332, %v3136, 0
    %v3148 = vsel %vm332, %v3137, 0
    %3150 = vmatprep.subr.mxu0 0.0
    %3151 = vmatpush1.msra.mxu0 %v3139
    %3152 = vmatprep.subr.mxu0 0.0
    %3153 = vmatpush1.msra.mxu0 %v3141
    %3154 = vmatprep.subr.mxu0 0.0
    %3155 = vmatpush1.msra.mxu0 0.0
    %3156 = vmatprep.subr.mxu0 0.0
    %3157 = vmatpush1.msra.mxu0 0.0
    %3158 = vmatprep.subr.mxu0 0.0
    %3159 = vmatpush1.msra.mxu0 0.0
    %3160 = vmatprep.subr.mxu0 0.0
    %3161 = vmatpush1.msra.mxu0 0.0
    %3162 = vmatprep.subr.mxu0 0.0
    %3163 = vmatpush1.msra.mxu0 0.0
    %3164 = vmatprep.subr.mxu0 0.0
    %3165 = vmatpush1.msra.mxu0 0.0
    %3166 = vmatprep.subr.mxu0 0.0
    %3167 = vmatpush1.msra.mxu0 0.0
    %3168 = vmatprep.subr.mxu0 0.0
    %3169 = vmatpush1.msra.mxu0 0.0
    %3170 = vmatprep.subr.mxu0 0.0
    %3171 = vmatpush1.msra.mxu0 0.0
    %3172 = vmatprep.subr.mxu0 0.0
    %3173 = vmatpush1.msra.mxu0 0.0
    %3174 = vmatprep.subr.mxu0 0.0
    %3175 = vmatpush1.msra.mxu0 0.0
    %3176 = vmatprep.subr.mxu0 0.0
    %3177 = vmatpush1.msra.mxu0 0.0
    %3178 = vmatprep.subr.mxu0 0.0
    %3179 = vmatpush1.msra.mxu0 0.0
    %3180 = vmatprep.subr.mxu0 0.0
    %3181 = vmatpush1.msra.mxu0 0.0
    %3182 = vmatprep.subr.mxu0 0.0
    %3183 = vmatpush1.msra.mxu0 0.0
    %3184 = vmatprep.subr.mxu0 0.0
    %3185 = vmatpush1.msra.mxu0 0.0
    %3186 = vmatprep.subr.mxu0 0.0
    %3187 = vmatpush1.msra.mxu0 0.0
    %3188 = vmatprep.subr.mxu0 0.0
    %3189 = vmatpush1.msra.mxu0 0.0
    %3190 = vmatprep.subr.mxu0 0.0
    %3191 = vmatpush1.msra.mxu0 0.0
    %3192 = vmatprep.subr.mxu0 0.0
    %3193 = vmatpush1.msra.mxu0 0.0
    %3194 = vmatprep.subr.mxu0 0.0
    %3195 = vmatpush1.msra.mxu0 0.0
    %3196 = vmatprep.subr.mxu0 0.0
    %3197 = vmatpush1.msra.mxu0 0.0
    %3198 = vmatprep.subr.mxu0 0.0
    %3199 = vmatpush1.msra.mxu0 0.0
    %3200 = vmatprep.subr.mxu0 0.0
    %3201 = vmatpush1.msra.mxu0 0.0
    %3202 = vmatprep.subr.mxu0 0.0
    %3203 = vmatpush1.msra.mxu0 0.0
    %3204 = vmatprep.subr.mxu0 0.0
    %3205 = vmatpush1.msra.mxu0 0.0
    %3206 = vmatprep.subr.mxu0 0.0
    %3207 = vmatpush1.msra.mxu0 0.0
    %3208 = vmatprep.subr.mxu0 0.0
    %3209 = vmatpush1.msra.mxu0 0.0
    %3210 = vmatprep.subr.mxu0 0.0
    %3211 = vmatpush1.msra.mxu0 0.0
    %3212 = vmatprep.subr.mxu0 0.0
    %3213 = vmatpush1.msra.mxu0 0.0
    %3214 = vmatprep.mubr.f32.mxu0 0.0
    %3215 = vmatmul.mubr.f32.gmra.mrb[0].mxu0 %v3145
    %v3216 = vpop.f32.mrb[0].mxu0
    %v3217 = vadd.f32 0.0, %v3216
    %v3218 = vpop.f32.mrb[0].mxu0
    %3219 = vmatprep.mubr.f32.mxu0 0.0
    %3220 = vmatmul.mubr.f32.gmra.mrb[0].mxu0 %v3148
    %v3221 = vpop.f32.mrb[0].mxu0
    %v3222 = vadd.f32 0.0, %v3221
    %v3223 = vpop.f32.mrb[0].mxu0
    %3224 = vdwg.mxu0
    %3225 = vrot.lane.b32.xlu0 %v2621, 104
    %v3226 = vpop.permute.xlu0 %3225
    %3227 = vrot.lane.b32.xlu0 %v2624, 104
    %v3228 = vpop.permute.xlu0 %3227
    %3229 = vrot.lane.b32.xlu0 %v2621, 72
    %v3230 = vpop.permute.xlu0 %3229
    %3231 = vrot.lane.b32.xlu0 %v2624, 72
    %v3232 = vpop.permute.xlu0 %3231
    %v3233 = vsel %vm248, %v3226, 0
    %v3235 = vsel %vm248, %v3228, 0
    %v3237 = vsel %vm248, %v3230, 0
    %v3239 = vsel %vm248, %v3232, 0
    %3241 = vmatprep.subr.mxu0 0.0
    %3242 = vmatpush1.xpose.msra.mxu0 %v3237
    %3243 = vmatprep.subr.mxu0 0.0
    %3244 = vmatpush1.xpose.msra.mxu0 %v3239
    %3245 = vmatprep.subr.mxu0 0.0
    %3246 = vmatpush1.xpose.msra.mxu0 0.0
    %3247 = vmatprep.subr.mxu0 0.0
    %3248 = vmatpush1.xpose.msra.mxu0 0.0
    %3249 = vmatprep.subr.mxu0 0.0
    %3250 = vmatpush1.xpose.msra.mxu0 0.0
    %3251 = vmatprep.subr.mxu0 0.0
    %3252 = vmatpush1.xpose.msra.mxu0 0.0
    %3253 = vmatprep.subr.mxu0 0.0
    %3254 = vmatpush1.xpose.msra.mxu0 0.0
    %3255 = vmatprep.subr.mxu0 0.0
    %3256 = vmatpush1.xpose.msra.mxu0 0.0
    %3257 = vmatprep.subr.mxu0 0.0
    %3258 = vmatpush1.xpose.msra.mxu0 0.0
    %3259 = vmatprep.subr.mxu0 0.0
    %3260 = vmatpush1.xpose.msra.mxu0 0.0
    %3261 = vmatprep.subr.mxu0 0.0
    %3262 = vmatpush1.xpose.msra.mxu0 0.0
    %3263 = vmatprep.subr.mxu0 0.0
    %3264 = vmatpush1.xpose.msra.mxu0 0.0
    %3265 = vmatprep.subr.mxu0 0.0
    %3266 = vmatpush1.xpose.msra.mxu0 0.0
    %3267 = vmatprep.subr.mxu0 0.0
    %3268 = vmatpush1.xpose.msra.mxu0 0.0
    %3269 = vmatprep.subr.mxu0 0.0
    %3270 = vmatpush1.xpose.msra.mxu0 0.0
    %3271 = vmatprep.subr.mxu0 0.0
    %3272 = vmatpush1.xpose.msra.mxu0 0.0
    %3273 = vmatprep.subr.mxu0 0.0
    %3274 = vmatpush1.xpose.msra.mxu0 0.0
    %3275 = vmatprep.subr.mxu0 0.0
    %3276 = vmatpush1.xpose.msra.mxu0 0.0
    %3277 = vmatprep.subr.mxu0 0.0
    %3278 = vmatpush1.xpose.msra.mxu0 0.0
    %3279 = vmatprep.subr.mxu0 0.0
    %3280 = vmatpush1.xpose.msra.mxu0 0.0
    %3281 = vmatprep.subr.mxu0 0.0
    %3282 = vmatpush1.xpose.msra.mxu0 0.0
    %3283 = vmatprep.subr.mxu0 0.0
    %3284 = vmatpush1.xpose.msra.mxu0 0.0
    %3285 = vmatprep.subr.mxu0 0.0
    %3286 = vmatpush1.xpose.msra.mxu0 0.0
    %3287 = vmatprep.subr.mxu0 0.0
    %3288 = vmatpush1.xpose.msra.mxu0 0.0
    %3289 = vmatprep.subr.mxu0 0.0
    %3290 = vmatpush1.xpose.msra.mxu0 0.0
    %3291 = vmatprep.subr.mxu0 0.0
    %3292 = vmatpush1.xpose.msra.mxu0 0.0
    %3293 = vmatprep.subr.mxu0 0.0
    %3294 = vmatpush1.xpose.msra.mxu0 0.0
    %3295 = vmatprep.subr.mxu0 0.0
    %3296 = vmatpush1.xpose.msra.mxu0 0.0
    %3297 = vmatprep.subr.mxu0 0.0
    %3298 = vmatpush1.xpose.msra.mxu0 0.0
    %3299 = vmatprep.subr.mxu0 0.0
    %3300 = vmatpush1.xpose.msra.mxu0 0.0
    %3301 = vmatprep.subr.mxu0 0.0
    %3302 = vmatpush1.xpose.msra.mxu0 0.0
    %3303 = vmatprep.subr.mxu0 0.0
    %3304 = vmatpush1.xpose.msra.mxu0 0.0
    %3305 = vmatprep.mubr.f32.mxu0 0.0
    %3306 = vmatmul.mubr.f32.gmra.mrb[0].mxu0 %v3233
    %v3307 = vpop.f32.mrb[0].mxu0
    %v3308 = vadd.f32 %v134, %v3307
    %v3309 = vpop.f32.mrb[0].mxu0
    %3310 = vmatprep.mubr.f32.mxu0 0.0
    %3311 = vmatmul.mubr.f32.gmra.mrb[0].mxu0 %v3235
    %v3312 = vpop.f32.mrb[0].mxu0
    %v3313 = vadd.f32 %v135, %v3312
    %v3314 = vpop.f32.mrb[0].mxu0
    %3315 = vdwg.mxu0
    %v3316 = vsel %vm332, %v3308, -inf
    %3317 = vmax.xlane.f32.xlu0 %v3316
    %v3318 = vpop.xlane.xlu0 %3317
    %v3319 = vsel %vm332, %v3313, -inf
    %3320 = vmax.xlane.f32.xlu0 %v3319
    %v3321 = vpop.xlane.xlu0 %3320
    %v3322 = vsub.f32 %v3308, %v3318
    %v3323 = vsub.f32 %v3313, %v3321
    %v3324 = vmul.f32 %v3322, 1.442695
    %v3325 = vpow.pop %v3324
    %v3326 = vmul.f32 %v3323, 1.442695
    %v3327 = vpow.pop %v3326
    %v3328 = vsel %vm332, %v3325, 0.0
    %3329 = vadd.xlane.f32.xlu0 %v3328
    %v3330 = vpop.xlane.xlu0 %3329
    %v3331 = vsel %vm332, %v3327, 0.0
    %3332 = vadd.xlane.f32.xlu0 %v3331
    %v3333 = vpop.xlane.xlu0 %3332
    %v3334 = vrcp.pop %v3330
    %v3335 = vrcp.pop %v3333
    %v3336 = vmul.f32 %v3325, %v3334
    %v3337 = vmul.f32 %v3327, %v3335
    %3338 = vrot.lane.b32.xlu0 %v2621, 40
    %v3339 = vpop.permute.xlu0 %3338
    %3340 = vrot.lane.b32.xlu0 %v2624, 40
    %v3341 = vpop.permute.xlu0 %3340
    %v3345 = vsel %vm332, %v3336, 0
    %v3348 = vsel %vm332, %v3337, 0
    %3350 = vmatprep.subr.mxu0 0.0
    %3351 = vmatpush1.msra.mxu0 %v3339
    %3352 = vmatprep.subr.mxu0 0.0
    %3353 = vmatpush1.msra.mxu0 %v3341
    %3354 = vmatprep.subr.mxu0 0.0
    %3355 = vmatpush1.msra.mxu0 0.0
    %3356 = vmatprep.subr.mxu0 0.0
    %3357 = vmatpush1.msra.mxu0 0.0
    %3358 = vmatprep.subr.mxu0 0.0
    %3359 = vmatpush1.msra.mxu0 0.0
    %3360 = vmatprep.subr.mxu0 0.0
    %3361 = vmatpush1.msra.mxu0 0.0
    %3362 = vmatprep.subr.mxu0 0.0
    %3363 = vmatpush1.msra.mxu0 0.0
    %3364 = vmatprep.subr.mxu0 0.0
    %3365 = vmatpush1.msra.mxu0 0.0
    %3366 = vmatprep.subr.mxu0 0.0
    %3367 = vmatpush1.msra.mxu0 0.0
    %3368 = vmatprep.subr.mxu0 0.0
    %3369 = vmatpush1.msra.mxu0 0.0
    %3370 = vmatprep.subr.mxu0 0.0
    %3371 = vmatpush1.msra.mxu0 0.0
    %3372 = vmatprep.subr.mxu0 0.0
    %3373 = vmatpush1.msra.mxu0 0.0
    %3374 = vmatprep.subr.mxu0 0.0
    %3375 = vmatpush1.msra.mxu0 0.0
    %3376 = vmatprep.subr.mxu0 0.0
    %3377 = vmatpush1.msra.mxu0 0.0
    %3378 = vmatprep.subr.mxu0 0.0
    %3379 = vmatpush1.msra.mxu0 0.0
    %3380 = vmatprep.subr.mxu0 0.0
    %3381 = vmatpush1.msra.mxu0 0.0
    %3382 = vmatprep.subr.mxu0 0.0
    %3383 = vmatpush1.msra.mxu0 0.0
    %3384 = vmatprep.subr.mxu0 0.0
    %3385 = vmatpush1.msra.mxu0 0.0
    %3386 = vmatprep.subr.mxu0 0.0
    %3387 = vmatpush1.msra.mxu0 0.0
    %3388 = vmatprep.subr.mxu0 0.0
    %3389 = vmatpush1.msra.mxu0 0.0
    %3390 = vmatprep.subr.mxu0 0.0
    %3391 = vmatpush1.msra.mxu0 0.0
    %3392 = vmatprep.subr.mxu0 0.0
    %3393 = vmatpush1.msra.mxu0 0.0
    %3394 = vmatprep.subr.mxu0 0.0
    %3395 = vmatpush1.msra.mxu0 0.0
    %3396 = vmatprep.subr.mxu0 0.0
    %3397 = vmatpush1.msra.mxu0 0.0
    %3398 = vmatprep.subr.mxu0 0.0
    %3399 = vmatpush1.msra.mxu0 0.0
    %3400 = vmatprep.subr.mxu0 0.0
    %3401 = vmatpush1.msra.mxu0 0.0
    %3402 = vmatprep.subr.mxu0 0.0
    %3403 = vmatpush1.msra.mxu0 0.0
    %3404 = vmatprep.subr.mxu0 0.0
    %3405 = vmatpush1.msra.mxu0 0.0
    %3406 = vmatprep.subr.mxu0 0.0
    %3407 = vmatpush1.msra.mxu0 0.0
    %3408 = vmatprep.subr.mxu0 0.0
    %3409 = vmatpush1.msra.mxu0 0.0
    %3410 = vmatprep.subr.mxu0 0.0
    %3411 = vmatpush1.msra.mxu0 0.0
    %3412 = vmatprep.subr.mxu0 0.0
    %3413 = vmatpush1.msra.mxu0 0.0
    %3414 = vmatprep.mubr.f32.mxu0 0.0
    %3415 = vmatmul.mubr.f32.gmra.mrb[0].mxu0 %v3345
    %v3416 = vpop.f32.mrb[0].mxu0
    %v3417 = vadd.f32 0.0, %v3416
    %v3418 = vpop.f32.mrb[0].mxu0
    %3419 = vmatprep.mubr.f32.mxu0 0.0
    %3420 = vmatmul.mubr.f32.gmra.mrb[0].mxu0 %v3348
    %v3421 = vpop.f32.mrb[0].mxu0
    %v3422 = vadd.f32 0.0, %v3421
    %v3423 = vpop.f32.mrb[0].mxu0
    %3424 = vdwg.mxu0
    %3427 = vrot.lane.b32.xlu0 %v3017, 8
    %v3428 = vpop.permute.xlu0 %3427
    %3429 = vrot.lane.b32.xlu0 %v3022, 8
    %v3430 = vpop.permute.xlu0 %3429
    %3435 = vrot.lane.b32.xlu0 %v3217, 16
    %v3436 = vpop.permute.xlu0 %3435
    %3437 = vrot.lane.b32.xlu0 %v3222, 16
    %v3438 = vpop.permute.xlu0 %3437
    %3443 = vrot.lane.b32.xlu0 %v3417, 24
    %v3444 = vpop.permute.xlu0 %3443
    %3445 = vrot.lane.b32.xlu0 %v3422, 24
    %v3446 = vpop.permute.xlu0 %3445
    %v3449 = vsel %vm248, %v2817, %v3428
    %v3450 = vsel %vm248, %v2822, %v3430
    %v3451 = vsel %vm332, %v3449, %v3436
    %v3452 = vsel %vm332, %v3450, %v3438
    %v3453 = vsel %vm1070, %v3451, %v3444
    %v3454 = vsel %vm1070, %v3452, %v3446
    %v3455 = vpack.c.bf16 %v3454, %v3453
    %s3456 = scalar_lea.vmem %s5, 32
    %v3457 = vld [vmem:[%s3456] sm:$0xf]
    %v3458 = vld [vmem:[%s3456 + $0x4] sm:$0xf]
    %v3459 = vld [vmem:[%s3456 + $0x8] sm:$0xf]
    %v3460 = vld [vmem:[%s3456 + $0xc] sm:$0xf]
    %v3461 = vlaneseq
    %v3462 = vshrl.u32 %v3461, 7
    %v3463 = vsub.s32 1, %v3462
    %v3464 = vrot.slane %v2522, %v3463
    %v3469 = vunpack.c.l.b16 %v3457
    %v3470 = vunpack.c.l.b16 %v3458
    %v3471 = vunpack.c.l.b16 %v3459
    %v3472 = vunpack.c.l.b16 %v3460
    %v3473 = vpack.c.b16 %v3470, %v3469
    %v3474 = vpack.c.b16 %v3472, %v3471
    %v3478 = vsel %vm137, %v3455, 0
    %3480 = vmatprep.subr.bf16.mxu0 0
    %3481 = vmatpush1.bf16.msra.mxu0 %v3473
    %3482 = vmatprep.subr.bf16.mxu0 0
    %3483 = vmatpush1.bf16.msra.mxu0 %v3474
    %3484 = vmatprep.subr.bf16.mxu0 0
    %3485 = vmatpush1.bf16.msra.mxu0 0
    %3486 = vmatprep.subr.bf16.mxu0 0
    %3487 = vmatpush1.bf16.msra.mxu0 0
    %3488 = vmatprep.subr.bf16.mxu0 0
    %3489 = vmatpush1.bf16.msra.mxu0 0
    %3490 = vmatprep.subr.bf16.mxu0 0
    %3491 = vmatpush1.bf16.msra.mxu0 0
    %3492 = vmatprep.subr.bf16.mxu0 0
    %3493 = vmatpush1.bf16.msra.mxu0 0
    %3494 = vmatprep.subr.bf16.mxu0 0
    %3495 = vmatpush1.bf16.msra.mxu0 0
    %3496 = vmatprep.subr.bf16.mxu0 0
    %3497 = vmatpush1.bf16.msra.mxu0 0
    %3498 = vmatprep.subr.bf16.mxu0 0
    %3499 = vmatpush1.bf16.msra.mxu0 0
    %3500 = vmatprep.subr.bf16.mxu0 0
    %3501 = vmatpush1.bf16.msra.mxu0 0
    %3502 = vmatprep.subr.bf16.mxu0 0
    %3503 = vmatpush1.bf16.msra.mxu0 0
    %3504 = vmatprep.subr.bf16.mxu0 0
    %3505 = vmatpush1.bf16.msra.mxu0 0
    %3506 = vmatprep.subr.bf16.mxu0 0
    %3507 = vmatpush1.bf16.msra.mxu0 0
    %3508 = vmatprep.subr.bf16.mxu0 0
    %3509 = vmatpush1.bf16.msra.mxu0 0
    %3510 = vmatprep.subr.bf16.mxu0 0
    %3511 = vmatpush1.bf16.msra.mxu0 0
    %3512 = vmatprep.mubr.bf16.mxu0 0
    %3513 = vmatmul.mubr.bf16.gmra.mrb[0].mxu0 %v3478
    %v3514 = vpop.f32.mrb[0].mxu0
    %v3515 = vadd.f32 %v3464, %v3514
    %v3516 = vpop.f32.mrb[0].mxu0
    %v3517 = vpop.f32.mrb[0].mxu0
    %v3518 = vadd.f32 %v3464, %v3517
    %v3519 = vpop.f32.mrb[0].mxu0
    %3520 = vdwg.mxu0
    %v3521 = vadd.f32 %v2519, %v3515
    %v3522 = vadd.f32 %v2520, %v3518
    %v3523 = vsel %vm137, %v3521, 0.0
    %3524 = vadd.xlane.f32.xlu0 %v3523
    %v3525 = vpop.xlane.xlu0 %3524
    %v3526 = vsel %vm137, %v3522, 0.0
    %3527 = vadd.xlane.f32.xlu0 %v3526
    %v3528 = vpop.xlane.xlu0 %3527
    %v3529 = vmul.f32 %v3525, %v144
    %v3530 = vmul.f32 %v3528, %v144
    %v3531 = vsub.f32 %v3521, %v3529
    %v3532 = vsub.f32 %v3522, %v3530
    %v3533 = vmul.f32 %v3531, %v3531
    %v3534 = vmul.f32 %v3532, %v3532
    %v3535 = vsel %vm137, %v3533, 0.0
    %3536 = vadd.xlane.f32.xlu0 %v3535
    %v3537 = vpop.xlane.xlu0 %3536
    %v3538 = vsel %vm137, %v3534, 0.0
    %3539 = vadd.xlane.f32.xlu0 %v3538
    %v3540 = vpop.xlane.xlu0 %3539
    %v3541 = vmul.f32 %v3537, %v144
    %v3542 = vmul.f32 %v3540, %v144
    %v3543 = vadd.f32 %v3541, 1e-05
    %v3544 = vadd.f32 %v3542, 1e-05
    %v3545 = vrsqrt.pop %v3543
    %v3546 = vrsqrt.pop %v3544
    %v3547 = vmul.f32 %v3531, %v3545
    %v3548 = vmul.f32 %v3532, %v3546
    %v3549 = vlaneseq
    %v3550 = vshrl.u32 %v3549, 7
    %v3551 = vsub.s32 6, %v3550
    %v3552 = vrot.slane %v2522, %v3551
    %v3553 = vmul.f32 %v3547, %v3552
    %v3554 = vmul.f32 %v3548, %v3552
    %v3555 = vlaneseq
    %v3556 = vshrl.u32 %v3555, 7
    %v3557 = vsub.s32 7, %v3556
    %v3558 = vrot.slane %v2522, %v3557
    %v3559 = vadd.f32 %v3553, %v3558
    %v3560 = vadd.f32 %v3554, %v3558
    %v3561 = vpack.c.bf16 %v3560, %v3559
    %s3562 = scalar_lea.vmem %s6, 32
    %v3563 = vld [vmem:[%s3562] sm:$0xf]
    %v3564 = vld [vmem:[%s3562 + $0x4] sm:$0xf]
    %v3565 = vld [vmem:[%s3562 + $0x8] sm:$0xf]
    %v3566 = vld [vmem:[%s3562 + $0xc] sm:$0xf]
    %v3567 = vlaneseq
    %v3568 = vshrl.u32 %v3567, 7
    %v3569 = vsub.s32 2, %v3568
    %v3570 = vrot.slane %v2522, %v3569
    %v3575 = vunpack.c.l.b16 %v3563
    %v3576 = vunpack.c.l.b16 %v3564
    %v3577 = vunpack.c.l.b16 %v3565
    %v3578 = vunpack.c.l.b16 %v3566
    %v3579 = vpack.c.b16 %v3576, %v3575
    %v3580 = vpack.c.b16 %v3578, %v3577
    %v3584 = vsel %vm137, %v3561, 0
    %3586 = vmatprep.subr.bf16.mxu0 0
    %3587 = vmatpush1.bf16.msra.mxu0 %v3579
    %3588 = vmatprep.subr.bf16.mxu0 0
    %3589 = vmatpush1.bf16.msra.mxu0 %v3580
    %3590 = vmatprep.subr.bf16.mxu0 0
    %3591 = vmatpush1.bf16.msra.mxu0 0
    %3592 = vmatprep.subr.bf16.mxu0 0
    %3593 = vmatpush1.bf16.msra.mxu0 0
    %3594 = vmatprep.subr.bf16.mxu0 0
    %3595 = vmatpush1.bf16.msra.mxu0 0
    %3596 = vmatprep.subr.bf16.mxu0 0
    %3597 = vmatpush1.bf16.msra.mxu0 0
    %3598 = vmatprep.subr.bf16.mxu0 0
    %3599 = vmatpush1.bf16.msra.mxu0 0
    %3600 = vmatprep.subr.bf16.mxu0 0
    %3601 = vmatpush1.bf16.msra.mxu0 0
    %3602 = vmatprep.subr.bf16.mxu0 0
    %3603 = vmatpush1.bf16.msra.mxu0 0
    %3604 = vmatprep.subr.bf16.mxu0 0
    %3605 = vmatpush1.bf16.msra.mxu0 0
    %3606 = vmatprep.subr.bf16.mxu0 0
    %3607 = vmatpush1.bf16.msra.mxu0 0
    %3608 = vmatprep.subr.bf16.mxu0 0
    %3609 = vmatpush1.bf16.msra.mxu0 0
    %3610 = vmatprep.subr.bf16.mxu0 0
    %3611 = vmatpush1.bf16.msra.mxu0 0
    %3612 = vmatprep.subr.bf16.mxu0 0
    %3613 = vmatpush1.bf16.msra.mxu0 0
    %3614 = vmatprep.subr.bf16.mxu0 0
    %3615 = vmatpush1.bf16.msra.mxu0 0
    %3616 = vmatprep.subr.bf16.mxu0 0
    %3617 = vmatpush1.bf16.msra.mxu0 0
    %3618 = vmatprep.mubr.bf16.mxu0 0
    %3619 = vmatmul.mubr.bf16.gmra.mrb[0].mxu0 %v3584
    %v3620 = vpop.f32.mrb[0].mxu0
    %v3621 = vadd.f32 %v3570, %v3620
    %v3622 = vpop.f32.mrb[0].mxu0
    %v3623 = vpop.f32.mrb[0].mxu0
    %v3624 = vadd.f32 %v3570, %v3623
    %v3625 = vpop.f32.mrb[0].mxu0
    %3626 = vdwg.mxu0
    %v3627 = vmax.f32 %v3621, 0.0
    %v3628 = vmax.f32 %v3624, 0.0
    %v3629 = vpack.c.bf16 %v3628, %v3627
    %s3630 = scalar_lea.vmem %s7, 64
    %v3631 = vld [vmem:[%s3630] sm:$0xf]
    %v3632 = vld [vmem:[%s3630 + $0x4] sm:$0xf]
    %v3633 = vld [vmem:[%s3630 + $0x8] sm:$0xf]
    %v3634 = vld [vmem:[%s3630 + $0xc] sm:$0xf]
    %v3635 = vld [vmem:[%s3630 + $0x10] sm:$0xf]
    %v3636 = vld [vmem:[%s3630 + $0x14] sm:$0xf]
    %v3637 = vld [vmem:[%s3630 + $0x18] sm:$0xf]
    %v3638 = vld [vmem:[%s3630 + $0x1c] sm:$0xf]
    %v3639 = vlaneseq
    %v3640 = vshrl.u32 %v3639, 7
    %v3641 = vsub.s32 3, %v3640
    %v3642 = vrot.slane %v2522, %v3641
    %v3651 = vunpack.c.l.b16 %v3631
    %v3652 = vunpack.c.l.b16 %v3632
    %v3653 = vunpack.c.l.b16 %v3633
    %v3654 = vunpack.c.l.b16 %v3634
    %v3655 = vunpack.c.l.b16 %v3635
    %v3656 = vunpack.c.l.b16 %v3636
    %v3657 = vunpack.c.l.b16 %v3637
    %v3658 = vunpack.c.l.b16 %v3638
    %v3659 = vpack.c.b16 %v3652, %v3651
    %v3660 = vpack.c.b16 %v3654, %v3653
    %v3661 = vpack.c.b16 %v3656, %v3655
    %v3662 = vpack.c.b16 %v3658, %v3657
    %v3668 = vsel %vm1282, %v3629, 0
    %3670 = vmatprep.subr.bf16.mxu0 0
    %3671 = vmatpush1.bf16.msra.mxu0 %v3659
    %3672 = vmatprep.subr.bf16.mxu0 0
    %3673 = vmatpush1.bf16.msra.mxu0 %v3660
    %3674 = vmatprep.subr.bf16.mxu0 0
    %3675 = vmatpush1.bf16.msra.mxu0 %v3661
    %3676 = vmatprep.subr.bf16.mxu0 0
    %3677 = vmatpush1.bf16.msra.mxu0 %v3662
    %3678 = vmatprep.subr.bf16.mxu0 0
    %3679 = vmatpush1.bf16.msra.mxu0 0
    %3680 = vmatprep.subr.bf16.mxu0 0
    %3681 = vmatpush1.bf16.msra.mxu0 0
    %3682 = vmatprep.subr.bf16.mxu0 0
    %3683 = vmatpush1.bf16.msra.mxu0 0
    %3684 = vmatprep.subr.bf16.mxu0 0
    %3685 = vmatpush1.bf16.msra.mxu0 0
    %3686 = vmatprep.subr.bf16.mxu0 0
    %3687 = vmatpush1.bf16.msra.mxu0 0
    %3688 = vmatprep.subr.bf16.mxu0 0
    %3689 = vmatpush1.bf16.msra.mxu0 0
    %3690 = vmatprep.subr.bf16.mxu0 0
    %3691 = vmatpush1.bf16.msra.mxu0 0
    %3692 = vmatprep.subr.bf16.mxu0 0
    %3693 = vmatpush1.bf16.msra.mxu0 0
    %3694 = vmatprep.subr.bf16.mxu0 0
    %3695 = vmatpush1.bf16.msra.mxu0 0
    %3696 = vmatprep.subr.bf16.mxu0 0
    %3697 = vmatpush1.bf16.msra.mxu0 0
    %3698 = vmatprep.subr.bf16.mxu0 0
    %3699 = vmatpush1.bf16.msra.mxu0 0
    %3700 = vmatprep.subr.bf16.mxu0 0
    %3701 = vmatpush1.bf16.msra.mxu0 0
    %3702 = vmatprep.mubr.bf16.mxu0 0
    %3703 = vmatmul.mubr.bf16.gmra.mrb[0].mxu0 %v3668
    %v3704 = vpop.f32.mrb[0].mxu0
    %v3705 = vadd.f32 %v3642, %v3704
    %v3706 = vpop.f32.mrb[0].mxu0
    %v3707 = vpop.f32.mrb[0].mxu0
    %v3708 = vadd.f32 %v3642, %v3707
    %v3709 = vpop.f32.mrb[0].mxu0
    %3710 = vdwg.mxu0
    %v3711 = vadd.f32 %v3521, %v3705
    %v3712 = vadd.f32 %v3522, %v3708
    %s3713 = scalar_lea.vmem %s8, 24
    %v3714 = vld [vmem:[%s3713] sm:$0xff]
    %v3715 = vsel %vm137, %v3711, 0.0
    %3716 = vadd.xlane.f32.xlu0 %v3715
    %v3717 = vpop.xlane.xlu0 %3716
    %v3718 = vsel %vm137, %v3712, 0.0
    %3719 = vadd.xlane.f32.xlu0 %v3718
    %v3720 = vpop.xlane.xlu0 %3719
    %v3721 = vmul.f32 %v3717, %v144
    %v3722 = vmul.f32 %v3720, %v144
    %v3723 = vsub.f32 %v3711, %v3721
    %v3724 = vsub.f32 %v3712, %v3722
    %v3725 = vmul.f32 %v3723, %v3723
    %v3726 = vmul.f32 %v3724, %v3724
    %v3727 = vsel %vm137, %v3725, 0.0
    %3728 = vadd.xlane.f32.xlu0 %v3727
    %v3729 = vpop.xlane.xlu0 %3728
    %v3730 = vsel %vm137, %v3726, 0.0
    %3731 = vadd.xlane.f32.xlu0 %v3730
    %v3732 = vpop.xlane.xlu0 %3731
    %v3733 = vmul.f32 %v3729, %v144
    %v3734 = vmul.f32 %v3732, %v144
    %v3735 = vadd.f32 %v3733, 1e-05
    %v3736 = vadd.f32 %v3734, 1e-05
    %v3737 = vrsqrt.pop %v3735
    %v3738 = vrsqrt.pop %v3736
    %v3739 = vmul.f32 %v3723, %v3737
    %v3740 = vmul.f32 %v3724, %v3738
    %v3741 = vlaneseq
    %v3742 = vshrl.u32 %v3741, 7
    %v3743 = vsub.s32 4, %v3742
    %v3744 = vrot.slane %v3714, %v3743
    %v3745 = vmul.f32 %v3739, %v3744
    %v3746 = vmul.f32 %v3740, %v3744
    %v3747 = vlaneseq
    %v3748 = vshrl.u32 %v3747, 7
    %v3749 = vsub.s32 5, %v3748
    %v3750 = vrot.slane %v3714, %v3749
    %v3751 = vadd.f32 %v3745, %v3750
    %v3752 = vadd.f32 %v3746, %v3750
    %v3753 = vpack.c.bf16 %v3752, %v3751
    %s3754 = scalar_lea.vmem %s4, 48
    %v3755 = vld [vmem:[%s3754] sm:$0xf]
    %v3756 = vld [vmem:[%s3754 + $0x4] sm:$0xf]
    %v3757 = vld [vmem:[%s3754 + $0x8] sm:$0xf]
    %v3758 = vld [vmem:[%s3754 + $0xc] sm:$0xf]
    %v3759 = vlaneseq
    %v3760 = vshrl.u32 %v3759, 7
    %v3761 = vsub.s32 0, %v3760
    %v3762 = vrot.slane %v3714, %v3761
    %v3767 = vunpack.c.l.b16 %v3755
    %v3768 = vunpack.c.l.b16 %v3756
    %v3769 = vunpack.c.l.b16 %v3757
    %v3770 = vunpack.c.l.b16 %v3758
    %v3771 = vpack.c.b16 %v3768, %v3767
    %v3772 = vpack.c.b16 %v3770, %v3769
    %v3776 = vsel %vm137, %v3753, 0
    %3778 = vmatprep.subr.bf16.mxu0 0
    %3779 = vmatpush1.bf16.msra.mxu0 %v3771
    %3780 = vmatprep.subr.bf16.mxu0 0
    %3781 = vmatpush1.bf16.msra.mxu0 %v3772
    %3782 = vmatprep.subr.bf16.mxu0 0
    %3783 = vmatpush1.bf16.msra.mxu0 0
    %3784 = vmatprep.subr.bf16.mxu0 0
    %3785 = vmatpush1.bf16.msra.mxu0 0
    %3786 = vmatprep.subr.bf16.mxu0 0
    %3787 = vmatpush1.bf16.msra.mxu0 0
    %3788 = vmatprep.subr.bf16.mxu0 0
    %3789 = vmatpush1.bf16.msra.mxu0 0
    %3790 = vmatprep.subr.bf16.mxu0 0
    %3791 = vmatpush1.bf16.msra.mxu0 0
    %3792 = vmatprep.subr.bf16.mxu0 0
    %3793 = vmatpush1.bf16.msra.mxu0 0
    %3794 = vmatprep.subr.bf16.mxu0 0
    %3795 = vmatpush1.bf16.msra.mxu0 0
    %3796 = vmatprep.subr.bf16.mxu0 0
    %3797 = vmatpush1.bf16.msra.mxu0 0
    %3798 = vmatprep.subr.bf16.mxu0 0
    %3799 = vmatpush1.bf16.msra.mxu0 0
    %3800 = vmatprep.subr.bf16.mxu0 0
    %3801 = vmatpush1.bf16.msra.mxu0 0
    %3802 = vmatprep.subr.bf16.mxu0 0
    %3803 = vmatpush1.bf16.msra.mxu0 0
    %3804 = vmatprep.subr.bf16.mxu0 0
    %3805 = vmatpush1.bf16.msra.mxu0 0
    %3806 = vmatprep.subr.bf16.mxu0 0
    %3807 = vmatpush1.bf16.msra.mxu0 0
    %3808 = vmatprep.subr.bf16.mxu0 0
    %3809 = vmatpush1.bf16.msra.mxu0 0
    %3810 = vmatprep.mubr.bf16.mxu0 0
    %3811 = vmatmul.mubr.bf16.gmra.mrb[0].mxu0 %v3776
    %v3812 = vpop.f32.mrb[0].mxu0
    %v3813 = vadd.f32 %v3762, %v3812
    %v3814 = vpop.f32.mrb[0].mxu0
    %v3815 = vpop.f32.mrb[0].mxu0
    %v3816 = vadd.f32 %v3762, %v3815
    %v3817 = vpop.f32.mrb[0].mxu0
    %3818 = vdwg.mxu0
    %3821 = vrot.lane.b32.xlu0 %v3813, 96
    %v3822 = vpop.permute.xlu0 %3821
    %3823 = vrot.lane.b32.xlu0 %v3816, 96
    %v3824 = vpop.permute.xlu0 %3823
    %v3825 = vsel %vm248, %v3813, 0
    %v3827 = vsel %vm248, %v3816, 0
    %v3829 = vsel %vm248, %v3822, 0
    %v3831 = vsel %vm248, %v3824, 0
    %3833 = vmatprep.subr.mxu0 0.0
    %3834 = vmatpush1.xpose.msra.mxu0 %v3829
    %3835 = vmatprep.subr.mxu0 0.0
    %3836 = vmatpush1.xpose.msra.mxu0 %v3831
    %3837 = vmatprep.subr.mxu0 0.0
    %3838 = vmatpush1.xpose.msra.mxu0 0.0
    %3839 = vmatprep.subr.mxu0 0.0
    %3840 = vmatpush1.xpose.msra.mxu0 0.0
    %3841 = vmatprep.subr.mxu0 0.0
    %3842 = vmatpush1.xpose.msra.mxu0 0.0
    %3843 = vmatprep.subr.mxu0 0.0
    %3844 = vmatpush1.xpose.msra.mxu0 0.0
    %3845 = vmatprep.subr.mxu0 0.0
    %3846 = vmatpush1.xpose.msra.mxu0 0.0
    %3847 = vmatprep.subr.mxu0 0.0
    %3848 = vmatpush1.xpose.msra.mxu0 0.0
    %3849 = vmatprep.subr.mxu0 0.0
    %3850 = vmatpush1.xpose.msra.mxu0 0.0
    %3851 = vmatprep.subr.mxu0 0.0
    %3852 = vmatpush1.xpose.msra.mxu0 0.0
    %3853 = vmatprep.subr.mxu0 0.0
    %3854 = vmatpush1.xpose.msra.mxu0 0.0
    %3855 = vmatprep.subr.mxu0 0.0
    %3856 = vmatpush1.xpose.msra.mxu0 0.0
    %3857 = vmatprep.subr.mxu0 0.0
    %3858 = vmatpush1.xpose.msra.mxu0 0.0
    %3859 = vmatprep.subr.mxu0 0.0
    %3860 = vmatpush1.xpose.msra.mxu0 0.0
    %3861 = vmatprep.subr.mxu0 0.0
    %3862 = vmatpush1.xpose.msra.mxu0 0.0
    %3863 = vmatprep.subr.mxu0 0.0
    %3864 = vmatpush1.xpose.msra.mxu0 0.0
    %3865 = vmatprep.subr.mxu0 0.0
    %3866 = vmatpush1.xpose.msra.mxu0 0.0
    %3867 = vmatprep.subr.mxu0 0.0
    %3868 = vmatpush1.xpose.msra.mxu0 0.0
    %3869 = vmatprep.subr.mxu0 0.0
    %3870 = vmatpush1.xpose.msra.mxu0 0.0
    %3871 = vmatprep.subr.mxu0 0.0
    %3872 = vmatpush1.xpose.msra.mxu0 0.0
    %3873 = vmatprep.subr.mxu0 0.0
    %3874 = vmatpush1.xpose.msra.mxu0 0.0
    %3875 = vmatprep.subr.mxu0 0.0
    %3876 = vmatpush1.xpose.msra.mxu0 0.0
    %3877 = vmatprep.subr.mxu0 0.0
    %3878 = vmatpush1.xpose.msra.mxu0 0.0
    %3879 = vmatprep.subr.mxu0 0.0
    %3880 = vmatpush1.xpose.msra.mxu0 0.0
    %3881 = vmatprep.subr.mxu0 0.0
    %3882 = vmatpush1.xpose.msra.mxu0 0.0
    %3883 = vmatprep.subr.mxu0 0.0
    %3884 = vmatpush1.xpose.msra.mxu0 0.0
    %3885 = vmatprep.subr.mxu0 0.0
    %3886 = vmatpush1.xpose.msra.mxu0 0.0
    %3887 = vmatprep.subr.mxu0 0.0
    %3888 = vmatpush1.xpose.msra.mxu0 0.0
    %3889 = vmatprep.subr.mxu0 0.0
    %3890 = vmatpush1.xpose.msra.mxu0 0.0
    %3891 = vmatprep.subr.mxu0 0.0
    %3892 = vmatpush1.xpose.msra.mxu0 0.0
    %3893 = vmatprep.subr.mxu0 0.0
    %3894 = vmatpush1.xpose.msra.mxu0 0.0
    %3895 = vmatprep.subr.mxu0 0.0
    %3896 = vmatpush1.xpose.msra.mxu0 0.0
    %3897 = vmatprep.mubr.f32.mxu0 0.0
    %3898 = vmatmul.mubr.f32.gmra.mrb[0].mxu0 %v3825
    %v3899 = vpop.f32.mrb[0].mxu0
    %v3900 = vadd.f32 %v134, %v3899
    %v3901 = vpop.f32.mrb[0].mxu0
    %3902 = vmatprep.mubr.f32.mxu0 0.0
    %3903 = vmatmul.mubr.f32.gmra.mrb[0].mxu0 %v3827
    %v3904 = vpop.f32.mrb[0].mxu0
    %v3905 = vadd.f32 %v135, %v3904
    %v3906 = vpop.f32.mrb[0].mxu0
    %3907 = vdwg.mxu0
    %v3908 = vsel %vm332, %v3900, -inf
    %3909 = vmax.xlane.f32.xlu0 %v3908
    %v3910 = vpop.xlane.xlu0 %3909
    %v3911 = vsel %vm332, %v3905, -inf
    %3912 = vmax.xlane.f32.xlu0 %v3911
    %v3913 = vpop.xlane.xlu0 %3912
    %v3914 = vsub.f32 %v3900, %v3910
    %v3915 = vsub.f32 %v3905, %v3913
    %v3916 = vmul.f32 %v3914, 1.442695
    %v3917 = vpow.pop %v3916
    %v3918 = vmul.f32 %v3915, 1.442695
    %v3919 = vpow.pop %v3918
    %v3920 = vsel %vm332, %v3917, 0.0
    %3921 = vadd.xlane.f32.xlu0 %v3920
    %v3922 = vpop.xlane.xlu0 %3921
    %v3923 = vsel %vm332, %v3919, 0.0
    %3924 = vadd.xlane.f32.xlu0 %v3923
    %v3925 = vpop.xlane.xlu0 %3924
    %v3926 = vrcp.pop %v3922
    %v3927 = vrcp.pop %v3925
    %v3928 = vmul.f32 %v3917, %v3926
    %v3929 = vmul.f32 %v3919, %v3927
    %3930 = vrot.lane.b32.xlu0 %v3813, 64
    %v3931 = vpop.permute.xlu0 %3930
    %3932 = vrot.lane.b32.xlu0 %v3816, 64
    %v3933 = vpop.permute.xlu0 %3932
    %v3937 = vsel %vm332, %v3928, 0
    %v3940 = vsel %vm332, %v3929, 0
    %3942 = vmatprep.subr.mxu0 0.0
    %3943 = vmatpush1.msra.mxu0 %v3931
    %3944 = vmatprep.subr.mxu0 0.0
    %3945 = vmatpush1.msra.mxu0 %v3933
    %3946 = vmatprep.subr.mxu0 0.0
    %3947 = vmatpush1.msra.mxu0 0.0
    %3948 = vmatprep.subr.mxu0 0.0
    %3949 = vmatpush1.msra.mxu0 0.0
    %3950 = vmatprep.subr.mxu0 0.0
    %3951 = vmatpush1.msra.mxu0 0.0
    %3952 = vmatprep.subr.mxu0 0.0
    %3953 = vmatpush1.msra.mxu0 0.0
    %3954 = vmatprep.subr.mxu0 0.0
    %3955 = vmatpush1.msra.mxu0 0.0
    %3956 = vmatprep.subr.mxu0 0.0
    %3957 = vmatpush1.msra.mxu0 0.0
    %3958 = vmatprep.subr.mxu0 0.0
    %3959 = vmatpush1.msra.mxu0 0.0
    %3960 = vmatprep.subr.mxu0 0.0
    %3961 = vmatpush1.msra.mxu0 0.0
    %3962 = vmatprep.subr.mxu0 0.0
    %3963 = vmatpush1.msra.mxu0 0.0
    %3964 = vmatprep.subr.mxu0 0.0
    %3965 = vmatpush1.msra.mxu0 0.0
    %3966 = vmatprep.subr.mxu0 0.0
    %3967 = vmatpush1.msra.mxu0 0.0
    %3968 = vmatprep.subr.mxu0 0.0
    %3969 = vmatpush1.msra.mxu0 0.0
    %3970 = vmatprep.subr.mxu0 0.0
    %3971 = vmatpush1.msra.mxu0 0.0
    %3972 = vmatprep.subr.mxu0 0.0
    %3973 = vmatpush1.msra.mxu0 0.0
    %3974 = vmatprep.subr.mxu0 0.0
    %3975 = vmatpush1.msra.mxu0 0.0
    %3976 = vmatprep.subr.mxu0 0.0
    %3977 = vmatpush1.msra.mxu0 0.0
    %3978 = vmatprep.subr.mxu0 0.0
    %3979 = vmatpush1.msra.mxu0 0.0
    %3980 = vmatprep.subr.mxu0 0.0
    %3981 = vmatpush1.msra.mxu0 0.0
    %3982 = vmatprep.subr.mxu0 0.0
    %3983 = vmatpush1.msra.mxu0 0.0
    %3984 = vmatprep.subr.mxu0 0.0
    %3985 = vmatpush1.msra.mxu0 0.0
    %3986 = vmatprep.subr.mxu0 0.0
    %3987 = vmatpush1.msra.mxu0 0.0
    %3988 = vmatprep.subr.mxu0 0.0
    %3989 = vmatpush1.msra.mxu0 0.0
    %3990 = vmatprep.subr.mxu0 0.0
    %3991 = vmatpush1.msra.mxu0 0.0
    %3992 = vmatprep.subr.mxu0 0.0
    %3993 = vmatpush1.msra.mxu0 0.0
    %3994 = vmatprep.subr.mxu0 0.0
    %3995 = vmatpush1.msra.mxu0 0.0
    %3996 = vmatprep.subr.mxu0 0.0
    %3997 = vmatpush1.msra.mxu0 0.0
    %3998 = vmatprep.subr.mxu0 0.0
    %3999 = vmatpush1.msra.mxu0 0.0
    %4000 = vmatprep.subr.mxu0 0.0
    %4001 = vmatpush1.msra.mxu0 0.0
    %4002 = vmatprep.subr.mxu0 0.0
    %4003 = vmatpush1.msra.mxu0 0.0
    %4004 = vmatprep.subr.mxu0 0.0
    %4005 = vmatpush1.msra.mxu0 0.0
    %4006 = vmatprep.mubr.f32.mxu0 0.0
    %4007 = vmatmul.mubr.f32.gmra.mrb[0].mxu0 %v3937
    %v4008 = vpop.f32.mrb[0].mxu0
    %v4009 = vadd.f32 0.0, %v4008
    %v4010 = vpop.f32.mrb[0].mxu0
    %4011 = vmatprep.mubr.f32.mxu0 0.0
    %4012 = vmatmul.mubr.f32.gmra.mrb[0].mxu0 %v3940
    %v4013 = vpop.f32.mrb[0].mxu0
    %v4014 = vadd.f32 0.0, %v4013
    %v4015 = vpop.f32.mrb[0].mxu0
    %4016 = vdwg.mxu0
    %4017 = vrot.lane.b32.xlu0 %v3813, 120
    %v4018 = vpop.permute.xlu0 %4017
    %4019 = vrot.lane.b32.xlu0 %v3816, 120
    %v4020 = vpop.permute.xlu0 %4019
    %4021 = vrot.lane.b32.xlu0 %v3813, 88
    %v4022 = vpop.permute.xlu0 %4021
    %4023 = vrot.lane.b32.xlu0 %v3816, 88
    %v4024 = vpop.permute.xlu0 %4023
    %v4025 = vsel %vm248, %v4018, 0
    %v4027 = vsel %vm248, %v4020, 0
    %v4029 = vsel %vm248, %v4022, 0
    %v4031 = vsel %vm248, %v4024, 0
    %4033 = vmatprep.subr.mxu0 0.0
    %4034 = vmatpush1.xpose.msra.mxu0 %v4029
    %4035 = vmatprep.subr.mxu0 0.0
    %4036 = vmatpush1.xpose.msra.mxu0 %v4031
    %4037 = vmatprep.subr.mxu0 0.0
    %4038 = vmatpush1.xpose.msra.mxu0 0.0
    %4039 = vmatprep.subr.mxu0 0.0
    %4040 = vmatpush1.xpose.msra.mxu0 0.0
    %4041 = vmatprep.subr.mxu0 0.0
    %4042 = vmatpush1.xpose.msra.mxu0 0.0
    %4043 = vmatprep.subr.mxu0 0.0
    %4044 = vmatpush1.xpose.msra.mxu0 0.0
    %4045 = vmatprep.subr.mxu0 0.0
    %4046 = vmatpush1.xpose.msra.mxu0 0.0
    %4047 = vmatprep.subr.mxu0 0.0
    %4048 = vmatpush1.xpose.msra.mxu0 0.0
    %4049 = vmatprep.subr.mxu0 0.0
    %4050 = vmatpush1.xpose.msra.mxu0 0.0
    %4051 = vmatprep.subr.mxu0 0.0
    %4052 = vmatpush1.xpose.msra.mxu0 0.0
    %4053 = vmatprep.subr.mxu0 0.0
    %4054 = vmatpush1.xpose.msra.mxu0 0.0
    %4055 = vmatprep.subr.mxu0 0.0
    %4056 = vmatpush1.xpose.msra.mxu0 0.0
    %4057 = vmatprep.subr.mxu0 0.0
    %4058 = vmatpush1.xpose.msra.mxu0 0.0
    %4059 = vmatprep.subr.mxu0 0.0
    %4060 = vmatpush1.xpose.msra.mxu0 0.0
    %4061 = vmatprep.subr.mxu0 0.0
    %4062 = vmatpush1.xpose.msra.mxu0 0.0
    %4063 = vmatprep.subr.mxu0 0.0
    %4064 = vmatpush1.xpose.msra.mxu0 0.0
    %4065 = vmatprep.subr.mxu0 0.0
    %4066 = vmatpush1.xpose.msra.mxu0 0.0
    %4067 = vmatprep.subr.mxu0 0.0
    %4068 = vmatpush1.xpose.msra.mxu0 0.0
    %4069 = vmatprep.subr.mxu0 0.0
    %4070 = vmatpush1.xpose.msra.mxu0 0.0
    %4071 = vmatprep.subr.mxu0 0.0
    %4072 = vmatpush1.xpose.msra.mxu0 0.0
    %4073 = vmatprep.subr.mxu0 0.0
    %4074 = vmatpush1.xpose.msra.mxu0 0.0
    %4075 = vmatprep.subr.mxu0 0.0
    %4076 = vmatpush1.xpose.msra.mxu0 0.0
    %4077 = vmatprep.subr.mxu0 0.0
    %4078 = vmatpush1.xpose.msra.mxu0 0.0
    %4079 = vmatprep.subr.mxu0 0.0
    %4080 = vmatpush1.xpose.msra.mxu0 0.0
    %4081 = vmatprep.subr.mxu0 0.0
    %4082 = vmatpush1.xpose.msra.mxu0 0.0
    %4083 = vmatprep.subr.mxu0 0.0
    %4084 = vmatpush1.xpose.msra.mxu0 0.0
    %4085 = vmatprep.subr.mxu0 0.0
    %4086 = vmatpush1.xpose.msra.mxu0 0.0
    %4087 = vmatprep.subr.mxu0 0.0
    %4088 = vmatpush1.xpose.msra.mxu0 0.0
    %4089 = vmatprep.subr.mxu0 0.0
    %4090 = vmatpush1.xpose.msra.mxu0 0.0
    %4091 = vmatprep.subr.mxu0 0.0
    %4092 = vmatpush1.xpose.msra.mxu0 0.0
    %4093 = vmatprep.subr.mxu0 0.0
    %4094 = vmatpush1.xpose.msra.mxu0 0.0
    %4095 = vmatprep.subr.mxu0 0.0
    %4096 = vmatpush1.xpose.msra.mxu0 0.0
    %4097 = vmatprep.mubr.f32.mxu0 0.0
    %4098 = vmatmul.mubr.f32.gmra.mrb[0].mxu0 %v4025
    %v4099 = vpop.f32.mrb[0].mxu0
    %v4100 = vadd.f32 %v134, %v4099
    %v4101 = vpop.f32.mrb[0].mxu0
    %4102 = vmatprep.mubr.f32.mxu0 0.0
    %4103 = vmatmul.mubr.f32.gmra.mrb[0].mxu0 %v4027
    %v4104 = vpop.f32.mrb[0].mxu0
    %v4105 = vadd.f32 %v135, %v4104
    %v4106 = vpop.f32.mrb[0].mxu0
    %4107 = vdwg.mxu0
    %v4108 = vsel %vm332, %v4100, -inf
    %4109 = vmax.xlane.f32.xlu0 %v4108
    %v4110 = vpop.xlane.xlu0 %4109
    %v4111 = vsel %vm332, %v4105, -inf
    %4112 = vmax.xlane.f32.xlu0 %v4111
    %v4113 = vpop.xlane.xlu0 %4112
    %v4114 = vsub.f32 %v4100, %v4110
    %v4115 = vsub.f32 %v4105, %v4113
    %v4116 = vmul.f32 %v4114, 1.442695
    %v4117 = vpow.pop %v4116
    %v4118 = vmul.f32 %v4115, 1.442695
    %v4119 = vpow.pop %v4118
    %v4120 = vsel %vm332, %v4117, 0.0
    %4121 = vadd.xlane.f32.xlu0 %v4120
    %v4122 = vpop.xlane.xlu0 %4121
    %v4123 = vsel %vm332, %v4119, 0.0
    %4124 = vadd.xlane.f32.xlu0 %v4123
    %v4125 = vpop.xlane.xlu0 %4124
    %v4126 = vrcp.pop %v4122
    %v4127 = vrcp.pop %v4125
    %v4128 = vmul.f32 %v4117, %v4126
    %v4129 = vmul.f32 %v4119, %v4127
    %4130 = vrot.lane.b32.xlu0 %v3813, 56
    %v4131 = vpop.permute.xlu0 %4130
    %4132 = vrot.lane.b32.xlu0 %v3816, 56
    %v4133 = vpop.permute.xlu0 %4132
    %v4137 = vsel %vm332, %v4128, 0
    %v4140 = vsel %vm332, %v4129, 0
    %4142 = vmatprep.subr.mxu0 0.0
    %4143 = vmatpush1.msra.mxu0 %v4131
    %4144 = vmatprep.subr.mxu0 0.0
    %4145 = vmatpush1.msra.mxu0 %v4133
    %4146 = vmatprep.subr.mxu0 0.0
    %4147 = vmatpush1.msra.mxu0 0.0
    %4148 = vmatprep.subr.mxu0 0.0
    %4149 = vmatpush1.msra.mxu0 0.0
    %4150 = vmatprep.subr.mxu0 0.0
    %4151 = vmatpush1.msra.mxu0 0.0
    %4152 = vmatprep.subr.mxu0 0.0
    %4153 = vmatpush1.msra.mxu0 0.0
    %4154 = vmatprep.subr.mxu0 0.0
    %4155 = vmatpush1.msra.mxu0 0.0
    %4156 = vmatprep.subr.mxu0 0.0
    %4157 = vmatpush1.msra.mxu0 0.0
    %4158 = vmatprep.subr.mxu0 0.0
    %4159 = vmatpush1.msra.mxu0 0.0
    %4160 = vmatprep.subr.mxu0 0.0
    %4161 = vmatpush1.msra.mxu0 0.0
    %4162 = vmatprep.subr.mxu0 0.0
    %4163 = vmatpush1.msra.mxu0 0.0
    %4164 = vmatprep.subr.mxu0 0.0
    %4165 = vmatpush1.msra.mxu0 0.0
    %4166 = vmatprep.subr.mxu0 0.0
    %4167 = vmatpush1.msra.mxu0 0.0
    %4168 = vmatprep.subr.mxu0 0.0
    %4169 = vmatpush1.msra.mxu0 0.0
    %4170 = vmatprep.subr.mxu0 0.0
    %4171 = vmatpush1.msra.mxu0 0.0
    %4172 = vmatprep.subr.mxu0 0.0
    %4173 = vmatpush1.msra.mxu0 0.0
    %4174 = vmatprep.subr.mxu0 0.0
    %4175 = vmatpush1.msra.mxu0 0.0
    %4176 = vmatprep.subr.mxu0 0.0
    %4177 = vmatpush1.msra.mxu0 0.0
    %4178 = vmatprep.subr.mxu0 0.0
    %4179 = vmatpush1.msra.mxu0 0.0
    %4180 = vmatprep.subr.mxu0 0.0
    %4181 = vmatpush1.msra.mxu0 0.0
    %4182 = vmatprep.subr.mxu0 0.0
    %4183 = vmatpush1.msra.mxu0 0.0
    %4184 = vmatprep.subr.mxu0 0.0
    %4185 = vmatpush1.msra.mxu0 0.0
    %4186 = vmatprep.subr.mxu0 0.0
    %4187 = vmatpush1.msra.mxu0 0.0
    %4188 = vmatprep.subr.mxu0 0.0
    %4189 = vmatpush1.msra.mxu0 0.0
    %4190 = vmatprep.subr.mxu0 0.0
    %4191 = vmatpush1.msra.mxu0 0.0
    %4192 = vmatprep.subr.mxu0 0.0
    %4193 = vmatpush1.msra.mxu0 0.0
    %4194 = vmatprep.subr.mxu0 0.0
    %4195 = vmatpush1.msra.mxu0 0.0
    %4196 = vmatprep.subr.mxu0 0.0
    %4197 = vmatpush1.msra.mxu0 0.0
    %4198 = vmatprep.subr.mxu0 0.0
    %4199 = vmatpush1.msra.mxu0 0.0
    %4200 = vmatprep.subr.mxu0 0.0
    %4201 = vmatpush1.msra.mxu0 0.0
    %4202 = vmatprep.subr.mxu0 0.0
    %4203 = vmatpush1.msra.mxu0 0.0
    %4204 = vmatprep.subr.mxu0 0.0
    %4205 = vmatpush1.msra.mxu0 0.0
    %4206 = vmatprep.mubr.f32.mxu0 0.0
    %4207 = vmatmul.mubr.f32.gmra.mrb[0].mxu0 %v4137
    %v4208 = vpop.f32.mrb[0].mxu0
    %v4209 = vadd.f32 0.0, %v4208
    %v4210 = vpop.f32.mrb[0].mxu0
    %4211 = vmatprep.mubr.f32.mxu0 0.0
    %4212 = vmatmul.mubr.f32.gmra.mrb[0].mxu0 %v4140
    %v4213 = vpop.f32.mrb[0].mxu0
    %v4214 = vadd.f32 0.0, %v4213
    %v4215 = vpop.f32.mrb[0].mxu0
    %4216 = vdwg.mxu0
    %4217 = vrot.lane.b32.xlu0 %v3813, 112
    %v4218 = vpop.permute.xlu0 %4217
    %4219 = vrot.lane.b32.xlu0 %v3816, 112
    %v4220 = vpop.permute.xlu0 %4219
    %4221 = vrot.lane.b32.xlu0 %v3813, 80
    %v4222 = vpop.permute.xlu0 %4221
    %4223 = vrot.lane.b32.xlu0 %v3816, 80
    %v4224 = vpop.permute.xlu0 %4223
    %v4225 = vsel %vm248, %v4218, 0
    %v4227 = vsel %vm248, %v4220, 0
    %v4229 = vsel %vm248, %v4222, 0
    %v4231 = vsel %vm248, %v4224, 0
    %4233 = vmatprep.subr.mxu0 0.0
    %4234 = vmatpush1.xpose.msra.mxu0 %v4229
    %4235 = vmatprep.subr.mxu0 0.0
    %4236 = vmatpush1.xpose.msra.mxu0 %v4231
    %4237 = vmatprep.subr.mxu0 0.0
    %4238 = vmatpush1.xpose.msra.mxu0 0.0
    %4239 = vmatprep.subr.mxu0 0.0
    %4240 = vmatpush1.xpose.msra.mxu0 0.0
    %4241 = vmatprep.subr.mxu0 0.0
    %4242 = vmatpush1.xpose.msra.mxu0 0.0
    %4243 = vmatprep.subr.mxu0 0.0
    %4244 = vmatpush1.xpose.msra.mxu0 0.0
    %4245 = vmatprep.subr.mxu0 0.0
    %4246 = vmatpush1.xpose.msra.mxu0 0.0
    %4247 = vmatprep.subr.mxu0 0.0
    %4248 = vmatpush1.xpose.msra.mxu0 0.0
    %4249 = vmatprep.subr.mxu0 0.0
    %4250 = vmatpush1.xpose.msra.mxu0 0.0
    %4251 = vmatprep.subr.mxu0 0.0
    %4252 = vmatpush1.xpose.msra.mxu0 0.0
    %4253 = vmatprep.subr.mxu0 0.0
    %4254 = vmatpush1.xpose.msra.mxu0 0.0
    %4255 = vmatprep.subr.mxu0 0.0
    %4256 = vmatpush1.xpose.msra.mxu0 0.0
    %4257 = vmatprep.subr.mxu0 0.0
    %4258 = vmatpush1.xpose.msra.mxu0 0.0
    %4259 = vmatprep.subr.mxu0 0.0
    %4260 = vmatpush1.xpose.msra.mxu0 0.0
    %4261 = vmatprep.subr.mxu0 0.0
    %4262 = vmatpush1.xpose.msra.mxu0 0.0
    %4263 = vmatprep.subr.mxu0 0.0
    %4264 = vmatpush1.xpose.msra.mxu0 0.0
    %4265 = vmatprep.subr.mxu0 0.0
    %4266 = vmatpush1.xpose.msra.mxu0 0.0
    %4267 = vmatprep.subr.mxu0 0.0
    %4268 = vmatpush1.xpose.msra.mxu0 0.0
    %4269 = vmatprep.subr.mxu0 0.0
    %4270 = vmatpush1.xpose.msra.mxu0 0.0
    %4271 = vmatprep.subr.mxu0 0.0
    %4272 = vmatpush1.xpose.msra.mxu0 0.0
    %4273 = vmatprep.subr.mxu0 0.0
    %4274 = vmatpush1.xpose.msra.mxu0 0.0
    %4275 = vmatprep.subr.mxu0 0.0
    %4276 = vmatpush1.xpose.msra.mxu0 0.0
    %4277 = vmatprep.subr.mxu0 0.0
    %4278 = vmatpush1.xpose.msra.mxu0 0.0
    %4279 = vmatprep.subr.mxu0 0.0
    %4280 = vmatpush1.xpose.msra.mxu0 0.0
    %4281 = vmatprep.subr.mxu0 0.0
    %4282 = vmatpush1.xpose.msra.mxu0 0.0
    %4283 = vmatprep.subr.mxu0 0.0
    %4284 = vmatpush1.xpose.msra.mxu0 0.0
    %4285 = vmatprep.subr.mxu0 0.0
    %4286 = vmatpush1.xpose.msra.mxu0 0.0
    %4287 = vmatprep.subr.mxu0 0.0
    %4288 = vmatpush1.xpose.msra.mxu0 0.0
    %4289 = vmatprep.subr.mxu0 0.0
    %4290 = vmatpush1.xpose.msra.mxu0 0.0
    %4291 = vmatprep.subr.mxu0 0.0
    %4292 = vmatpush1.xpose.msra.mxu0 0.0
    %4293 = vmatprep.subr.mxu0 0.0
    %4294 = vmatpush1.xpose.msra.mxu0 0.0
    %4295 = vmatprep.subr.mxu0 0.0
    %4296 = vmatpush1.xpose.msra.mxu0 0.0
    %4297 = vmatprep.mubr.f32.mxu0 0.0
    %4298 = vmatmul.mubr.f32.gmra.mrb[0].mxu0 %v4225
    %v4299 = vpop.f32.mrb[0].mxu0
    %v4300 = vadd.f32 %v134, %v4299
    %v4301 = vpop.f32.mrb[0].mxu0
    %4302 = vmatprep.mubr.f32.mxu0 0.0
    %4303 = vmatmul.mubr.f32.gmra.mrb[0].mxu0 %v4227
    %v4304 = vpop.f32.mrb[0].mxu0
    %v4305 = vadd.f32 %v135, %v4304
    %v4306 = vpop.f32.mrb[0].mxu0
    %4307 = vdwg.mxu0
    %v4308 = vsel %vm332, %v4300, -inf
    %4309 = vmax.xlane.f32.xlu0 %v4308
    %v4310 = vpop.xlane.xlu0 %4309
    %v4311 = vsel %vm332, %v4305, -inf
    %4312 = vmax.xlane.f32.xlu0 %v4311
    %v4313 = vpop.xlane.xlu0 %4312
    %v4314 = vsub.f32 %v4300, %v4310
    %v4315 = vsub.f32 %v4305, %v4313
    %v4316 = vmul.f32 %v4314, 1.442695
    %v4317 = vpow.pop %v4316
    %v4318 = vmul.f32 %v4315, 1.442695
    %v4319 = vpow.pop %v4318
    %v4320 = vsel %vm332, %v4317, 0.0
    %4321 = vadd.xlane.f32.xlu0 %v4320
    %v4322 = vpop.xlane.xlu0 %4321
    %v4323 = vsel %vm332, %v4319, 0.0
    %4324 = vadd.xlane.f32.xlu0 %v4323
    %v4325 = vpop.xlane.xlu0 %4324
    %v4326 = vrcp.pop %v4322
    %v4327 = vrcp.pop %v4325
    %v4328 = vmul.f32 %v4317, %v4326
    %v4329 = vmul.f32 %v4319, %v4327
    %4330 = vrot.lane.b32.xlu0 %v3813, 48
    %v4331 = vpop.permute.xlu0 %4330
    %4332 = vrot.lane.b32.xlu0 %v3816, 48
    %v4333 = vpop.permute.xlu0 %4332
    %v4337 = vsel %vm332, %v4328, 0
    %v4340 = vsel %vm332, %v4329, 0
    %4342 = vmatprep.subr.mxu0 0.0
    %4343 = vmatpush1.msra.mxu0 %v4331
    %4344 = vmatprep.subr.mxu0 0.0
    %4345 = vmatpush1.msra.mxu0 %v4333
    %4346 = vmatprep.subr.mxu0 0.0
    %4347 = vmatpush1.msra.mxu0 0.0
    %4348 = vmatprep.subr.mxu0 0.0
    %4349 = vmatpush1.msra.mxu0 0.0
    %4350 = vmatprep.subr.mxu0 0.0
    %4351 = vmatpush1.msra.mxu0 0.0
    %4352 = vmatprep.subr.mxu0 0.0
    %4353 = vmatpush1.msra.mxu0 0.0
    %4354 = vmatprep.subr.mxu0 0.0
    %4355 = vmatpush1.msra.mxu0 0.0
    %4356 = vmatprep.subr.mxu0 0.0
    %4357 = vmatpush1.msra.mxu0 0.0
    %4358 = vmatprep.subr.mxu0 0.0
    %4359 = vmatpush1.msra.mxu0 0.0
    %4360 = vmatprep.subr.mxu0 0.0
    %4361 = vmatpush1.msra.mxu0 0.0
    %4362 = vmatprep.subr.mxu0 0.0
    %4363 = vmatpush1.msra.mxu0 0.0
    %4364 = vmatprep.subr.mxu0 0.0
    %4365 = vmatpush1.msra.mxu0 0.0
    %4366 = vmatprep.subr.mxu0 0.0
    %4367 = vmatpush1.msra.mxu0 0.0
    %4368 = vmatprep.subr.mxu0 0.0
    %4369 = vmatpush1.msra.mxu0 0.0
    %4370 = vmatprep.subr.mxu0 0.0
    %4371 = vmatpush1.msra.mxu0 0.0
    %4372 = vmatprep.subr.mxu0 0.0
    %4373 = vmatpush1.msra.mxu0 0.0
    %4374 = vmatprep.subr.mxu0 0.0
    %4375 = vmatpush1.msra.mxu0 0.0
    %4376 = vmatprep.subr.mxu0 0.0
    %4377 = vmatpush1.msra.mxu0 0.0
    %4378 = vmatprep.subr.mxu0 0.0
    %4379 = vmatpush1.msra.mxu0 0.0
    %4380 = vmatprep.subr.mxu0 0.0
    %4381 = vmatpush1.msra.mxu0 0.0
    %4382 = vmatprep.subr.mxu0 0.0
    %4383 = vmatpush1.msra.mxu0 0.0
    %4384 = vmatprep.subr.mxu0 0.0
    %4385 = vmatpush1.msra.mxu0 0.0
    %4386 = vmatprep.subr.mxu0 0.0
    %4387 = vmatpush1.msra.mxu0 0.0
    %4388 = vmatprep.subr.mxu0 0.0
    %4389 = vmatpush1.msra.mxu0 0.0
    %4390 = vmatprep.subr.mxu0 0.0
    %4391 = vmatpush1.msra.mxu0 0.0
    %4392 = vmatprep.subr.mxu0 0.0
    %4393 = vmatpush1.msra.mxu0 0.0
    %4394 = vmatprep.subr.mxu0 0.0
    %4395 = vmatpush1.msra.mxu0 0.0
    %4396 = vmatprep.subr.mxu0 0.0
    %4397 = vmatpush1.msra.mxu0 0.0
    %4398 = vmatprep.subr.mxu0 0.0
    %4399 = vmatpush1.msra.mxu0 0.0
    %4400 = vmatprep.subr.mxu0 0.0
    %4401 = vmatpush1.msra.mxu0 0.0
    %4402 = vmatprep.subr.mxu0 0.0
    %4403 = vmatpush1.msra.mxu0 0.0
    %4404 = vmatprep.subr.mxu0 0.0
    %4405 = vmatpush1.msra.mxu0 0.0
    %4406 = vmatprep.mubr.f32.mxu0 0.0
    %4407 = vmatmul.mubr.f32.gmra.mrb[0].mxu0 %v4337
    %v4408 = vpop.f32.mrb[0].mxu0
    %v4409 = vadd.f32 0.0, %v4408
    %v4410 = vpop.f32.mrb[0].mxu0
    %4411 = vmatprep.mubr.f32.mxu0 0.0
    %4412 = vmatmul.mubr.f32.gmra.mrb[0].mxu0 %v4340
    %v4413 = vpop.f32.mrb[0].mxu0
    %v4414 = vadd.f32 0.0, %v4413
    %v4415 = vpop.f32.mrb[0].mxu0
    %4416 = vdwg.mxu0
    %4417 = vrot.lane.b32.xlu0 %v3813, 104
    %v4418 = vpop.permute.xlu0 %4417
    %4419 = vrot.lane.b32.xlu0 %v3816, 104
    %v4420 = vpop.permute.xlu0 %4419
    %4421 = vrot.lane.b32.xlu0 %v3813, 72
    %v4422 = vpop.permute.xlu0 %4421
    %4423 = vrot.lane.b32.xlu0 %v3816, 72
    %v4424 = vpop.permute.xlu0 %4423
    %v4425 = vsel %vm248, %v4418, 0
    %v4427 = vsel %vm248, %v4420, 0
    %v4429 = vsel %vm248, %v4422, 0
    %v4431 = vsel %vm248, %v4424, 0
    %4433 = vmatprep.subr.mxu0 0.0
    %4434 = vmatpush1.xpose.msra.mxu0 %v4429
    %4435 = vmatprep.subr.mxu0 0.0
    %4436 = vmatpush1.xpose.msra.mxu0 %v4431
    %4437 = vmatprep.subr.mxu0 0.0
    %4438 = vmatpush1.xpose.msra.mxu0 0.0
    %4439 = vmatprep.subr.mxu0 0.0
    %4440 = vmatpush1.xpose.msra.mxu0 0.0
    %4441 = vmatprep.subr.mxu0 0.0
    %4442 = vmatpush1.xpose.msra.mxu0 0.0
    %4443 = vmatprep.subr.mxu0 0.0
    %4444 = vmatpush1.xpose.msra.mxu0 0.0
    %4445 = vmatprep.subr.mxu0 0.0
    %4446 = vmatpush1.xpose.msra.mxu0 0.0
    %4447 = vmatprep.subr.mxu0 0.0
    %4448 = vmatpush1.xpose.msra.mxu0 0.0
    %4449 = vmatprep.subr.mxu0 0.0
    %4450 = vmatpush1.xpose.msra.mxu0 0.0
    %4451 = vmatprep.subr.mxu0 0.0
    %4452 = vmatpush1.xpose.msra.mxu0 0.0
    %4453 = vmatprep.subr.mxu0 0.0
    %4454 = vmatpush1.xpose.msra.mxu0 0.0
    %4455 = vmatprep.subr.mxu0 0.0
    %4456 = vmatpush1.xpose.msra.mxu0 0.0
    %4457 = vmatprep.subr.mxu0 0.0
    %4458 = vmatpush1.xpose.msra.mxu0 0.0
    %4459 = vmatprep.subr.mxu0 0.0
    %4460 = vmatpush1.xpose.msra.mxu0 0.0
    %4461 = vmatprep.subr.mxu0 0.0
    %4462 = vmatpush1.xpose.msra.mxu0 0.0
    %4463 = vmatprep.subr.mxu0 0.0
    %4464 = vmatpush1.xpose.msra.mxu0 0.0
    %4465 = vmatprep.subr.mxu0 0.0
    %4466 = vmatpush1.xpose.msra.mxu0 0.0
    %4467 = vmatprep.subr.mxu0 0.0
    %4468 = vmatpush1.xpose.msra.mxu0 0.0
    %4469 = vmatprep.subr.mxu0 0.0
    %4470 = vmatpush1.xpose.msra.mxu0 0.0
    %4471 = vmatprep.subr.mxu0 0.0
    %4472 = vmatpush1.xpose.msra.mxu0 0.0
    %4473 = vmatprep.subr.mxu0 0.0
    %4474 = vmatpush1.xpose.msra.mxu0 0.0
    %4475 = vmatprep.subr.mxu0 0.0
    %4476 = vmatpush1.xpose.msra.mxu0 0.0
    %4477 = vmatprep.subr.mxu0 0.0
    %4478 = vmatpush1.xpose.msra.mxu0 0.0
    %4479 = vmatprep.subr.mxu0 0.0
    %4480 = vmatpush1.xpose.msra.mxu0 0.0
    %4481 = vmatprep.subr.mxu0 0.0
    %4482 = vmatpush1.xpose.msra.mxu0 0.0
    %4483 = vmatprep.subr.mxu0 0.0
    %4484 = vmatpush1.xpose.msra.mxu0 0.0
    %4485 = vmatprep.subr.mxu0 0.0
    %4486 = vmatpush1.xpose.msra.mxu0 0.0
    %4487 = vmatprep.subr.mxu0 0.0
    %4488 = vmatpush1.xpose.msra.mxu0 0.0
    %4489 = vmatprep.subr.mxu0 0.0
    %4490 = vmatpush1.xpose.msra.mxu0 0.0
    %4491 = vmatprep.subr.mxu0 0.0
    %4492 = vmatpush1.xpose.msra.mxu0 0.0
    %4493 = vmatprep.subr.mxu0 0.0
    %4494 = vmatpush1.xpose.msra.mxu0 0.0
    %4495 = vmatprep.subr.mxu0 0.0
    %4496 = vmatpush1.xpose.msra.mxu0 0.0
    %4497 = vmatprep.mubr.f32.mxu0 0.0
    %4498 = vmatmul.mubr.f32.gmra.mrb[0].mxu0 %v4425
    %v4499 = vpop.f32.mrb[0].mxu0
    %v4500 = vadd.f32 %v134, %v4499
    %v4501 = vpop.f32.mrb[0].mxu0
    %4502 = vmatprep.mubr.f32.mxu0 0.0
    %4503 = vmatmul.mubr.f32.gmra.mrb[0].mxu0 %v4427
    %v4504 = vpop.f32.mrb[0].mxu0
    %v4505 = vadd.f32 %v135, %v4504
    %v4506 = vpop.f32.mrb[0].mxu0
    %4507 = vdwg.mxu0
    %v4508 = vsel %vm332, %v4500, -inf
    %4509 = vmax.xlane.f32.xlu0 %v4508
    %v4510 = vpop.xlane.xlu0 %4509
    %v4511 = vsel %vm332, %v4505, -inf
    %4512 = vmax.xlane.f32.xlu0 %v4511
    %v4513 = vpop.xlane.xlu0 %4512
    %v4514 = vsub.f32 %v4500, %v4510
    %v4515 = vsub.f32 %v4505, %v4513
    %v4516 = vmul.f32 %v4514, 1.442695
    %v4517 = vpow.pop %v4516
    %v4518 = vmul.f32 %v4515, 1.442695
    %v4519 = vpow.pop %v4518
    %v4520 = vsel %vm332, %v4517, 0.0
    %4521 = vadd.xlane.f32.xlu0 %v4520
    %v4522 = vpop.xlane.xlu0 %4521
    %v4523 = vsel %vm332, %v4519, 0.0
    %4524 = vadd.xlane.f32.xlu0 %v4523
    %v4525 = vpop.xlane.xlu0 %4524
    %v4526 = vrcp.pop %v4522
    %v4527 = vrcp.pop %v4525
    %v4528 = vmul.f32 %v4517, %v4526
    %v4529 = vmul.f32 %v4519, %v4527
    %4530 = vrot.lane.b32.xlu0 %v3813, 40
    %v4531 = vpop.permute.xlu0 %4530
    %4532 = vrot.lane.b32.xlu0 %v3816, 40
    %v4533 = vpop.permute.xlu0 %4532
    %v4537 = vsel %vm332, %v4528, 0
    %v4540 = vsel %vm332, %v4529, 0
    %4542 = vmatprep.subr.mxu0 0.0
    %4543 = vmatpush1.msra.mxu0 %v4531
    %4544 = vmatprep.subr.mxu0 0.0
    %4545 = vmatpush1.msra.mxu0 %v4533
    %4546 = vmatprep.subr.mxu0 0.0
    %4547 = vmatpush1.msra.mxu0 0.0
    %4548 = vmatprep.subr.mxu0 0.0
    %4549 = vmatpush1.msra.mxu0 0.0
    %4550 = vmatprep.subr.mxu0 0.0
    %4551 = vmatpush1.msra.mxu0 0.0
    %4552 = vmatprep.subr.mxu0 0.0
    %4553 = vmatpush1.msra.mxu0 0.0
    %4554 = vmatprep.subr.mxu0 0.0
    %4555 = vmatpush1.msra.mxu0 0.0
    %4556 = vmatprep.subr.mxu0 0.0
    %4557 = vmatpush1.msra.mxu0 0.0
    %4558 = vmatprep.subr.mxu0 0.0
    %4559 = vmatpush1.msra.mxu0 0.0
    %4560 = vmatprep.subr.mxu0 0.0
    %4561 = vmatpush1.msra.mxu0 0.0
    %4562 = vmatprep.subr.mxu0 0.0
    %4563 = vmatpush1.msra.mxu0 0.0
    %4564 = vmatprep.subr.mxu0 0.0
    %4565 = vmatpush1.msra.mxu0 0.0
    %4566 = vmatprep.subr.mxu0 0.0
    %4567 = vmatpush1.msra.mxu0 0.0
    %4568 = vmatprep.subr.mxu0 0.0
    %4569 = vmatpush1.msra.mxu0 0.0
    %4570 = vmatprep.subr.mxu0 0.0
    %4571 = vmatpush1.msra.mxu0 0.0
    %4572 = vmatprep.subr.mxu0 0.0
    %4573 = vmatpush1.msra.mxu0 0.0
    %4574 = vmatprep.subr.mxu0 0.0
    %4575 = vmatpush1.msra.mxu0 0.0
    %4576 = vmatprep.subr.mxu0 0.0
    %4577 = vmatpush1.msra.mxu0 0.0
    %4578 = vmatprep.subr.mxu0 0.0
    %4579 = vmatpush1.msra.mxu0 0.0
    %4580 = vmatprep.subr.mxu0 0.0
    %4581 = vmatpush1.msra.mxu0 0.0
    %4582 = vmatprep.subr.mxu0 0.0
    %4583 = vmatpush1.msra.mxu0 0.0
    %4584 = vmatprep.subr.mxu0 0.0
    %4585 = vmatpush1.msra.mxu0 0.0
    %4586 = vmatprep.subr.mxu0 0.0
    %4587 = vmatpush1.msra.mxu0 0.0
    %4588 = vmatprep.subr.mxu0 0.0
    %4589 = vmatpush1.msra.mxu0 0.0
    %4590 = vmatprep.subr.mxu0 0.0
    %4591 = vmatpush1.msra.mxu0 0.0
    %4592 = vmatprep.subr.mxu0 0.0
    %4593 = vmatpush1.msra.mxu0 0.0
    %4594 = vmatprep.subr.mxu0 0.0
    %4595 = vmatpush1.msra.mxu0 0.0
    %4596 = vmatprep.subr.mxu0 0.0
    %4597 = vmatpush1.msra.mxu0 0.0
    %4598 = vmatprep.subr.mxu0 0.0
    %4599 = vmatpush1.msra.mxu0 0.0
    %4600 = vmatprep.subr.mxu0 0.0
    %4601 = vmatpush1.msra.mxu0 0.0
    %4602 = vmatprep.subr.mxu0 0.0
    %4603 = vmatpush1.msra.mxu0 0.0
    %4604 = vmatprep.subr.mxu0 0.0
    %4605 = vmatpush1.msra.mxu0 0.0
    %4606 = vmatprep.mubr.f32.mxu0 0.0
    %4607 = vmatmul.mubr.f32.gmra.mrb[0].mxu0 %v4537
    %v4608 = vpop.f32.mrb[0].mxu0
    %v4609 = vadd.f32 0.0, %v4608
    %v4610 = vpop.f32.mrb[0].mxu0
    %4611 = vmatprep.mubr.f32.mxu0 0.0
    %4612 = vmatmul.mubr.f32.gmra.mrb[0].mxu0 %v4540
    %v4613 = vpop.f32.mrb[0].mxu0
    %v4614 = vadd.f32 0.0, %v4613
    %v4615 = vpop.f32.mrb[0].mxu0
    %4616 = vdwg.mxu0
    %4619 = vrot.lane.b32.xlu0 %v4209, 8
    %v4620 = vpop.permute.xlu0 %4619
    %4621 = vrot.lane.b32.xlu0 %v4214, 8
    %v4622 = vpop.permute.xlu0 %4621
    %4627 = vrot.lane.b32.xlu0 %v4409, 16
    %v4628 = vpop.permute.xlu0 %4627
    %4629 = vrot.lane.b32.xlu0 %v4414, 16
    %v4630 = vpop.permute.xlu0 %4629
    %4635 = vrot.lane.b32.xlu0 %v4609, 24
    %v4636 = vpop.permute.xlu0 %4635
    %4637 = vrot.lane.b32.xlu0 %v4614, 24
    %v4638 = vpop.permute.xlu0 %4637
    %v4641 = vsel %vm248, %v4009, %v4620
    %v4642 = vsel %vm248, %v4014, %v4622
    %v4643 = vsel %vm332, %v4641, %v4628
    %v4644 = vsel %vm332, %v4642, %v4630
    %v4645 = vsel %vm1070, %v4643, %v4636
    %v4646 = vsel %vm1070, %v4644, %v4638
    %v4647 = vpack.c.bf16 %v4646, %v4645
    %s4648 = scalar_lea.vmem %s5, 48
    %v4649 = vld [vmem:[%s4648] sm:$0xf]
    %v4650 = vld [vmem:[%s4648 + $0x4] sm:$0xf]
    %v4651 = vld [vmem:[%s4648 + $0x8] sm:$0xf]
    %v4652 = vld [vmem:[%s4648 + $0xc] sm:$0xf]
    %v4653 = vlaneseq
    %v4654 = vshrl.u32 %v4653, 7
    %v4655 = vsub.s32 1, %v4654
    %v4656 = vrot.slane %v3714, %v4655
    %v4661 = vunpack.c.l.b16 %v4649
    %v4662 = vunpack.c.l.b16 %v4650
    %v4663 = vunpack.c.l.b16 %v4651
    %v4664 = vunpack.c.l.b16 %v4652
    %v4665 = vpack.c.b16 %v4662, %v4661
    %v4666 = vpack.c.b16 %v4664, %v4663
    %v4670 = vsel %vm137, %v4647, 0
    %4672 = vmatprep.subr.bf16.mxu0 0
    %4673 = vmatpush1.bf16.msra.mxu0 %v4665
    %4674 = vmatprep.subr.bf16.mxu0 0
    %4675 = vmatpush1.bf16.msra.mxu0 %v4666
    %4676 = vmatprep.subr.bf16.mxu0 0
    %4677 = vmatpush1.bf16.msra.mxu0 0
    %4678 = vmatprep.subr.bf16.mxu0 0
    %4679 = vmatpush1.bf16.msra.mxu0 0
    %4680 = vmatprep.subr.bf16.mxu0 0
    %4681 = vmatpush1.bf16.msra.mxu0 0
    %4682 = vmatprep.subr.bf16.mxu0 0
    %4683 = vmatpush1.bf16.msra.mxu0 0
    %4684 = vmatprep.subr.bf16.mxu0 0
    %4685 = vmatpush1.bf16.msra.mxu0 0
    %4686 = vmatprep.subr.bf16.mxu0 0
    %4687 = vmatpush1.bf16.msra.mxu0 0
    %4688 = vmatprep.subr.bf16.mxu0 0
    %4689 = vmatpush1.bf16.msra.mxu0 0
    %4690 = vmatprep.subr.bf16.mxu0 0
    %4691 = vmatpush1.bf16.msra.mxu0 0
    %4692 = vmatprep.subr.bf16.mxu0 0
    %4693 = vmatpush1.bf16.msra.mxu0 0
    %4694 = vmatprep.subr.bf16.mxu0 0
    %4695 = vmatpush1.bf16.msra.mxu0 0
    %4696 = vmatprep.subr.bf16.mxu0 0
    %4697 = vmatpush1.bf16.msra.mxu0 0
    %4698 = vmatprep.subr.bf16.mxu0 0
    %4699 = vmatpush1.bf16.msra.mxu0 0
    %4700 = vmatprep.subr.bf16.mxu0 0
    %4701 = vmatpush1.bf16.msra.mxu0 0
    %4702 = vmatprep.subr.bf16.mxu0 0
    %4703 = vmatpush1.bf16.msra.mxu0 0
    %4704 = vmatprep.mubr.bf16.mxu0 0
    %4705 = vmatmul.mubr.bf16.gmra.mrb[0].mxu0 %v4670
    %v4706 = vpop.f32.mrb[0].mxu0
    %v4707 = vadd.f32 %v4656, %v4706
    %v4708 = vpop.f32.mrb[0].mxu0
    %v4709 = vpop.f32.mrb[0].mxu0
    %v4710 = vadd.f32 %v4656, %v4709
    %v4711 = vpop.f32.mrb[0].mxu0
    %4712 = vdwg.mxu0
    %v4713 = vadd.f32 %v3711, %v4707
    %v4714 = vadd.f32 %v3712, %v4710
    %v4715 = vsel %vm137, %v4713, 0.0
    %4716 = vadd.xlane.f32.xlu0 %v4715
    %v4717 = vpop.xlane.xlu0 %4716
    %v4718 = vsel %vm137, %v4714, 0.0
    %4719 = vadd.xlane.f32.xlu0 %v4718
    %v4720 = vpop.xlane.xlu0 %4719
    %v4721 = vmul.f32 %v4717, %v144
    %v4722 = vmul.f32 %v4720, %v144
    %v4723 = vsub.f32 %v4713, %v4721
    %v4724 = vsub.f32 %v4714, %v4722
    %v4725 = vmul.f32 %v4723, %v4723
    %v4726 = vmul.f32 %v4724, %v4724
    %v4727 = vsel %vm137, %v4725, 0.0
    %4728 = vadd.xlane.f32.xlu0 %v4727
    %v4729 = vpop.xlane.xlu0 %4728
    %v4730 = vsel %vm137, %v4726, 0.0
    %4731 = vadd.xlane.f32.xlu0 %v4730
    %v4732 = vpop.xlane.xlu0 %4731
    %v4733 = vmul.f32 %v4729, %v144
    %v4734 = vmul.f32 %v4732, %v144
    %v4735 = vadd.f32 %v4733, 1e-05
    %v4736 = vadd.f32 %v4734, 1e-05
    %v4737 = vrsqrt.pop %v4735
    %v4738 = vrsqrt.pop %v4736
    %v4739 = vmul.f32 %v4723, %v4737
    %v4740 = vmul.f32 %v4724, %v4738
    %v4741 = vlaneseq
    %v4742 = vshrl.u32 %v4741, 7
    %v4743 = vsub.s32 6, %v4742
    %v4744 = vrot.slane %v3714, %v4743
    %v4745 = vmul.f32 %v4739, %v4744
    %v4746 = vmul.f32 %v4740, %v4744
    %v4747 = vlaneseq
    %v4748 = vshrl.u32 %v4747, 7
    %v4749 = vsub.s32 7, %v4748
    %v4750 = vrot.slane %v3714, %v4749
    %v4751 = vadd.f32 %v4745, %v4750
    %v4752 = vadd.f32 %v4746, %v4750
    %v4753 = vpack.c.bf16 %v4752, %v4751
    %s4754 = scalar_lea.vmem %s6, 48
    %v4755 = vld [vmem:[%s4754] sm:$0xf]
    %v4756 = vld [vmem:[%s4754 + $0x4] sm:$0xf]
    %v4757 = vld [vmem:[%s4754 + $0x8] sm:$0xf]
    %v4758 = vld [vmem:[%s4754 + $0xc] sm:$0xf]
    %v4759 = vlaneseq
    %v4760 = vshrl.u32 %v4759, 7
    %v4761 = vsub.s32 2, %v4760
    %v4762 = vrot.slane %v3714, %v4761
    %v4767 = vunpack.c.l.b16 %v4755
    %v4768 = vunpack.c.l.b16 %v4756
    %v4769 = vunpack.c.l.b16 %v4757
    %v4770 = vunpack.c.l.b16 %v4758
    %v4771 = vpack.c.b16 %v4768, %v4767
    %v4772 = vpack.c.b16 %v4770, %v4769
    %v4776 = vsel %vm137, %v4753, 0
    %4778 = vmatprep.subr.bf16.mxu0 0
    %4779 = vmatpush1.bf16.msra.mxu0 %v4771
    %4780 = vmatprep.subr.bf16.mxu0 0
    %4781 = vmatpush1.bf16.msra.mxu0 %v4772
    %4782 = vmatprep.subr.bf16.mxu0 0
    %4783 = vmatpush1.bf16.msra.mxu0 0
    %4784 = vmatprep.subr.bf16.mxu0 0
    %4785 = vmatpush1.bf16.msra.mxu0 0
    %4786 = vmatprep.subr.bf16.mxu0 0
    %4787 = vmatpush1.bf16.msra.mxu0 0
    %4788 = vmatprep.subr.bf16.mxu0 0
    %4789 = vmatpush1.bf16.msra.mxu0 0
    %4790 = vmatprep.subr.bf16.mxu0 0
    %4791 = vmatpush1.bf16.msra.mxu0 0
    %4792 = vmatprep.subr.bf16.mxu0 0
    %4793 = vmatpush1.bf16.msra.mxu0 0
    %4794 = vmatprep.subr.bf16.mxu0 0
    %4795 = vmatpush1.bf16.msra.mxu0 0
    %4796 = vmatprep.subr.bf16.mxu0 0
    %4797 = vmatpush1.bf16.msra.mxu0 0
    %4798 = vmatprep.subr.bf16.mxu0 0
    %4799 = vmatpush1.bf16.msra.mxu0 0
    %4800 = vmatprep.subr.bf16.mxu0 0
    %4801 = vmatpush1.bf16.msra.mxu0 0
    %4802 = vmatprep.subr.bf16.mxu0 0
    %4803 = vmatpush1.bf16.msra.mxu0 0
    %4804 = vmatprep.subr.bf16.mxu0 0
    %4805 = vmatpush1.bf16.msra.mxu0 0
    %4806 = vmatprep.subr.bf16.mxu0 0
    %4807 = vmatpush1.bf16.msra.mxu0 0
    %4808 = vmatprep.subr.bf16.mxu0 0
    %4809 = vmatpush1.bf16.msra.mxu0 0
    %4810 = vmatprep.mubr.bf16.mxu0 0
    %4811 = vmatmul.mubr.bf16.gmra.mrb[0].mxu0 %v4776
    %v4812 = vpop.f32.mrb[0].mxu0
    %v4813 = vadd.f32 %v4762, %v4812
    %v4814 = vpop.f32.mrb[0].mxu0
    %v4815 = vpop.f32.mrb[0].mxu0
    %v4816 = vadd.f32 %v4762, %v4815
    %v4817 = vpop.f32.mrb[0].mxu0
    %4818 = vdwg.mxu0
    %v4819 = vmax.f32 %v4813, 0.0
    %v4820 = vmax.f32 %v4816, 0.0
    %v4821 = vpack.c.bf16 %v4820, %v4819
    %s4822 = scalar_lea.vmem %s7, 96
    %v4823 = vld [vmem:[%s4822] sm:$0xf]
    %v4824 = vld [vmem:[%s4822 + $0x4] sm:$0xf]
    %v4825 = vld [vmem:[%s4822 + $0x8] sm:$0xf]
    %v4826 = vld [vmem:[%s4822 + $0xc] sm:$0xf]
    %v4827 = vld [vmem:[%s4822 + $0x10] sm:$0xf]
    %v4828 = vld [vmem:[%s4822 + $0x14] sm:$0xf]
    %v4829 = vld [vmem:[%s4822 + $0x18] sm:$0xf]
    %v4830 = vld [vmem:[%s4822 + $0x1c] sm:$0xf]
    %v4831 = vlaneseq
    %v4832 = vshrl.u32 %v4831, 7
    %v4833 = vsub.s32 3, %v4832
    %v4834 = vrot.slane %v3714, %v4833
    %v4843 = vunpack.c.l.b16 %v4823
    %v4844 = vunpack.c.l.b16 %v4824
    %v4845 = vunpack.c.l.b16 %v4825
    %v4846 = vunpack.c.l.b16 %v4826
    %v4847 = vunpack.c.l.b16 %v4827
    %v4848 = vunpack.c.l.b16 %v4828
    %v4849 = vunpack.c.l.b16 %v4829
    %v4850 = vunpack.c.l.b16 %v4830
    %v4851 = vpack.c.b16 %v4844, %v4843
    %v4852 = vpack.c.b16 %v4846, %v4845
    %v4853 = vpack.c.b16 %v4848, %v4847
    %v4854 = vpack.c.b16 %v4850, %v4849
    %v4860 = vsel %vm1282, %v4821, 0
    %4862 = vmatprep.subr.bf16.mxu0 0
    %4863 = vmatpush1.bf16.msra.mxu0 %v4851
    %4864 = vmatprep.subr.bf16.mxu0 0
    %4865 = vmatpush1.bf16.msra.mxu0 %v4852
    %4866 = vmatprep.subr.bf16.mxu0 0
    %4867 = vmatpush1.bf16.msra.mxu0 %v4853
    %4868 = vmatprep.subr.bf16.mxu0 0
    %4869 = vmatpush1.bf16.msra.mxu0 %v4854
    %4870 = vmatprep.subr.bf16.mxu0 0
    %4871 = vmatpush1.bf16.msra.mxu0 0
    %4872 = vmatprep.subr.bf16.mxu0 0
    %4873 = vmatpush1.bf16.msra.mxu0 0
    %4874 = vmatprep.subr.bf16.mxu0 0
    %4875 = vmatpush1.bf16.msra.mxu0 0
    %4876 = vmatprep.subr.bf16.mxu0 0
    %4877 = vmatpush1.bf16.msra.mxu0 0
    %4878 = vmatprep.subr.bf16.mxu0 0
    %4879 = vmatpush1.bf16.msra.mxu0 0
    %4880 = vmatprep.subr.bf16.mxu0 0
    %4881 = vmatpush1.bf16.msra.mxu0 0
    %4882 = vmatprep.subr.bf16.mxu0 0
    %4883 = vmatpush1.bf16.msra.mxu0 0
    %4884 = vmatprep.subr.bf16.mxu0 0
    %4885 = vmatpush1.bf16.msra.mxu0 0
    %4886 = vmatprep.subr.bf16.mxu0 0
    %4887 = vmatpush1.bf16.msra.mxu0 0
    %4888 = vmatprep.subr.bf16.mxu0 0
    %4889 = vmatpush1.bf16.msra.mxu0 0
    %4890 = vmatprep.subr.bf16.mxu0 0
    %4891 = vmatpush1.bf16.msra.mxu0 0
    %4892 = vmatprep.subr.bf16.mxu0 0
    %4893 = vmatpush1.bf16.msra.mxu0 0
    %4894 = vmatprep.mubr.bf16.mxu0 0
    %4895 = vmatmul.mubr.bf16.gmra.mrb[0].mxu0 %v4860
    %v4896 = vpop.f32.mrb[0].mxu0
    %v4897 = vadd.f32 %v4834, %v4896
    %v4898 = vpop.f32.mrb[0].mxu0
    %v4899 = vpop.f32.mrb[0].mxu0
    %v4900 = vadd.f32 %v4834, %v4899
    %v4901 = vpop.f32.mrb[0].mxu0
    %4902 = vdwg.mxu0
    %v4903 = vadd.f32 %v4713, %v4897
    %v4904 = vadd.f32 %v4714, %v4900
    %v4905 = vpack.c.bf16 %v4904, %v4903
    %v4906 = vld [vmem:[%s9] sm:$0xf]
    %v4907 = vld [vmem:[%s9 + $0x4] sm:$0xf]
    %v4908 = vld [vmem:[%s9 + $0x8] sm:$0xf]
    %v4909 = vld [vmem:[%s9 + $0xc] sm:$0xf]
    %v4910 = vld [vmem:[%s10] sm:$0x1]
    %v4912 = vlaneseq
    %v4913 = vshrl.u32 %v4912, 7
    %v4914 = vsub.s32 0, %v4913
    %v4915 = vrot.slane %v4910, %v4914
    %v4921 = vunpack.c.l.b16 %v4906
    %v4922 = vunpack.c.l.b16 %v4907
    %v4923 = vunpack.c.l.b16 %v4908
    %v4924 = vunpack.c.l.b16 %v4909
    %v4925 = vpack.c.b16 %v4922, %v4921
    %v4926 = vpack.c.b16 %v4924, %v4923
    %v4930 = vsel %vm137, %v4905, 0
    %4932 = vmatprep.subr.bf16.mxu0 0
    %4933 = vmatpush1.bf16.msra.mxu0 %v4925
    %4934 = vmatprep.subr.bf16.mxu0 0
    %4935 = vmatpush1.bf16.msra.mxu0 %v4926
    %4936 = vmatprep.subr.bf16.mxu0 0
    %4937 = vmatpush1.bf16.msra.mxu0 0
    %4938 = vmatprep.subr.bf16.mxu0 0
    %4939 = vmatpush1.bf16.msra.mxu0 0
    %4940 = vmatprep.subr.bf16.mxu0 0
    %4941 = vmatpush1.bf16.msra.mxu0 0
    %4942 = vmatprep.subr.bf16.mxu0 0
    %4943 = vmatpush1.bf16.msra.mxu0 0
    %4944 = vmatprep.subr.bf16.mxu0 0
    %4945 = vmatpush1.bf16.msra.mxu0 0
    %4946 = vmatprep.subr.bf16.mxu0 0
    %4947 = vmatpush1.bf16.msra.mxu0 0
    %4948 = vmatprep.subr.bf16.mxu0 0
    %4949 = vmatpush1.bf16.msra.mxu0 0
    %4950 = vmatprep.subr.bf16.mxu0 0
    %4951 = vmatpush1.bf16.msra.mxu0 0
    %4952 = vmatprep.subr.bf16.mxu0 0
    %4953 = vmatpush1.bf16.msra.mxu0 0
    %4954 = vmatprep.subr.bf16.mxu0 0
    %4955 = vmatpush1.bf16.msra.mxu0 0
    %4956 = vmatprep.subr.bf16.mxu0 0
    %4957 = vmatpush1.bf16.msra.mxu0 0
    %4958 = vmatprep.subr.bf16.mxu0 0
    %4959 = vmatpush1.bf16.msra.mxu0 0
    %4960 = vmatprep.subr.bf16.mxu0 0
    %4961 = vmatpush1.bf16.msra.mxu0 0
    %4962 = vmatprep.subr.bf16.mxu0 0
    %4963 = vmatpush1.bf16.msra.mxu0 0
    %4964 = vmatprep.mubr.bf16.mxu0 0
    %4965 = vmatmul.mubr.bf16.gmra.mrb[0].mxu0 %v4930
    %v4966 = vpop.f32.mrb[0].mxu0
    %v4967 = vadd.f32 %v4915, %v4966
    %v4968 = vpop.f32.mrb[0].mxu0
    %v4969 = vpop.f32.mrb[0].mxu0
    %v4970 = vadd.f32 %v4915, %v4969
    %v4971 = vpop.f32.mrb[0].mxu0
    %4972 = vdwg.mxu0
    %4973 = vst [vmem:[#allocation2] sm:$0xff] %v4967
    %4974 = vst [vmem:[#allocation2 + $0x8] sm:$0xff] %v4970
    // Predicated region
    $region46: #{transformer_forward.1} parent=1 // pred_check
      _
    $region47: #{transformer_forward.1} parent=1 // pred_check_branch
      %4976 = sbr.rel (0) target = $region49
    $region48: #{transformer_forward.1} parent=1 // pred_region
      %s4978 = ssub.s32 256, 256
      %4979 = vsyncadd [#allocation3], %s4978
      %s4980 = sshll.u32 [#allocation2], 4
      %s4981 = int_to_ptr.vmem [resolvable:$true] %s4980
      %4986 = dma.vmem_to_hbm [thread:$0]  %s4981, 256, %s11, [#allocation3], 128, 128, 8
    $region49: #{transformer_forward.1} parent=1 // pred_fallthru
      _
    // Predicated region
    $region50: #{transformer_forward.1} parent=1 // pred_check
      _
    $region51: #{transformer_forward.1} parent=1 // pred_check_branch
      %4988 = sbr.rel (0) target = $region53
    $region52: #{transformer_forward.1} parent=1 // pred_region
      %4989 = dma.done [#allocation3], 256
    $region53: #{transformer_forward.1} parent=1 // pred_fallthru
      _
    %4990 = vsyncpa [#allocation3], 1

</llo_original>
